<compile_context>
chip_gen: v7x
topology: tpu7x:2x2x1
jax: 0.10.0
libtpu: 0.0.40
codegen_flags: <defaults>
</compile_context>

<pallas_src>
import functools

import jax
import jax.numpy as jnp
from jax.experimental import pallas as pl
from jax.experimental.pallas import tpu as pltpu


def _make_kernel(N, Bp, T, D, K, dh, L, din_list):
    f32 = jnp.float32
    bf16 = jnp.bfloat16
    NB = N * Bp

    def kernel(*refs):
        it = iter(refs)
        x_ref = next(it)                        # (T, N, Bp*din0)  bf16, whole sequence of this shard
        e_ref = next(it)                        # (N, D)           f32
        pb_ref = next(it)                       # (D, L*3*dh)      f32  (all gate biases, all layers)
        pools = [(next(it), next(it), next(it)) for _ in range(L)]   # px, ph_zr, ph_c (bf16)
        endw_ref = next(it)                     # (HO, dh)         f32
        endb_ref = next(it)                     # (HO, 1)          f32
        out_ref = next(it)                      # (HO, N*Bp)       f32
        sup_scr = next(it)                      # (K*N, N)         bf16  Chebyshev stack
        emb_scr = next(it)                      # (NB, D)          f32   E broadcast over batch rows
        bias_scr = next(it)                     # (NB, L*3*dh)     f32   hoisted biases [z|r|c] per layer
        h_scrs = [next(it) for _ in range(L)]   # (N, Bp*dh)       f32   hidden states

        t = pl.program_id(1)

        # ------------------------------------------------------------------
        # One-time init per batch shard: supports, bias hoist, zero state.
        # ------------------------------------------------------------------
        @pl.when(t == 0)
        def _init():
            E = e_ref[...]
            A = jax.lax.dot_general(E, E, (((1,), (1,)), ((), ())),
                                    preferred_element_type=f32)        # E @ E^T
            A = jnp.maximum(A, 0.0)
            ex = jnp.exp(A - jnp.max(A, axis=1, keepdims=True))
            S = ex / jnp.sum(ex, axis=1, keepdims=True)                 # exact softmax
            eye = (jax.lax.broadcasted_iota(jnp.int32, (N, N), 0)
                   == jax.lax.broadcasted_iota(jnp.int32, (N, N), 1)).astype(f32)
            cheb = [eye]
            if K > 1:
                cheb.append(S)
            for _ in range(2, K):
                cheb.append(2.0 * jnp.dot(S, cheb[-1], preferred_element_type=f32)
                            - cheb[-2])
            for k in range(K):
                sup_scr[k * N:(k + 1) * N, :] = cheb[k].astype(bf16)

            emb_scr[...] = jnp.broadcast_to(E[:, None, :], (N, Bp, D)).reshape(NB, D)
            bvals = jnp.dot(E, pb_ref[...], preferred_element_type=f32)   # (N, L*3*dh)
            bias_scr[...] = jnp.broadcast_to(
                bvals[:, None, :], (N, Bp, bvals.shape[1])).reshape(NB, -1)

            for l in range(L):
                h_scrs[l][...] = jnp.zeros(h_scrs[l].shape, f32)          # init_hidden = zeros
            out_ref[...] = jnp.zeros(out_ref.shape, f32)                  # robust writeback

        # ------------------------------------------------------------------
        # One timestep of every layer; hidden state carried in VMEM scratch.
        # ------------------------------------------------------------------
        Sb = sup_scr[...]                       # (K*N, N) bf16
        ebv = emb_scr[...]                      # (NB, D)  f32
        bias_all = bias_scr[...]                # (NB, L*3*dh)

        def to_rows(sv, width):
            # (K*N, Bp*width) support output -> (NB, K*width) pool-matmul LHS
            parts = [sv[k * N:(k + 1) * N, :].reshape(NB, width) for k in range(K)]
            return jnp.concatenate(parts, axis=1)

        cur = x_ref[t]                          # (N, Bp*din0) bf16
        h_top_rows = None
        for l in range(L):
            din = din_list[l]
            px_ref, phzr_ref, phc_ref = pools[l]
            h_ref = h_scrs[l]
            base = l * 3 * dh

            h_cols = h_ref[...]                                   # (N, Bp*dh) f32
            h_rows = h_cols.reshape(NB, dh)

            # fused-K support apply (x branch shared by z / r / candidate)
            sv_x = jnp.dot(Sb, cur, preferred_element_type=f32).astype(bf16)
            sv_h = jnp.dot(Sb, h_cols.astype(bf16), preferred_element_type=f32).astype(bf16)
            lhs_x = to_rows(sv_x, din)                            # (NB, K*din) bf16
            lhs_h = to_rows(sv_h, dh)                             # (NB, K*dh)  bf16

            # pool-first dense matmuls against the shared pools
            y_x = jnp.dot(lhs_x, px_ref[...], preferred_element_type=f32)     # (NB, D*3*dh)
            y_zr = jnp.dot(lhs_h, phzr_ref[...], preferred_element_type=f32)  # (NB, D*2*dh)

            # embed-dim weighted reduce (VPU), bias pre-hoisted at t==0
            acc_zr = bias_all[:, base:base + 2 * dh]
            for d in range(D):
                e_d = ebv[:, d:d + 1]
                acc_zr = acc_zr + e_d * (y_zr[:, d * 2 * dh:(d + 1) * 2 * dh]
                                         + y_x[:, d * 3 * dh:d * 3 * dh + 2 * dh])
            zr = jax.nn.sigmoid(acc_zr)
            z = zr[:, :dh]
            r = zr[:, dh:]

            zh_cols = (z * h_rows).reshape(N, Bp * dh)
            sv_c = jnp.dot(Sb, zh_cols.astype(bf16), preferred_element_type=f32).astype(bf16)
            lhs_c = to_rows(sv_c, dh)
            y_c = jnp.dot(lhs_c, phc_ref[...], preferred_element_type=f32)    # (NB, D*dh)

            acc_c = bias_all[:, base + 2 * dh:base + 3 * dh]
            for d in range(D):
                e_d = ebv[:, d:d + 1]
                acc_c = acc_c + e_d * (y_c[:, d * dh:(d + 1) * dh]
                                       + y_x[:, d * 3 * dh + 2 * dh:(d + 1) * 3 * dh])
            hc = jnp.tanh(acc_c)

            h_new_rows = r * h_rows + (1.0 - r) * hc              # (NB, dh) f32
            h_new_cols = h_new_rows.reshape(N, Bp * dh)
            h_ref[...] = h_new_cols
            cur = h_new_cols.astype(bf16)
            h_top_rows = h_new_rows

        # ------------------------------------------------------------------
        # Last step: fused end_conv on the top layer's final hidden state.
        # ------------------------------------------------------------------
        @pl.when(t == T - 1)
        def _final():
            o = jax.lax.dot_general(endw_ref[...], h_top_rows,
                                    (((1,), (1,)), ((), ())),
                                    preferred_element_type=f32)   # (HO, NB)
            out_ref[...] = o + endb_ref[...]

    return kernel


def agcrn_forward(source, params, cfg):
    """source: (B, T, N, input_dim) -> (B, horizon, N, output_dim)."""
    B, T, N, din0 = source.shape
    dh = cfg['rnn_units']
    K = cfg['cheb_k']
    D = cfg['embed_dim']
    L = cfg['num_layers']
    HO = cfg['horizon'] * cfg['output_dim']
    din_list = tuple([din0] + [dh] * (L - 1))

    P = 2 if B % 2 == 0 else 1          # megacore batch split (v7x); harmless on 1-TC chips
    Bp = B // P
    NB = N * Bp
    f32, bf16 = jnp.float32, jnp.bfloat16

    # ---- pack inputs / parameters into kernel layouts (outside the kernel) ----
    x_seq = source.astype(f32).reshape(P, Bp, T, N, din0)
    x_seq = jnp.transpose(x_seq, (0, 2, 3, 1, 4)).reshape(P, T, N, Bp * din0).astype(bf16)

    E = params['node_embeddings'].astype(f32)

    px_list, phzr_list, phc_list, pb_list = [], [], [], []
    for l, lp in enumerate(params['layers']):
        din = din_list[l]
        gp = lp['gate_pool'].astype(f32)        # (D, K, din+dh, 2*dh)  gate.weights_pool
        up = lp['update_pool'].astype(f32)      # (D, K, din+dh, dh)    update.weights_pool
        gb = lp['gate_bias'].astype(f32)        # (D, 2*dh)
        ub = lp['update_bias'].astype(f32)      # (D, dh)

        # gate groups g: 0=z, 1=r, 2=candidate; columns packed as (d, g, o)
        w3 = jnp.stack([gp[..., :dh], gp[..., dh:], up], axis=3)        # (D, K, C, 3, dh)
        px = jnp.transpose(w3[:, :, :din], (1, 2, 0, 3, 4)).reshape(K * din, D * 3 * dh)
        phzr = jnp.transpose(gp[:, :, din:, :], (1, 2, 0, 3)).reshape(K * dh, D * 2 * dh)
        phc = jnp.transpose(up[:, :, din:, :], (1, 2, 0, 3)).reshape(K * dh, D * dh)
        px_list.append(px.astype(bf16))
        phzr_list.append(phzr.astype(bf16))
        phc_list.append(phc.astype(bf16))
        pb_list.append(jnp.concatenate([gb[:, :dh], gb[:, dh:], ub], axis=1))   # (D, 3*dh)

    pb_all = jnp.concatenate(pb_list, axis=1)                                    # (D, L*3*dh)
    endw = params['end_conv_w'].astype(f32).reshape(HO, dh)
    endb = params['end_conv_b'].astype(f32).reshape(HO, 1)

    # ---- specs ----
    def const_spec(shape):
        n = len(shape)
        return pl.BlockSpec(shape, lambda p, t, _n=n: (0,) * _n)

    inputs = [x_seq, E, pb_all]
    in_specs = [pl.BlockSpec((None, T, N, Bp * din0), lambda p, t: (p, 0, 0, 0)),
                const_spec((N, D)),
                const_spec((D, L * 3 * dh))]
    for l in range(L):
        for arr in (px_list[l], phzr_list[l], phc_list[l]):
            inputs.append(arr)
            in_specs.append(const_spec(arr.shape))
    inputs += [endw, endb]
    in_specs += [const_spec((HO, dh)), const_spec((HO, 1))]

    scratch = [pltpu.VMEM((K * N, N), bf16),          # Chebyshev support stack
               pltpu.VMEM((NB, D), f32),              # E broadcast over batch rows
               pltpu.VMEM((NB, L * 3 * dh), f32)]     # hoisted, pre-broadcast biases
    scratch += [pltpu.VMEM((N, Bp * dh), f32) for _ in range(L)]   # hidden states

    kernel = _make_kernel(N, Bp, T, D, K, dh, L, din_list)

    out = pl.pallas_call(
        kernel,
        out_shape=jax.ShapeDtypeStruct((P, HO, NB), f32),
        grid_spec=pltpu.PrefetchScalarGridSpec(
            num_scalar_prefetch=0,
            grid=(P, T),
            in_specs=in_specs,
            out_specs=pl.BlockSpec((None, HO, NB), lambda p, t: (p, 0, 0)),
            scratch_shapes=scratch),
        compiler_params=pltpu.CompilerParams(
            dimension_semantics=("parallel", "arbitrary")),
    )(*inputs)

    # undo kernel layout; replicate conv -> squeeze(-1) -> reshape -> permute chain
    conv_out = out.reshape(P, HO, N, Bp)
    conv_out = jnp.transpose(conv_out, (0, 3, 1, 2)).reshape(B, HO, N)
    conv_out = conv_out.reshape(B, cfg['horizon'], cfg['output_dim'], N)
    return jnp.transpose(conv_out, (0, 1, 3, 2))       # (B, horizon, N, output_dim)


def init_params(key, cfg):
    """Same parameter set/shapes as the PyTorch module (AGCRNCell pools & end_conv)."""
    N, D, K = cfg['num_nodes'], cfg['embed_dim'], cfg['cheb_k']
    dh = cfg['rnn_units']
    L = cfg['num_layers']
    HO = cfg['horizon'] * cfg['output_dim']
    keys = iter(jax.random.split(key, 1 + 4 * L + 2))

    def nrm(shape, scale=0.1):
        return scale * jax.random.normal(next(keys), shape, jnp.float32)

    params = {'node_embeddings': jax.random.normal(next(keys), (N, D), jnp.float32)}
    layers = []
    for l in range(L):
        din = cfg['input_dim'] if l == 0 else dh
        C = din + dh
        layers.append(dict(
            gate_pool=nrm((D, K, C, 2 * dh)),     # gate.weights_pool
            gate_bias=nrm((D, 2 * dh)),           # gate.bias_pool
            update_pool=nrm((D, K, C, dh)),       # update.weights_pool
            update_bias=nrm((D, dh))))            # update.bias_pool
    params['layers'] = layers
    # end_conv: Conv2d(1, HO, kernel=(1, dh)) -> weight (HO,1,1,dh) ~ (HO, dh), bias (HO,)
    params['end_conv_w'] = nrm((HO, dh))
    params['end_conv_b'] = nrm((HO, 1))
    return params


if __name__ == "__main__":
    cfg = dict(num_nodes=16, input_dim=2, rnn_units=32, output_dim=1,
               horizon=3, num_layers=2, cheb_k=2, embed_dim=8, default_graph=True)
    B, T = 2, 8

    key = jax.random.PRNGKey(0)
    pkey, xkey = jax.random.split(key)
    params = init_params(pkey, cfg)
    source = jax.random.normal(xkey, (B, T, cfg['num_nodes'], cfg['input_dim']),
                               jnp.float32)

    fwd = jax.jit(functools.partial(agcrn_forward, cfg=cfg))
    out = jax.block_until_ready(fwd(source, params))

    assert out.shape == (B, cfg['horizon'], cfg['num_nodes'], cfg['output_dim']), out.shape
    assert not bool(jnp.any(jnp.isnan(out)))
    print("KERNEL_OK")
</pallas_src>

<mosaic_0001>
module attributes {stable_mosaic.version = 11 : i64} {
  func.func @kernel(%arg0: i32, %arg1: i32, %arg2: memref<1x8x16x2xbf16, #tpu.memory_space<vmem>>, %arg3: memref<16x8xf32, #tpu.memory_space<vmem>>, %arg4: memref<8x192xf32, #tpu.memory_space<vmem>>, %arg5: memref<4x768xbf16, #tpu.memory_space<vmem>>, %arg6: memref<64x512xbf16, #tpu.memory_space<vmem>>, %arg7: memref<64x256xbf16, #tpu.memory_space<vmem>>, %arg8: memref<64x768xbf16, #tpu.memory_space<vmem>>, %arg9: memref<64x512xbf16, #tpu.memory_space<vmem>>, %arg10: memref<64x256xbf16, #tpu.memory_space<vmem>>, %arg11: memref<3x32xf32, #tpu.memory_space<vmem>>, %arg12: memref<3x1xf32, #tpu.memory_space<vmem>>, %arg13: memref<1x3x16xf32, #tpu.memory_space<vmem>>, %arg14: memref<32x16xbf16, #tpu.memory_space<vmem>>, %arg15: memref<16x8xf32, #tpu.memory_space<vmem>>, %arg16: memref<16x192xf32, #tpu.memory_space<vmem>>, %arg17: memref<16x32xf32, #tpu.memory_space<vmem>>, %arg18: memref<16x32xf32, #tpu.memory_space<vmem>>) attributes {dimension_semantics = [#tpu.dimension_semantics<parallel>, #tpu.dimension_semantics<arbitrary>], iteration_bounds = array<i64: 2, 8>, scalar_prefetch = 0 : i64, scratch_operands = 5 : i64, tpu.core_type = #tpu.core_type<tc>, window_params = [{transform_indices = @transform_0, window_bounds = array<i64: 1, 8, 16, 2>}, {pipeline_mode = #tpu.pipeline_mode<synchronous>, transform_indices = @transform_1, window_bounds = array<i64: 16, 8>}, {pipeline_mode = #tpu.pipeline_mode<synchronous>, transform_indices = @transform_2, window_bounds = array<i64: 8, 192>}, {pipeline_mode = #tpu.pipeline_mode<synchronous>, transform_indices = @transform_3, window_bounds = array<i64: 4, 768>}, {pipeline_mode = #tpu.pipeline_mode<synchronous>, transform_indices = @transform_4, window_bounds = array<i64: 64, 512>}, {pipeline_mode = #tpu.pipeline_mode<synchronous>, transform_indices = @transform_5, window_bounds = array<i64: 64, 256>}, {pipeline_mode = #tpu.pipeline_mode<synchronous>, transform_indices = @transform_6, window_bounds = array<i64: 64, 768>}, {pipeline_mode = #tpu.pipeline_mode<synchronous>, transform_indices = @transform_7, window_bounds = array<i64: 64, 512>}, {pipeline_mode = #tpu.pipeline_mode<synchronous>, transform_indices = @transform_8, window_bounds = array<i64: 64, 256>}, {pipeline_mode = #tpu.pipeline_mode<synchronous>, transform_indices = @transform_9, window_bounds = array<i64: 3, 32>}, {pipeline_mode = #tpu.pipeline_mode<synchronous>, transform_indices = @transform_10, window_bounds = array<i64: 3, 1>}, {transform_indices = @transform_11, window_bounds = array<i64: 1, 3, 16>}]} {
    %c0_i32 = arith.constant 0 : i32
    %0 = arith.cmpi eq, %arg1, %c0_i32 : i32
    %1 = arith.extui %0 : i1 to i32
    %c0_i32_0 = arith.constant 0 : i32
    %2 = arith.cmpi ne, %1, %c0_i32_0 : i32
    scf.if %2 {
      %c0_45 = arith.constant 0 : index
      %c0_46 = arith.constant 0 : index
      %319 = vector.load %arg3[%c0_45, %c0_46] : memref<16x8xf32, #tpu.memory_space<vmem>>, vector<16x8xf32>
      %cst_47 = arith.constant dense<0.000000e+00> : vector<16x16xf32>
      %320 = tpu.matmul %319, %319, %cst_47 {dimension_numbers = #tpu.dot_dimension_numbers<[1], [1], [0], [0], [0, 0, 1, 0], [], []>} : vector<16x8xf32>, vector<16x8xf32>, vector<16x16xf32> -> vector<16x16xf32>
      %cst_48 = arith.constant 0.000000e+00 : f32
      %321 = vector.broadcast %cst_48 : f32 to vector<16x16xf32>
      %322 = arith.maximumf %320, %321 : vector<16x16xf32>
      %cst_49 = arith.constant dense<0xFF800000> : vector<16xf32>
      %323 = vector.multi_reduction <maximumf>, %322, %cst_49 [1] : vector<16x16xf32> to vector<16xf32>
      %324 = vector.shape_cast %323 : vector<16xf32> to vector<16x1xf32>
      %325 = vector.broadcast %324 : vector<16x1xf32> to vector<16x16xf32>
      %326 = arith.subf %322, %325 : vector<16x16xf32>
      %327 = math.exp %326 : vector<16x16xf32>
      %cst_50 = arith.constant dense<0.000000e+00> : vector<16xf32>
      %328 = vector.multi_reduction <add>, %327, %cst_50 [1] : vector<16x16xf32> to vector<16xf32>
      %329 = vector.shape_cast %328 : vector<16xf32> to vector<16x1xf32>
      %330 = vector.broadcast %329 : vector<16x1xf32> to vector<16x16xf32>
      %331 = arith.divf %327, %330 : vector<16x16xf32>
      %332 = tpu.iota {dimensions = array<i32: 0>} : vector<16x16xi32>
      %333 = tpu.iota {dimensions = array<i32: 1>} : vector<16x16xi32>
      %334 = arith.cmpi eq, %332, %333 : vector<16x16xi32>
      %335 = arith.extui %334 : vector<16x16xi1> to vector<16x16xi32>
      %336 = arith.sitofp %335 : vector<16x16xi32> to vector<16x16xf32>
      %337 = arith.truncf %336 : vector<16x16xf32> to vector<16x16xbf16>
      %c0_51 = arith.constant 0 : index
      %c0_52 = arith.constant 0 : index
      %338 = vector.load %arg14[%c0_51, %c0_52] : memref<32x16xbf16, #tpu.memory_space<vmem>>, vector<16x16xbf16>
      tpu.vector_store %arg14[%c0_51, %c0_52], %337 {strides = array<i32>} : memref<32x16xbf16, #tpu.memory_space<vmem>>, vector<16x16xbf16>,
      %339 = arith.truncf %331 : vector<16x16xf32> to vector<16x16xbf16>
      %c16 = arith.constant 16 : index
      %c0_53 = arith.constant 0 : index
      %340 = vector.load %arg14[%c16, %c0_53] : memref<32x16xbf16, #tpu.memory_space<vmem>>, vector<16x16xbf16>
      tpu.vector_store %arg14[%c16, %c0_53], %339 {strides = array<i32>} : memref<32x16xbf16, #tpu.memory_space<vmem>>, vector<16x16xbf16>,
      %341 = vector.shape_cast %319 : vector<16x8xf32> to vector<16x1x8xf32>
      %342 = vector.shape_cast %341 : vector<16x1x8xf32> to vector<16x8xf32>
      %c0_54 = arith.constant 0 : index
      %c0_55 = arith.constant 0 : index
      %343 = vector.load %arg15[%c0_54, %c0_55] : memref<16x8xf32, #tpu.memory_space<vmem>>, vector<16x8xf32>
      tpu.vector_store %arg15[%c0_54, %c0_55], %342 {strides = array<i32>} : memref<16x8xf32, #tpu.memory_space<vmem>>, vector<16x8xf32>,
      %c0_56 = arith.constant 0 : index
      %c0_57 = arith.constant 0 : index
      %344 = vector.load %arg4[%c0_56, %c0_57] : memref<8x192xf32, #tpu.memory_space<vmem>>, vector<8x192xf32>
      %cst_58 = arith.constant dense<0.000000e+00> : vector<16x192xf32>
      %345 = tpu.matmul %319, %344, %cst_58 {dimension_numbers = #tpu.dot_dimension_numbers<[1], [0], [0], [1], [0, 0, 1, 1], [], []>} : vector<16x8xf32>, vector<8x192xf32>, vector<16x192xf32> -> vector<16x192xf32>
      %346 = vector.shape_cast %345 : vector<16x192xf32> to vector<16x1x192xf32>
      %347 = vector.shape_cast %346 : vector<16x1x192xf32> to vector<16x192xf32>
      %c0_59 = arith.constant 0 : index
      %c0_60 = arith.constant 0 : index
      %348 = vector.load %arg16[%c0_59, %c0_60] : memref<16x192xf32, #tpu.memory_space<vmem>>, vector<16x192xf32>
      tpu.vector_store %arg16[%c0_59, %c0_60], %347 {strides = array<i32>} : memref<16x192xf32, #tpu.memory_space<vmem>>, vector<16x192xf32>,
      %cst_61 = arith.constant 0.000000e+00 : f32
      %349 = vector.broadcast %cst_61 : f32 to vector<16x32xf32>
      %c0_62 = arith.constant 0 : index
      %c0_63 = arith.constant 0 : index
      %350 = vector.load %arg17[%c0_62, %c0_63] : memref<16x32xf32, #tpu.memory_space<vmem>>, vector<16x32xf32>
      tpu.vector_store %arg17[%c0_62, %c0_63], %349 {strides = array<i32>} : memref<16x32xf32, #tpu.memory_space<vmem>>, vector<16x32xf32>,
      %cst_64 = arith.constant 0.000000e+00 : f32
      %351 = vector.broadcast %cst_64 : f32 to vector<16x32xf32>
      %c0_65 = arith.constant 0 : index
      %c0_66 = arith.constant 0 : index
      %352 = vector.load %arg18[%c0_65, %c0_66] : memref<16x32xf32, #tpu.memory_space<vmem>>, vector<16x32xf32>
      tpu.vector_store %arg18[%c0_65, %c0_66], %351 {strides = array<i32>} : memref<16x32xf32, #tpu.memory_space<vmem>>, vector<16x32xf32>,
      %cst_67 = arith.constant 0.000000e+00 : f32
      %353 = vector.broadcast %cst_67 : f32 to vector<3x16xf32>
      %c0_68 = arith.constant 0 : index
      %c0_69 = arith.constant 0 : index
      %c0_70 = arith.constant 0 : index
      %354 = vector.load %arg13[%c0_68, %c0_69, %c0_70] : memref<1x3x16xf32, #tpu.memory_space<vmem>>, vector<1x3x16xf32>
      %355 = vector.shape_cast %354 : vector<1x3x16xf32> to vector<3x16xf32>
      %356 = vector.shape_cast %353 : vector<3x16xf32> to vector<1x3x16xf32>
      tpu.vector_store %arg13[%c0_68, %c0_69, %c0_70], %356 {strides = array<i32>} : memref<1x3x16xf32, #tpu.memory_space<vmem>>, vector<1x3x16xf32>,
    } else {
    }
    %c0 = arith.constant 0 : index
    %c0_1 = arith.constant 0 : index
    %3 = vector.load %arg14[%c0, %c0_1] : memref<32x16xbf16, #tpu.memory_space<vmem>>, vector<32x16xbf16>
    %c0_2 = arith.constant 0 : index
    %c0_3 = arith.constant 0 : index
    %4 = vector.load %arg15[%c0_2, %c0_3] : memref<16x8xf32, #tpu.memory_space<vmem>>, vector<16x8xf32>
    %c0_4 = arith.constant 0 : index
    %c0_5 = arith.constant 0 : index
    %5 = vector.load %arg16[%c0_4, %c0_5] : memref<16x192xf32, #tpu.memory_space<vmem>>, vector<16x192xf32>
    %c0_6 = arith.constant 0 : index
    %6 = arith.index_cast %arg1 : i32 to index
    %c0_7 = arith.constant 0 : index
    %c0_8 = arith.constant 0 : index
    %7 = vector.load %arg2[%c0_6, %6, %c0_7, %c0_8] : memref<1x8x16x2xbf16, #tpu.memory_space<vmem>>, vector<1x1x16x2xbf16>
    %8 = vector.shape_cast %7 : vector<1x1x16x2xbf16> to vector<16x2xbf16>
    %c0_9 = arith.constant 0 : index
    %c0_10 = arith.constant 0 : index
    %9 = vector.load %arg17[%c0_9, %c0_10] : memref<16x32xf32, #tpu.memory_space<vmem>>, vector<16x32xf32>
    %cst = arith.constant dense<0.000000e+00> : vector<32x2xf32>
    %10 = tpu.matmul %3, %8, %cst {dimension_numbers = #tpu.dot_dimension_numbers<[1], [0], [0], [1], [0, 0, 1, 1], [], []>} : vector<32x16xbf16>, vector<16x2xbf16>, vector<32x2xf32> -> vector<32x2xf32>
    %11 = arith.truncf %10 : vector<32x2xf32> to vector<32x2xbf16>
    %12 = arith.truncf %9 : vector<16x32xf32> to vector<16x32xbf16>
    %cst_11 = arith.constant dense<0.000000e+00> : vector<32x32xf32>
    %13 = tpu.matmul %3, %12, %cst_11 {dimension_numbers = #tpu.dot_dimension_numbers<[1], [0], [0], [1], [0, 0, 1, 1], [], []>} : vector<32x16xbf16>, vector<16x32xbf16>, vector<32x32xf32> -> vector<32x32xf32>
    %14 = arith.truncf %13 : vector<32x32xf32> to vector<32x32xbf16>
    %15 = vector.extract_strided_slice %11 {offsets = [0, 0], sizes = [16, 2], strides = [1, 1]} : vector<32x2xbf16> to vector<16x2xbf16>
    %16 = vector.extract_strided_slice %11 {offsets = [16, 0], sizes = [16, 2], strides = [1, 1]} : vector<32x2xbf16> to vector<16x2xbf16>
    %17 = tpu.concatenate %15, %16 in 1 : vector<16x2xbf16>, vector<16x2xbf16> -> vector<16x4xbf16>
    %18 = vector.extract_strided_slice %14 {offsets = [0, 0], sizes = [16, 32], strides = [1, 1]} : vector<32x32xbf16> to vector<16x32xbf16>
    %19 = vector.extract_strided_slice %14 {offsets = [16, 0], sizes = [16, 32], strides = [1, 1]} : vector<32x32xbf16> to vector<16x32xbf16>
    %20 = tpu.concatenate %18, %19 in 1 : vector<16x32xbf16>, vector<16x32xbf16> -> vector<16x64xbf16>
    %c0_12 = arith.constant 0 : index
    %c0_13 = arith.constant 0 : index
    %21 = vector.load %arg5[%c0_12, %c0_13] : memref<4x768xbf16, #tpu.memory_space<vmem>>, vector<4x768xbf16>
    %cst_14 = arith.constant dense<0.000000e+00> : vector<16x768xf32>
    %22 = tpu.matmul %17, %21, %cst_14 {dimension_numbers = #tpu.dot_dimension_numbers<[1], [0], [0], [1], [0, 0, 1, 1], [], []>} : vector<16x4xbf16>, vector<4x768xbf16>, vector<16x768xf32> -> vector<16x768xf32>
    %c0_15 = arith.constant 0 : index
    %c0_16 = arith.constant 0 : index
    %23 = vector.load %arg6[%c0_15, %c0_16] : memref<64x512xbf16, #tpu.memory_space<vmem>>, vector<64x512xbf16>
    %cst_17 = arith.constant dense<0.000000e+00> : vector<16x512xf32>
    %24 = tpu.matmul %20, %23, %cst_17 {dimension_numbers = #tpu.dot_dimension_numbers<[1], [0], [0], [1], [0, 0, 1, 1], [], []>} : vector<16x64xbf16>, vector<64x512xbf16>, vector<16x512xf32> -> vector<16x512xf32>
    %25 = vector.extract_strided_slice %5 {offsets = [0, 0], sizes = [16, 64], strides = [1, 1]} : vector<16x192xf32> to vector<16x64xf32>
    %26 = vector.extract_strided_slice %4 {offsets = [0, 0], sizes = [16, 1], strides = [1, 1]} : vector<16x8xf32> to vector<16x1xf32>
    %27 = vector.extract_strided_slice %24 {offsets = [0, 0], sizes = [16, 64], strides = [1, 1]} : vector<16x512xf32> to vector<16x64xf32>
    %28 = vector.extract_strided_slice %22 {offsets = [0, 0], sizes = [16, 64], strides = [1, 1]} : vector<16x768xf32> to vector<16x64xf32>
    %29 = arith.addf %27, %28 : vector<16x64xf32>
    %30 = vector.broadcast %26 : vector<16x1xf32> to vector<16x64xf32>
    %31 = arith.mulf %30, %29 : vector<16x64xf32>
    %32 = arith.addf %25, %31 : vector<16x64xf32>
    %33 = vector.extract_strided_slice %4 {offsets = [0, 1], sizes = [16, 1], strides = [1, 1]} : vector<16x8xf32> to vector<16x1xf32>
    %34 = vector.extract_strided_slice %24 {offsets = [0, 64], sizes = [16, 64], strides = [1, 1]} : vector<16x512xf32> to vector<16x64xf32>
    %35 = vector.extract_strided_slice %22 {offsets = [0, 96], sizes = [16, 64], strides = [1, 1]} : vector<16x768xf32> to vector<16x64xf32>
    %36 = arith.addf %34, %35 : vector<16x64xf32>
    %37 = vector.broadcast %33 : vector<16x1xf32> to vector<16x64xf32>
    %38 = arith.mulf %37, %36 : vector<16x64xf32>
    %39 = arith.addf %32, %38 : vector<16x64xf32>
    %40 = vector.extract_strided_slice %4 {offsets = [0, 2], sizes = [16, 1], strides = [1, 1]} : vector<16x8xf32> to vector<16x1xf32>
    %41 = vector.extract_strided_slice %24 {offsets = [0, 128], sizes = [16, 64], strides = [1, 1]} : vector<16x512xf32> to vector<16x64xf32>
    %42 = vector.extract_strided_slice %22 {offsets = [0, 192], sizes = [16, 64], strides = [1, 1]} : vector<16x768xf32> to vector<16x64xf32>
    %43 = arith.addf %41, %42 : vector<16x64xf32>
    %44 = vector.broadcast %40 : vector<16x1xf32> to vector<16x64xf32>
    %45 = arith.mulf %44, %43 : vector<16x64xf32>
    %46 = arith.addf %39, %45 : vector<16x64xf32>
    %47 = vector.extract_strided_slice %4 {offsets = [0, 3], sizes = [16, 1], strides = [1, 1]} : vector<16x8xf32> to vector<16x1xf32>
    %48 = vector.extract_strided_slice %24 {offsets = [0, 192], sizes = [16, 64], strides = [1, 1]} : vector<16x512xf32> to vector<16x64xf32>
    %49 = vector.extract_strided_slice %22 {offsets = [0, 288], sizes = [16, 64], strides = [1, 1]} : vector<16x768xf32> to vector<16x64xf32>
    %50 = arith.addf %48, %49 : vector<16x64xf32>
    %51 = vector.broadcast %47 : vector<16x1xf32> to vector<16x64xf32>
    %52 = arith.mulf %51, %50 : vector<16x64xf32>
    %53 = arith.addf %46, %52 : vector<16x64xf32>
    %54 = vector.extract_strided_slice %4 {offsets = [0, 4], sizes = [16, 1], strides = [1, 1]} : vector<16x8xf32> to vector<16x1xf32>
    %55 = vector.extract_strided_slice %24 {offsets = [0, 256], sizes = [16, 64], strides = [1, 1]} : vector<16x512xf32> to vector<16x64xf32>
    %56 = vector.extract_strided_slice %22 {offsets = [0, 384], sizes = [16, 64], strides = [1, 1]} : vector<16x768xf32> to vector<16x64xf32>
    %57 = arith.addf %55, %56 : vector<16x64xf32>
    %58 = vector.broadcast %54 : vector<16x1xf32> to vector<16x64xf32>
    %59 = arith.mulf %58, %57 : vector<16x64xf32>
    %60 = arith.addf %53, %59 : vector<16x64xf32>
    %61 = vector.extract_strided_slice %4 {offsets = [0, 5], sizes = [16, 1], strides = [1, 1]} : vector<16x8xf32> to vector<16x1xf32>
    %62 = vector.extract_strided_slice %24 {offsets = [0, 320], sizes = [16, 64], strides = [1, 1]} : vector<16x512xf32> to vector<16x64xf32>
    %63 = vector.extract_strided_slice %22 {offsets = [0, 480], sizes = [16, 64], strides = [1, 1]} : vector<16x768xf32> to vector<16x64xf32>
    %64 = arith.addf %62, %63 : vector<16x64xf32>
    %65 = vector.broadcast %61 : vector<16x1xf32> to vector<16x64xf32>
    %66 = arith.mulf %65, %64 : vector<16x64xf32>
    %67 = arith.addf %60, %66 : vector<16x64xf32>
    %68 = vector.extract_strided_slice %4 {offsets = [0, 6], sizes = [16, 1], strides = [1, 1]} : vector<16x8xf32> to vector<16x1xf32>
    %69 = vector.extract_strided_slice %24 {offsets = [0, 384], sizes = [16, 64], strides = [1, 1]} : vector<16x512xf32> to vector<16x64xf32>
    %70 = vector.extract_strided_slice %22 {offsets = [0, 576], sizes = [16, 64], strides = [1, 1]} : vector<16x768xf32> to vector<16x64xf32>
    %71 = arith.addf %69, %70 : vector<16x64xf32>
    %72 = vector.broadcast %68 : vector<16x1xf32> to vector<16x64xf32>
    %73 = arith.mulf %72, %71 : vector<16x64xf32>
    %74 = arith.addf %67, %73 : vector<16x64xf32>
    %75 = vector.extract_strided_slice %4 {offsets = [0, 7], sizes = [16, 1], strides = [1, 1]} : vector<16x8xf32> to vector<16x1xf32>
    %76 = vector.extract_strided_slice %24 {offsets = [0, 448], sizes = [16, 64], strides = [1, 1]} : vector<16x512xf32> to vector<16x64xf32>
    %77 = vector.extract_strided_slice %22 {offsets = [0, 672], sizes = [16, 64], strides = [1, 1]} : vector<16x768xf32> to vector<16x64xf32>
    %78 = arith.addf %76, %77 : vector<16x64xf32>
    %79 = vector.broadcast %75 : vector<16x1xf32> to vector<16x64xf32>
    %80 = arith.mulf %79, %78 : vector<16x64xf32>
    %81 = arith.addf %74, %80 : vector<16x64xf32>
    %82 = arith.negf %81 : vector<16x64xf32>
    %83 = math.exp %82 : vector<16x64xf32>
    %cst_18 = arith.constant 1.000000e+00 : f32
    %84 = vector.broadcast %cst_18 : f32 to vector<16x64xf32>
    %85 = arith.addf %84, %83 : vector<16x64xf32>
    %86 = arith.divf %84, %85 : vector<16x64xf32>
    %87 = vector.extract_strided_slice %86 {offsets = [0, 0], sizes = [16, 32], strides = [1, 1]} : vector<16x64xf32> to vector<16x32xf32>
    %88 = vector.extract_strided_slice %86 {offsets = [0, 32], sizes = [16, 32], strides = [1, 1]} : vector<16x64xf32> to vector<16x32xf32>
    %89 = arith.mulf %87, %9 : vector<16x32xf32>
    %90 = arith.truncf %89 : vector<16x32xf32> to vector<16x32xbf16>
    %cst_19 = arith.constant dense<0.000000e+00> : vector<32x32xf32>
    %91 = tpu.matmul %3, %90, %cst_19 {dimension_numbers = #tpu.dot_dimension_numbers<[1], [0], [0], [1], [0, 0, 1, 1], [], []>} : vector<32x16xbf16>, vector<16x32xbf16>, vector<32x32xf32> -> vector<32x32xf32>
    %92 = arith.truncf %91 : vector<32x32xf32> to vector<32x32xbf16>
    %93 = vector.extract_strided_slice %92 {offsets = [0, 0], sizes = [16, 32], strides = [1, 1]} : vector<32x32xbf16> to vector<16x32xbf16>
    %94 = vector.extract_strided_slice %92 {offsets = [16, 0], sizes = [16, 32], strides = [1, 1]} : vector<32x32xbf16> to vector<16x32xbf16>
    %95 = tpu.concatenate %93, %94 in 1 : vector<16x32xbf16>, vector<16x32xbf16> -> vector<16x64xbf16>
    %c0_20 = arith.constant 0 : index
    %c0_21 = arith.constant 0 : index
    %96 = vector.load %arg7[%c0_20, %c0_21] : memref<64x256xbf16, #tpu.memory_space<vmem>>, vector<64x256xbf16>
    %cst_22 = arith.constant dense<0.000000e+00> : vector<16x256xf32>
    %97 = tpu.matmul %95, %96, %cst_22 {dimension_numbers = #tpu.dot_dimension_numbers<[1], [0], [0], [1], [0, 0, 1, 1], [], []>} : vector<16x64xbf16>, vector<64x256xbf16>, vector<16x256xf32> -> vector<16x256xf32>
    %98 = vector.extract_strided_slice %5 {offsets = [0, 64], sizes = [16, 32], strides = [1, 1]} : vector<16x192xf32> to vector<16x32xf32>
    %99 = vector.extract_strided_slice %4 {offsets = [0, 0], sizes = [16, 1], strides = [1, 1]} : vector<16x8xf32> to vector<16x1xf32>
    %100 = vector.extract_strided_slice %97 {offsets = [0, 0], sizes = [16, 32], strides = [1, 1]} : vector<16x256xf32> to vector<16x32xf32>
    %101 = vector.extract_strided_slice %22 {offsets = [0, 64], sizes = [16, 32], strides = [1, 1]} : vector<16x768xf32> to vector<16x32xf32>
    %102 = arith.addf %100, %101 : vector<16x32xf32>
    %103 = vector.broadcast %99 : vector<16x1xf32> to vector<16x32xf32>
    %104 = arith.mulf %103, %102 : vector<16x32xf32>
    %105 = arith.addf %98, %104 : vector<16x32xf32>
    %106 = vector.extract_strided_slice %4 {offsets = [0, 1], sizes = [16, 1], strides = [1, 1]} : vector<16x8xf32> to vector<16x1xf32>
    %107 = vector.extract_strided_slice %97 {offsets = [0, 32], sizes = [16, 32], strides = [1, 1]} : vector<16x256xf32> to vector<16x32xf32>
    %108 = vector.extract_strided_slice %22 {offsets = [0, 160], sizes = [16, 32], strides = [1, 1]} : vector<16x768xf32> to vector<16x32xf32>
    %109 = arith.addf %107, %108 : vector<16x32xf32>
    %110 = vector.broadcast %106 : vector<16x1xf32> to vector<16x32xf32>
    %111 = arith.mulf %110, %109 : vector<16x32xf32>
    %112 = arith.addf %105, %111 : vector<16x32xf32>
    %113 = vector.extract_strided_slice %4 {offsets = [0, 2], sizes = [16, 1], strides = [1, 1]} : vector<16x8xf32> to vector<16x1xf32>
    %114 = vector.extract_strided_slice %97 {offsets = [0, 64], sizes = [16, 32], strides = [1, 1]} : vector<16x256xf32> to vector<16x32xf32>
    %115 = vector.extract_strided_slice %22 {offsets = [0, 256], sizes = [16, 32], strides = [1, 1]} : vector<16x768xf32> to vector<16x32xf32>
    %116 = arith.addf %114, %115 : vector<16x32xf32>
    %117 = vector.broadcast %113 : vector<16x1xf32> to vector<16x32xf32>
    %118 = arith.mulf %117, %116 : vector<16x32xf32>
    %119 = arith.addf %112, %118 : vector<16x32xf32>
    %120 = vector.extract_strided_slice %4 {offsets = [0, 3], sizes = [16, 1], strides = [1, 1]} : vector<16x8xf32> to vector<16x1xf32>
    %121 = vector.extract_strided_slice %97 {offsets = [0, 96], sizes = [16, 32], strides = [1, 1]} : vector<16x256xf32> to vector<16x32xf32>
    %122 = vector.extract_strided_slice %22 {offsets = [0, 352], sizes = [16, 32], strides = [1, 1]} : vector<16x768xf32> to vector<16x32xf32>
    %123 = arith.addf %121, %122 : vector<16x32xf32>
    %124 = vector.broadcast %120 : vector<16x1xf32> to vector<16x32xf32>
    %125 = arith.mulf %124, %123 : vector<16x32xf32>
    %126 = arith.addf %119, %125 : vector<16x32xf32>
    %127 = vector.extract_strided_slice %4 {offsets = [0, 4], sizes = [16, 1], strides = [1, 1]} : vector<16x8xf32> to vector<16x1xf32>
    %128 = vector.extract_strided_slice %97 {offsets = [0, 128], sizes = [16, 32], strides = [1, 1]} : vector<16x256xf32> to vector<16x32xf32>
    %129 = vector.extract_strided_slice %22 {offsets = [0, 448], sizes = [16, 32], strides = [1, 1]} : vector<16x768xf32> to vector<16x32xf32>
    %130 = arith.addf %128, %129 : vector<16x32xf32>
    %131 = vector.broadcast %127 : vector<16x1xf32> to vector<16x32xf32>
    %132 = arith.mulf %131, %130 : vector<16x32xf32>
    %133 = arith.addf %126, %132 : vector<16x32xf32>
    %134 = vector.extract_strided_slice %4 {offsets = [0, 5], sizes = [16, 1], strides = [1, 1]} : vector<16x8xf32> to vector<16x1xf32>
    %135 = vector.extract_strided_slice %97 {offsets = [0, 160], sizes = [16, 32], strides = [1, 1]} : vector<16x256xf32> to vector<16x32xf32>
    %136 = vector.extract_strided_slice %22 {offsets = [0, 544], sizes = [16, 32], strides = [1, 1]} : vector<16x768xf32> to vector<16x32xf32>
    %137 = arith.addf %135, %136 : vector<16x32xf32>
    %138 = vector.broadcast %134 : vector<16x1xf32> to vector<16x32xf32>
    %139 = arith.mulf %138, %137 : vector<16x32xf32>
    %140 = arith.addf %133, %139 : vector<16x32xf32>
    %141 = vector.extract_strided_slice %4 {offsets = [0, 6], sizes = [16, 1], strides = [1, 1]} : vector<16x8xf32> to vector<16x1xf32>
    %142 = vector.extract_strided_slice %97 {offsets = [0, 192], sizes = [16, 32], strides = [1, 1]} : vector<16x256xf32> to vector<16x32xf32>
    %143 = vector.extract_strided_slice %22 {offsets = [0, 640], sizes = [16, 32], strides = [1, 1]} : vector<16x768xf32> to vector<16x32xf32>
    %144 = arith.addf %142, %143 : vector<16x32xf32>
    %145 = vector.broadcast %141 : vector<16x1xf32> to vector<16x32xf32>
    %146 = arith.mulf %145, %144 : vector<16x32xf32>
    %147 = arith.addf %140, %146 : vector<16x32xf32>
    %148 = vector.extract_strided_slice %4 {offsets = [0, 7], sizes = [16, 1], strides = [1, 1]} : vector<16x8xf32> to vector<16x1xf32>
    %149 = vector.extract_strided_slice %97 {offsets = [0, 224], sizes = [16, 32], strides = [1, 1]} : vector<16x256xf32> to vector<16x32xf32>
    %150 = vector.extract_strided_slice %22 {offsets = [0, 736], sizes = [16, 32], strides = [1, 1]} : vector<16x768xf32> to vector<16x32xf32>
    %151 = arith.addf %149, %150 : vector<16x32xf32>
    %152 = vector.broadcast %148 : vector<16x1xf32> to vector<16x32xf32>
    %153 = arith.mulf %152, %151 : vector<16x32xf32>
    %154 = arith.addf %147, %153 : vector<16x32xf32>
    %155 = math.tanh %154 : vector<16x32xf32>
    %156 = arith.mulf %88, %9 : vector<16x32xf32>
    %cst_23 = arith.constant 1.000000e+00 : f32
    %157 = vector.broadcast %cst_23 : f32 to vector<16x32xf32>
    %158 = arith.subf %157, %88 : vector<16x32xf32>
    %159 = arith.mulf %158, %155 : vector<16x32xf32>
    %160 = arith.addf %156, %159 : vector<16x32xf32>
    %c0_24 = arith.constant 0 : index
    %c0_25 = arith.constant 0 : index
    %161 = vector.load %arg17[%c0_24, %c0_25] : memref<16x32xf32, #tpu.memory_space<vmem>>, vector<16x32xf32>
    tpu.vector_store %arg17[%c0_24, %c0_25], %160 {strides = array<i32>} : memref<16x32xf32, #tpu.memory_space<vmem>>, vector<16x32xf32>,
    %162 = arith.truncf %160 : vector<16x32xf32> to vector<16x32xbf16>
    %c0_26 = arith.constant 0 : index
    %c0_27 = arith.constant 0 : index
    %163 = vector.load %arg18[%c0_26, %c0_27] : memref<16x32xf32, #tpu.memory_space<vmem>>, vector<16x32xf32>
    %cst_28 = arith.constant dense<0.000000e+00> : vector<32x32xf32>
    %164 = tpu.matmul %3, %162, %cst_28 {dimension_numbers = #tpu.dot_dimension_numbers<[1], [0], [0], [1], [0, 0, 1, 1], [], []>} : vector<32x16xbf16>, vector<16x32xbf16>, vector<32x32xf32> -> vector<32x32xf32>
    %165 = arith.truncf %164 : vector<32x32xf32> to vector<32x32xbf16>
    %166 = arith.truncf %163 : vector<16x32xf32> to vector<16x32xbf16>
    %cst_29 = arith.constant dense<0.000000e+00> : vector<32x32xf32>
    %167 = tpu.matmul %3, %166, %cst_29 {dimension_numbers = #tpu.dot_dimension_numbers<[1], [0], [0], [1], [0, 0, 1, 1], [], []>} : vector<32x16xbf16>, vector<16x32xbf16>, vector<32x32xf32> -> vector<32x32xf32>
    %168 = arith.truncf %167 : vector<32x32xf32> to vector<32x32xbf16>
    %169 = vector.extract_strided_slice %165 {offsets = [0, 0], sizes = [16, 32], strides = [1, 1]} : vector<32x32xbf16> to vector<16x32xbf16>
    %170 = vector.extract_strided_slice %165 {offsets = [16, 0], sizes = [16, 32], strides = [1, 1]} : vector<32x32xbf16> to vector<16x32xbf16>
    %171 = tpu.concatenate %169, %170 in 1 : vector<16x32xbf16>, vector<16x32xbf16> -> vector<16x64xbf16>
    %172 = vector.extract_strided_slice %168 {offsets = [0, 0], sizes = [16, 32], strides = [1, 1]} : vector<32x32xbf16> to vector<16x32xbf16>
    %173 = vector.extract_strided_slice %168 {offsets = [16, 0], sizes = [16, 32], strides = [1, 1]} : vector<32x32xbf16> to vector<16x32xbf16>
    %174 = tpu.concatenate %172, %173 in 1 : vector<16x32xbf16>, vector<16x32xbf16> -> vector<16x64xbf16>
    %c0_30 = arith.constant 0 : index
    %c0_31 = arith.constant 0 : index
    %175 = vector.load %arg8[%c0_30, %c0_31] : memref<64x768xbf16, #tpu.memory_space<vmem>>, vector<64x768xbf16>
    %cst_32 = arith.constant dense<0.000000e+00> : vector<16x768xf32>
    %176 = tpu.matmul %171, %175, %cst_32 {dimension_numbers = #tpu.dot_dimension_numbers<[1], [0], [0], [1], [0, 0, 1, 1], [], []>} : vector<16x64xbf16>, vector<64x768xbf16>, vector<16x768xf32> -> vector<16x768xf32>
    %c0_33 = arith.constant 0 : index
    %c0_34 = arith.constant 0 : index
    %177 = vector.load %arg9[%c0_33, %c0_34] : memref<64x512xbf16, #tpu.memory_space<vmem>>, vector<64x512xbf16>
    %cst_35 = arith.constant dense<0.000000e+00> : vector<16x512xf32>
    %178 = tpu.matmul %174, %177, %cst_35 {dimension_numbers = #tpu.dot_dimension_numbers<[1], [0], [0], [1], [0, 0, 1, 1], [], []>} : vector<16x64xbf16>, vector<64x512xbf16>, vector<16x512xf32> -> vector<16x512xf32>
    %179 = vector.extract_strided_slice %5 {offsets = [0, 96], sizes = [16, 64], strides = [1, 1]} : vector<16x192xf32> to vector<16x64xf32>
    %180 = vector.extract_strided_slice %4 {offsets = [0, 0], sizes = [16, 1], strides = [1, 1]} : vector<16x8xf32> to vector<16x1xf32>
    %181 = vector.extract_strided_slice %178 {offsets = [0, 0], sizes = [16, 64], strides = [1, 1]} : vector<16x512xf32> to vector<16x64xf32>
    %182 = vector.extract_strided_slice %176 {offsets = [0, 0], sizes = [16, 64], strides = [1, 1]} : vector<16x768xf32> to vector<16x64xf32>
    %183 = arith.addf %181, %182 : vector<16x64xf32>
    %184 = vector.broadcast %180 : vector<16x1xf32> to vector<16x64xf32>
    %185 = arith.mulf %184, %183 : vector<16x64xf32>
    %186 = arith.addf %179, %185 : vector<16x64xf32>
    %187 = vector.extract_strided_slice %4 {offsets = [0, 1], sizes = [16, 1], strides = [1, 1]} : vector<16x8xf32> to vector<16x1xf32>
    %188 = vector.extract_strided_slice %178 {offsets = [0, 64], sizes = [16, 64], strides = [1, 1]} : vector<16x512xf32> to vector<16x64xf32>
    %189 = vector.extract_strided_slice %176 {offsets = [0, 96], sizes = [16, 64], strides = [1, 1]} : vector<16x768xf32> to vector<16x64xf32>
    %190 = arith.addf %188, %189 : vector<16x64xf32>
    %191 = vector.broadcast %187 : vector<16x1xf32> to vector<16x64xf32>
    %192 = arith.mulf %191, %190 : vector<16x64xf32>
    %193 = arith.addf %186, %192 : vector<16x64xf32>
    %194 = vector.extract_strided_slice %4 {offsets = [0, 2], sizes = [16, 1], strides = [1, 1]} : vector<16x8xf32> to vector<16x1xf32>
    %195 = vector.extract_strided_slice %178 {offsets = [0, 128], sizes = [16, 64], strides = [1, 1]} : vector<16x512xf32> to vector<16x64xf32>
    %196 = vector.extract_strided_slice %176 {offsets = [0, 192], sizes = [16, 64], strides = [1, 1]} : vector<16x768xf32> to vector<16x64xf32>
    %197 = arith.addf %195, %196 : vector<16x64xf32>
    %198 = vector.broadcast %194 : vector<16x1xf32> to vector<16x64xf32>
    %199 = arith.mulf %198, %197 : vector<16x64xf32>
    %200 = arith.addf %193, %199 : vector<16x64xf32>
    %201 = vector.extract_strided_slice %4 {offsets = [0, 3], sizes = [16, 1], strides = [1, 1]} : vector<16x8xf32> to vector<16x1xf32>
    %202 = vector.extract_strided_slice %178 {offsets = [0, 192], sizes = [16, 64], strides = [1, 1]} : vector<16x512xf32> to vector<16x64xf32>
    %203 = vector.extract_strided_slice %176 {offsets = [0, 288], sizes = [16, 64], strides = [1, 1]} : vector<16x768xf32> to vector<16x64xf32>
    %204 = arith.addf %202, %203 : vector<16x64xf32>
    %205 = vector.broadcast %201 : vector<16x1xf32> to vector<16x64xf32>
    %206 = arith.mulf %205, %204 : vector<16x64xf32>
    %207 = arith.addf %200, %206 : vector<16x64xf32>
    %208 = vector.extract_strided_slice %4 {offsets = [0, 4], sizes = [16, 1], strides = [1, 1]} : vector<16x8xf32> to vector<16x1xf32>
    %209 = vector.extract_strided_slice %178 {offsets = [0, 256], sizes = [16, 64], strides = [1, 1]} : vector<16x512xf32> to vector<16x64xf32>
    %210 = vector.extract_strided_slice %176 {offsets = [0, 384], sizes = [16, 64], strides = [1, 1]} : vector<16x768xf32> to vector<16x64xf32>
    %211 = arith.addf %209, %210 : vector<16x64xf32>
    %212 = vector.broadcast %208 : vector<16x1xf32> to vector<16x64xf32>
    %213 = arith.mulf %212, %211 : vector<16x64xf32>
    %214 = arith.addf %207, %213 : vector<16x64xf32>
    %215 = vector.extract_strided_slice %4 {offsets = [0, 5], sizes = [16, 1], strides = [1, 1]} : vector<16x8xf32> to vector<16x1xf32>
    %216 = vector.extract_strided_slice %178 {offsets = [0, 320], sizes = [16, 64], strides = [1, 1]} : vector<16x512xf32> to vector<16x64xf32>
    %217 = vector.extract_strided_slice %176 {offsets = [0, 480], sizes = [16, 64], strides = [1, 1]} : vector<16x768xf32> to vector<16x64xf32>
    %218 = arith.addf %216, %217 : vector<16x64xf32>
    %219 = vector.broadcast %215 : vector<16x1xf32> to vector<16x64xf32>
    %220 = arith.mulf %219, %218 : vector<16x64xf32>
    %221 = arith.addf %214, %220 : vector<16x64xf32>
    %222 = vector.extract_strided_slice %4 {offsets = [0, 6], sizes = [16, 1], strides = [1, 1]} : vector<16x8xf32> to vector<16x1xf32>
    %223 = vector.extract_strided_slice %178 {offsets = [0, 384], sizes = [16, 64], strides = [1, 1]} : vector<16x512xf32> to vector<16x64xf32>
    %224 = vector.extract_strided_slice %176 {offsets = [0, 576], sizes = [16, 64], strides = [1, 1]} : vector<16x768xf32> to vector<16x64xf32>
    %225 = arith.addf %223, %224 : vector<16x64xf32>
    %226 = vector.broadcast %222 : vector<16x1xf32> to vector<16x64xf32>
    %227 = arith.mulf %226, %225 : vector<16x64xf32>
    %228 = arith.addf %221, %227 : vector<16x64xf32>
    %229 = vector.extract_strided_slice %4 {offsets = [0, 7], sizes = [16, 1], strides = [1, 1]} : vector<16x8xf32> to vector<16x1xf32>
    %230 = vector.extract_strided_slice %178 {offsets = [0, 448], sizes = [16, 64], strides = [1, 1]} : vector<16x512xf32> to vector<16x64xf32>
    %231 = vector.extract_strided_slice %176 {offsets = [0, 672], sizes = [16, 64], strides = [1, 1]} : vector<16x768xf32> to vector<16x64xf32>
    %232 = arith.addf %230, %231 : vector<16x64xf32>
    %233 = vector.broadcast %229 : vector<16x1xf32> to vector<16x64xf32>
    %234 = arith.mulf %233, %232 : vector<16x64xf32>
    %235 = arith.addf %228, %234 : vector<16x64xf32>
    %236 = arith.negf %235 : vector<16x64xf32>
    %237 = math.exp %236 : vector<16x64xf32>
    %cst_36 = arith.constant 1.000000e+00 : f32
    %238 = vector.broadcast %cst_36 : f32 to vector<16x64xf32>
    %239 = arith.addf %238, %237 : vector<16x64xf32>
    %240 = arith.divf %238, %239 : vector<16x64xf32>
    %241 = vector.extract_strided_slice %240 {offsets = [0, 0], sizes = [16, 32], strides = [1, 1]} : vector<16x64xf32> to vector<16x32xf32>
    %242 = vector.extract_strided_slice %240 {offsets = [0, 32], sizes = [16, 32], strides = [1, 1]} : vector<16x64xf32> to vector<16x32xf32>
    %243 = arith.mulf %241, %163 : vector<16x32xf32>
    %244 = arith.truncf %243 : vector<16x32xf32> to vector<16x32xbf16>
    %cst_37 = arith.constant dense<0.000000e+00> : vector<32x32xf32>
    %245 = tpu.matmul %3, %244, %cst_37 {dimension_numbers = #tpu.dot_dimension_numbers<[1], [0], [0], [1], [0, 0, 1, 1], [], []>} : vector<32x16xbf16>, vector<16x32xbf16>, vector<32x32xf32> -> vector<32x32xf32>
    %246 = arith.truncf %245 : vector<32x32xf32> to vector<32x32xbf16>
    %247 = vector.extract_strided_slice %246 {offsets = [0, 0], sizes = [16, 32], strides = [1, 1]} : vector<32x32xbf16> to vector<16x32xbf16>
    %248 = vector.extract_strided_slice %246 {offsets = [16, 0], sizes = [16, 32], strides = [1, 1]} : vector<32x32xbf16> to vector<16x32xbf16>
    %249 = tpu.concatenate %247, %248 in 1 : vector<16x32xbf16>, vector<16x32xbf16> -> vector<16x64xbf16>
    %c0_38 = arith.constant 0 : index
    %c0_39 = arith.constant 0 : index
    %250 = vector.load %arg10[%c0_38, %c0_39] : memref<64x256xbf16, #tpu.memory_space<vmem>>, vector<64x256xbf16>
    %cst_40 = arith.constant dense<0.000000e+00> : vector<16x256xf32>
    %251 = tpu.matmul %249, %250, %cst_40 {dimension_numbers = #tpu.dot_dimension_numbers<[1], [0], [0], [1], [0, 0, 1, 1], [], []>} : vector<16x64xbf16>, vector<64x256xbf16>, vector<16x256xf32> -> vector<16x256xf32>
    %252 = vector.extract_strided_slice %5 {offsets = [0, 160], sizes = [16, 32], strides = [1, 1]} : vector<16x192xf32> to vector<16x32xf32>
    %253 = vector.extract_strided_slice %4 {offsets = [0, 0], sizes = [16, 1], strides = [1, 1]} : vector<16x8xf32> to vector<16x1xf32>
    %254 = vector.extract_strided_slice %251 {offsets = [0, 0], sizes = [16, 32], strides = [1, 1]} : vector<16x256xf32> to vector<16x32xf32>
    %255 = vector.extract_strided_slice %176 {offsets = [0, 64], sizes = [16, 32], strides = [1, 1]} : vector<16x768xf32> to vector<16x32xf32>
    %256 = arith.addf %254, %255 : vector<16x32xf32>
    %257 = vector.broadcast %253 : vector<16x1xf32> to vector<16x32xf32>
    %258 = arith.mulf %257, %256 : vector<16x32xf32>
    %259 = arith.addf %252, %258 : vector<16x32xf32>
    %260 = vector.extract_strided_slice %4 {offsets = [0, 1], sizes = [16, 1], strides = [1, 1]} : vector<16x8xf32> to vector<16x1xf32>
    %261 = vector.extract_strided_slice %251 {offsets = [0, 32], sizes = [16, 32], strides = [1, 1]} : vector<16x256xf32> to vector<16x32xf32>
    %262 = vector.extract_strided_slice %176 {offsets = [0, 160], sizes = [16, 32], strides = [1, 1]} : vector<16x768xf32> to vector<16x32xf32>
    %263 = arith.addf %261, %262 : vector<16x32xf32>
    %264 = vector.broadcast %260 : vector<16x1xf32> to vector<16x32xf32>
    %265 = arith.mulf %264, %263 : vector<16x32xf32>
    %266 = arith.addf %259, %265 : vector<16x32xf32>
    %267 = vector.extract_strided_slice %4 {offsets = [0, 2], sizes = [16, 1], strides = [1, 1]} : vector<16x8xf32> to vector<16x1xf32>
    %268 = vector.extract_strided_slice %251 {offsets = [0, 64], sizes = [16, 32], strides = [1, 1]} : vector<16x256xf32> to vector<16x32xf32>
    %269 = vector.extract_strided_slice %176 {offsets = [0, 256], sizes = [16, 32], strides = [1, 1]} : vector<16x768xf32> to vector<16x32xf32>
    %270 = arith.addf %268, %269 : vector<16x32xf32>
    %271 = vector.broadcast %267 : vector<16x1xf32> to vector<16x32xf32>
    %272 = arith.mulf %271, %270 : vector<16x32xf32>
    %273 = arith.addf %266, %272 : vector<16x32xf32>
    %274 = vector.extract_strided_slice %4 {offsets = [0, 3], sizes = [16, 1], strides = [1, 1]} : vector<16x8xf32> to vector<16x1xf32>
    %275 = vector.extract_strided_slice %251 {offsets = [0, 96], sizes = [16, 32], strides = [1, 1]} : vector<16x256xf32> to vector<16x32xf32>
    %276 = vector.extract_strided_slice %176 {offsets = [0, 352], sizes = [16, 32], strides = [1, 1]} : vector<16x768xf32> to vector<16x32xf32>
    %277 = arith.addf %275, %276 : vector<16x32xf32>
    %278 = vector.broadcast %274 : vector<16x1xf32> to vector<16x32xf32>
    %279 = arith.mulf %278, %277 : vector<16x32xf32>
    %280 = arith.addf %273, %279 : vector<16x32xf32>
    %281 = vector.extract_strided_slice %4 {offsets = [0, 4], sizes = [16, 1], strides = [1, 1]} : vector<16x8xf32> to vector<16x1xf32>
    %282 = vector.extract_strided_slice %251 {offsets = [0, 128], sizes = [16, 32], strides = [1, 1]} : vector<16x256xf32> to vector<16x32xf32>
    %283 = vector.extract_strided_slice %176 {offsets = [0, 448], sizes = [16, 32], strides = [1, 1]} : vector<16x768xf32> to vector<16x32xf32>
    %284 = arith.addf %282, %283 : vector<16x32xf32>
    %285 = vector.broadcast %281 : vector<16x1xf32> to vector<16x32xf32>
    %286 = arith.mulf %285, %284 : vector<16x32xf32>
    %287 = arith.addf %280, %286 : vector<16x32xf32>
    %288 = vector.extract_strided_slice %4 {offsets = [0, 5], sizes = [16, 1], strides = [1, 1]} : vector<16x8xf32> to vector<16x1xf32>
    %289 = vector.extract_strided_slice %251 {offsets = [0, 160], sizes = [16, 32], strides = [1, 1]} : vector<16x256xf32> to vector<16x32xf32>
    %290 = vector.extract_strided_slice %176 {offsets = [0, 544], sizes = [16, 32], strides = [1, 1]} : vector<16x768xf32> to vector<16x32xf32>
    %291 = arith.addf %289, %290 : vector<16x32xf32>
    %292 = vector.broadcast %288 : vector<16x1xf32> to vector<16x32xf32>
    %293 = arith.mulf %292, %291 : vector<16x32xf32>
    %294 = arith.addf %287, %293 : vector<16x32xf32>
    %295 = vector.extract_strided_slice %4 {offsets = [0, 6], sizes = [16, 1], strides = [1, 1]} : vector<16x8xf32> to vector<16x1xf32>
    %296 = vector.extract_strided_slice %251 {offsets = [0, 192], sizes = [16, 32], strides = [1, 1]} : vector<16x256xf32> to vector<16x32xf32>
    %297 = vector.extract_strided_slice %176 {offsets = [0, 640], sizes = [16, 32], strides = [1, 1]} : vector<16x768xf32> to vector<16x32xf32>
    %298 = arith.addf %296, %297 : vector<16x32xf32>
    %299 = vector.broadcast %295 : vector<16x1xf32> to vector<16x32xf32>
    %300 = arith.mulf %299, %298 : vector<16x32xf32>
    %301 = arith.addf %294, %300 : vector<16x32xf32>
    %302 = vector.extract_strided_slice %4 {offsets = [0, 7], sizes = [16, 1], strides = [1, 1]} : vector<16x8xf32> to vector<16x1xf32>
    %303 = vector.extract_strided_slice %251 {offsets = [0, 224], sizes = [16, 32], strides = [1, 1]} : vector<16x256xf32> to vector<16x32xf32>
    %304 = vector.extract_strided_slice %176 {offsets = [0, 736], sizes = [16, 32], strides = [1, 1]} : vector<16x768xf32> to vector<16x32xf32>
    %305 = arith.addf %303, %304 : vector<16x32xf32>
    %306 = vector.broadcast %302 : vector<16x1xf32> to vector<16x32xf32>
    %307 = arith.mulf %306, %305 : vector<16x32xf32>
    %308 = arith.addf %301, %307 : vector<16x32xf32>
    %309 = math.tanh %308 : vector<16x32xf32>
    %310 = arith.mulf %242, %163 : vector<16x32xf32>
    %cst_41 = arith.constant 1.000000e+00 : f32
    %311 = vector.broadcast %cst_41 : f32 to vector<16x32xf32>
    %312 = arith.subf %311, %242 : vector<16x32xf32>
    %313 = arith.mulf %312, %309 : vector<16x32xf32>
    %314 = arith.addf %310, %313 : vector<16x32xf32>
    %c0_42 = arith.constant 0 : index
    %c0_43 = arith.constant 0 : index
    %315 = vector.load %arg18[%c0_42, %c0_43] : memref<16x32xf32, #tpu.memory_space<vmem>>, vector<16x32xf32>
    tpu.vector_store %arg18[%c0_42, %c0_43], %314 {strides = array<i32>} : memref<16x32xf32, #tpu.memory_space<vmem>>, vector<16x32xf32>,
    %c7_i32 = arith.constant 7 : i32
    %316 = arith.cmpi eq, %arg1, %c7_i32 : i32
    %317 = arith.extui %316 : i1 to i32
    %c0_i32_44 = arith.constant 0 : i32
    %318 = arith.cmpi ne, %317, %c0_i32_44 : i32
    scf.if %318 {
      %c0_45 = arith.constant 0 : index
      %c0_46 = arith.constant 0 : index
      %319 = vector.load %arg11[%c0_45, %c0_46] : memref<3x32xf32, #tpu.memory_space<vmem>>, vector<3x32xf32>
      %cst_47 = arith.constant dense<0.000000e+00> : vector<3x16xf32>
      %320 = tpu.matmul %319, %314, %cst_47 {dimension_numbers = #tpu.dot_dimension_numbers<[1], [1], [0], [0], [0, 0, 1, 0], [], []>} : vector<3x32xf32>, vector<16x32xf32>, vector<3x16xf32> -> vector<3x16xf32>
      %c0_48 = arith.constant 0 : index
      %c0_49 = arith.constant 0 : index
      %321 = vector.load %arg12[%c0_48, %c0_49] : memref<3x1xf32, #tpu.memory_space<vmem>>, vector<3x1xf32>
      %322 = vector.broadcast %321 : vector<3x1xf32> to vector<3x16xf32>
      %323 = arith.addf %320, %322 : vector<3x16xf32>
      %c0_50 = arith.constant 0 : index
      %c0_51 = arith.constant 0 : index
      %c0_52 = arith.constant 0 : index
      %324 = vector.load %arg13[%c0_50, %c0_51, %c0_52] : memref<1x3x16xf32, #tpu.memory_space<vmem>>, vector<1x3x16xf32>
      %325 = vector.shape_cast %324 : vector<1x3x16xf32> to vector<3x16xf32>
      %326 = vector.shape_cast %323 : vector<3x16xf32> to vector<1x3x16xf32>
      tpu.vector_store %arg13[%c0_50, %c0_51, %c0_52], %326 {strides = array<i32>} : memref<1x3x16xf32, #tpu.memory_space<vmem>>, vector<1x3x16xf32>,
    } else {
    }
    return
  }
  func.func @transform_0(%arg0: i32, %arg1: i32) -> (i32, i32, i32, i32) {
    %c0_i32 = arith.constant 0 : i32
    %c0_i32_0 = arith.constant 0 : i32
    %c0_i32_1 = arith.constant 0 : i32
    %c0_i32_2 = arith.constant 0 : i32
    return %arg0, %c0_i32, %c0_i32_0, %c0_i32_1 : i32, i32, i32, i32
  }
  func.func @transform_1(%arg0: i32, %arg1: i32) -> (i32, i32) {
    %c0_i32 = arith.constant 0 : i32
    %c0_i32_0 = arith.constant 0 : i32
    %c0_i32_1 = arith.constant 0 : i32
    return %c0_i32, %c0_i32_0 : i32, i32
  }
  func.func @transform_2(%arg0: i32, %arg1: i32) -> (i32, i32) {
    %c0_i32 = arith.constant 0 : i32
    %c0_i32_0 = arith.constant 0 : i32
    %c0_i32_1 = arith.constant 0 : i32
    return %c0_i32, %c0_i32_0 : i32, i32
  }
  func.func @transform_3(%arg0: i32, %arg1: i32) -> (i32, i32) {
    %c0_i32 = arith.constant 0 : i32
    %c0_i32_0 = arith.constant 0 : i32
    %c0_i32_1 = arith.constant 0 : i32
    return %c0_i32, %c0_i32_0 : i32, i32
  }
  func.func @transform_4(%arg0: i32, %arg1: i32) -> (i32, i32) {
    %c0_i32 = arith.constant 0 : i32
    %c0_i32_0 = arith.constant 0 : i32
    %c0_i32_1 = arith.constant 0 : i32
    return %c0_i32, %c0_i32_0 : i32, i32
  }
  func.func @transform_5(%arg0: i32, %arg1: i32) -> (i32, i32) {
    %c0_i32 = arith.constant 0 : i32
    %c0_i32_0 = arith.constant 0 : i32
    %c0_i32_1 = arith.constant 0 : i32
    return %c0_i32, %c0_i32_0 : i32, i32
  }
  func.func @transform_6(%arg0: i32, %arg1: i32) -> (i32, i32) {
    %c0_i32 = arith.constant 0 : i32
    %c0_i32_0 = arith.constant 0 : i32
    %c0_i32_1 = arith.constant 0 : i32
    return %c0_i32, %c0_i32_0 : i32, i32
  }
  func.func @transform_7(%arg0: i32, %arg1: i32) -> (i32, i32) {
    %c0_i32 = arith.constant 0 : i32
    %c0_i32_0 = arith.constant 0 : i32
    %c0_i32_1 = arith.constant 0 : i32
    return %c0_i32, %c0_i32_0 : i32, i32
  }
  func.func @transform_8(%arg0: i32, %arg1: i32) -> (i32, i32) {
    %c0_i32 = arith.constant 0 : i32
    %c0_i32_0 = arith.constant 0 : i32
    %c0_i32_1 = arith.constant 0 : i32
    return %c0_i32, %c0_i32_0 : i32, i32
  }
  func.func @transform_9(%arg0: i32, %arg1: i32) -> (i32, i32) {
    %c0_i32 = arith.constant 0 : i32
    %c0_i32_0 = arith.constant 0 : i32
    %c0_i32_1 = arith.constant 0 : i32
    return %c0_i32, %c0_i32_0 : i32, i32
  }
  func.func @transform_10(%arg0: i32, %arg1: i32) -> (i32, i32) {
    %c0_i32 = arith.constant 0 : i32
    %c0_i32_0 = arith.constant 0 : i32
    %c0_i32_1 = arith.constant 0 : i32
    return %c0_i32, %c0_i32_0 : i32, i32
  }
  func.func @transform_11(%arg0: i32, %arg1: i32) -> (i32, i32, i32) {
    %c0_i32 = arith.constant 0 : i32
    %c0_i32_0 = arith.constant 0 : i32
    %c0_i32_1 = arith.constant 0 : i32
    return %arg0, %c0_i32, %c0_i32_0 : i32, i32, i32
  }
}

</mosaic_0001>

<llo_original>
// kernel: agcrn_forward.1
$region0: #{agcrn_forward.1}
  #allocation0 [shape = 'u32[]', space=smem, size = 0x4, offset = 0x4, fixed_abs, tag = 'smem constant byte address 0x4 - core index']
  #allocation1 [shape = 'u32[144,128]{1,0:T(1,128)}', space=vmem, size = 0x12000, scoped, tag = 'internal scratch']
  #allocation2 [shape = 'bf16[32,16]{1,0:T(16,128)(2,1)}', space=vmem, size = 0x2000, scoped, tag = 'scratch operand']
  #allocation3 [shape = 'f32[16,8]{1,0:T(8,128)}', space=vmem, size = 0x2000, scoped, tag = 'scratch operand']
  #allocation4 [shape = 'f32[16,192]{1,0:T(8,128)}', space=vmem, size = 0x4000, scoped, tag = 'scratch operand']
  #allocation5 [shape = 'f32[16,32]{1,0:T(8,128)}', space=vmem, size = 0x2000, scoped, tag = 'scratch operand']
  #allocation6 [shape = 'f32[16,32]{1,0:T(8,128)}', space=vmem, size = 0x2000, scoped, tag = 'scratch operand']
  %s0 = inlined_call_operand.vmem [shape: bf16[2,8,16,2], index: 0, kind: input, shape index: {}]
  %s1 = inlined_call_operand.vmem [shape: f32[16,8], index: 1, kind: input, shape index: {}]
  %s2 = inlined_call_operand.vmem [shape: f32[8,192], index: 2, kind: input, shape index: {}]
  %s3 = inlined_call_operand.vmem [shape: bf16[4,768], index: 3, kind: input, shape index: {}]
  %s4 = inlined_call_operand.vmem [shape: bf16[64,512], index: 4, kind: input, shape index: {}]
  %s5 = inlined_call_operand.vmem [shape: bf16[64,256], index: 5, kind: input, shape index: {}]
  %s6 = inlined_call_operand.vmem [shape: bf16[64,768], index: 6, kind: input, shape index: {}]
  %s7 = inlined_call_operand.vmem [shape: bf16[64,512], index: 7, kind: input, shape index: {}]
  %s8 = inlined_call_operand.vmem [shape: bf16[64,256], index: 8, kind: input, shape index: {}]
  %s9 = inlined_call_operand.vmem [shape: f32[3,32], index: 9, kind: input, shape index: {}]
  %s10 = inlined_call_operand.vmem [shape: f32[3,1], index: 10, kind: input, shape index: {}]
  %s11 = inlined_call_operand.vmem [shape: f32[2,3,16], index: 11, kind: output, shape index: {}]
  %s12 = sld [smem:[#allocation0]]
  $region85: #{agcrn_forward.1} parent=0
    _
  %s14 = ssub.s32 1, %s12
  %s15 = scalar_select 0, %s14, %s12
  loop: start=0, step=1, limit=18
  $region2: #{agcrn_forward.1} parent=0 // loop_pre_header
    _
  $region3: #{agcrn_forward.1} parent=0 // loop_header
    %s17 = sphi 0, %s21
    %p18 = scmp.ge.s32.totalorder %s17, 18
    %s24 = sphi 0, %s36
    %s25 = sphi 0, %s32
    %s26 = sphi 0, %s24
    %s27 = sphi 0, %s25
    %s28 = sphi 0, %s26
    %s29 = sphi 0, %s27
    %s39 = sphi 0, %s41
    %s42 = sphi 0, %s39
    %s43 = sphi 0, %s42
    %s59 = sphi 0, %s43
    %s63 = sphi 0, %s63
    %s65 = sphi 0, %s63
    %s66 = sphi 0, %s65
    %s80 = sphi 0, %s66
    %s84 = sphi 0, %s84
    %s86 = sphi 0, %s84
    %s87 = sphi 0, %s86
    %s101 = sphi 0, %s87
    %s105 = sphi 0, %s105
    %s107 = sphi 0, %s105
    %s108 = sphi 0, %s107
    %s122 = sphi 0, %s108
    %s126 = sphi 0, %s126
    %s128 = sphi 0, %s126
    %s129 = sphi 0, %s128
    %s143 = sphi 0, %s129
    %s147 = sphi 0, %s147
    %s149 = sphi 0, %s147
    %s150 = sphi 0, %s149
    %s164 = sphi 0, %s150
    %s168 = sphi 0, %s168
    %s170 = sphi 0, %s168
    %s171 = sphi 0, %s170
    %s185 = sphi 0, %s171
    %s189 = sphi 0, %s189
    %s191 = sphi 0, %s189
    %s192 = sphi 0, %s191
    %s206 = sphi 0, %s192
    %s210 = sphi 0, %s210
    %s212 = sphi 0, %s210
    %s213 = sphi 0, %s212
    %s227 = sphi 0, %s213
    %s231 = sphi 0, %s231
    %s233 = sphi 0, %s231
    %s234 = sphi 0, %s233
    %s248 = sphi 0, %s234
    %s252 = sphi 0, %s252
    %s254 = sphi 0, %s252
    %s255 = sphi 0, %s254
    %s269 = sphi 0, %s255
    %s275 = sphi 0, %s277
    %s278 = sphi 0, %s275
    %s279 = sphi 0, %s278
    %s295 = sphi 0, %s279
  $region4: #{agcrn_forward.1} parent=0 // loop_header_branch
    %20 = sbr.rel (%p18) target = $region8
  $region5: #{agcrn_forward.1} parent=0 // loop_body
    %s22 = ssub.s32 %s17, 1
    %s23 = ssub.s32 %s17, 2
    %s30 = sadd.s32 1, %s25
    %p31 = scmp.ge.s32.totalorder %s30, 8
    %s32 = scalar_select %p31, 0, %s30
    %s33 = sadd.s32 1, %s24
    %s34 = scalar_select %p31, %s33, %s24
    %p35 = scmp.ge.s32.totalorder %s34, 2
    %s36 = scalar_select %p35, 0, %s34
    %s37 = ssub.s32 %s24, %s36
    %p38 = scmp.eq.s32.totalorder %s37, 0
    %s40 = sadd.s32 %s39, 1
    %s41 = scalar_select %p38, %s39, %s40
    %p44 = pneg %p38
    %p45 = scmp.eq.s32.totalorder %s17, 15
    %p46 = por %p44, %p45
    %p47 = scmp.ne.s32.totalorder %s39, %s42
    %p48 = scmp.eq.s32.totalorder %s17, 0
    %p49 = por %p47, %p48
    %p50 = scmp.ne.s32.totalorder %s39, %s42
    %p51 = scmp.eq.s32.totalorder %s22, 15
    %p52 = por %p50, %p51
    %p53 = scmp.ne.s32.totalorder %s42, %s43
    %p54 = scmp.eq.s32.totalorder %s22, 0
    %p55 = por %p53, %p54
    %p56 = scmp.ne.s32.totalorder %s42, %s43
    %p57 = scmp.eq.s32.totalorder %s23, 15
    %p58 = por %p56, %p57
    %p60 = scmp.ne.s32.totalorder %s43, %s59
    %p61 = scmp.eq.s32.totalorder %s23, 0
    %p62 = por %p60, %p61
    %s64 = sadd.s32 %s63, 1
    %p67 = scmp.eq.s32.totalorder %s17, 15
    %p68 = scmp.ne.s32.totalorder %s63, %s65
    %p69 = scmp.eq.s32.totalorder %s17, 0
    %p70 = por %p68, %p69
    %p71 = scmp.ne.s32.totalorder %s63, %s65
    %p72 = scmp.eq.s32.totalorder %s22, 15
    %p73 = por %p71, %p72
    %p74 = scmp.ne.s32.totalorder %s65, %s66
    %p75 = scmp.eq.s32.totalorder %s22, 0
    %p76 = por %p74, %p75
    %p77 = scmp.ne.s32.totalorder %s65, %s66
    %p78 = scmp.eq.s32.totalorder %s23, 15
    %p79 = por %p77, %p78
    %p81 = scmp.ne.s32.totalorder %s66, %s80
    %p82 = scmp.eq.s32.totalorder %s23, 0
    %p83 = por %p81, %p82
    %s85 = sadd.s32 %s84, 1
    %p88 = scmp.eq.s32.totalorder %s17, 15
    %p89 = scmp.ne.s32.totalorder %s84, %s86
    %p90 = scmp.eq.s32.totalorder %s17, 0
    %p91 = por %p89, %p90
    %p92 = scmp.ne.s32.totalorder %s84, %s86
    %p93 = scmp.eq.s32.totalorder %s22, 15
    %p94 = por %p92, %p93
    %p95 = scmp.ne.s32.totalorder %s86, %s87
    %p96 = scmp.eq.s32.totalorder %s22, 0
    %p97 = por %p95, %p96
    %p98 = scmp.ne.s32.totalorder %s86, %s87
    %p99 = scmp.eq.s32.totalorder %s23, 15
    %p100 = por %p98, %p99
    %p102 = scmp.ne.s32.totalorder %s87, %s101
    %p103 = scmp.eq.s32.totalorder %s23, 0
    %p104 = por %p102, %p103
    %s106 = sadd.s32 %s105, 1
    %p109 = scmp.eq.s32.totalorder %s17, 15
    %p110 = scmp.ne.s32.totalorder %s105, %s107
    %p111 = scmp.eq.s32.totalorder %s17, 0
    %p112 = por %p110, %p111
    %p113 = scmp.ne.s32.totalorder %s105, %s107
    %p114 = scmp.eq.s32.totalorder %s22, 15
    %p115 = por %p113, %p114
    %p116 = scmp.ne.s32.totalorder %s107, %s108
    %p117 = scmp.eq.s32.totalorder %s22, 0
    %p118 = por %p116, %p117
    %p119 = scmp.ne.s32.totalorder %s107, %s108
    %p120 = scmp.eq.s32.totalorder %s23, 15
    %p121 = por %p119, %p120
    %p123 = scmp.ne.s32.totalorder %s108, %s122
    %p124 = scmp.eq.s32.totalorder %s23, 0
    %p125 = por %p123, %p124
    %s127 = sadd.s32 %s126, 1
    %p130 = scmp.eq.s32.totalorder %s17, 15
    %p131 = scmp.ne.s32.totalorder %s126, %s128
    %p132 = scmp.eq.s32.totalorder %s17, 0
    %p133 = por %p131, %p132
    %p134 = scmp.ne.s32.totalorder %s126, %s128
    %p135 = scmp.eq.s32.totalorder %s22, 15
    %p136 = por %p134, %p135
    %p137 = scmp.ne.s32.totalorder %s128, %s129
    %p138 = scmp.eq.s32.totalorder %s22, 0
    %p139 = por %p137, %p138
    %p140 = scmp.ne.s32.totalorder %s128, %s129
    %p141 = scmp.eq.s32.totalorder %s23, 15
    %p142 = por %p140, %p141
    %p144 = scmp.ne.s32.totalorder %s129, %s143
    %p145 = scmp.eq.s32.totalorder %s23, 0
    %p146 = por %p144, %p145
    %s148 = sadd.s32 %s147, 1
    %p151 = scmp.eq.s32.totalorder %s17, 15
    %p152 = scmp.ne.s32.totalorder %s147, %s149
    %p153 = scmp.eq.s32.totalorder %s17, 0
    %p154 = por %p152, %p153
    %p155 = scmp.ne.s32.totalorder %s147, %s149
    %p156 = scmp.eq.s32.totalorder %s22, 15
    %p157 = por %p155, %p156
    %p158 = scmp.ne.s32.totalorder %s149, %s150
    %p159 = scmp.eq.s32.totalorder %s22, 0
    %p160 = por %p158, %p159
    %p161 = scmp.ne.s32.totalorder %s149, %s150
    %p162 = scmp.eq.s32.totalorder %s23, 15
    %p163 = por %p161, %p162
    %p165 = scmp.ne.s32.totalorder %s150, %s164
    %p166 = scmp.eq.s32.totalorder %s23, 0
    %p167 = por %p165, %p166
    %s169 = sadd.s32 %s168, 1
    %p172 = scmp.eq.s32.totalorder %s17, 15
    %p173 = scmp.ne.s32.totalorder %s168, %s170
    %p174 = scmp.eq.s32.totalorder %s17, 0
    %p175 = por %p173, %p174
    %p176 = scmp.ne.s32.totalorder %s168, %s170
    %p177 = scmp.eq.s32.totalorder %s22, 15
    %p178 = por %p176, %p177
    %p179 = scmp.ne.s32.totalorder %s170, %s171
    %p180 = scmp.eq.s32.totalorder %s22, 0
    %p181 = por %p179, %p180
    %p182 = scmp.ne.s32.totalorder %s170, %s171
    %p183 = scmp.eq.s32.totalorder %s23, 15
    %p184 = por %p182, %p183
    %p186 = scmp.ne.s32.totalorder %s171, %s185
    %p187 = scmp.eq.s32.totalorder %s23, 0
    %p188 = por %p186, %p187
    %s190 = sadd.s32 %s189, 1
    %p193 = scmp.eq.s32.totalorder %s17, 15
    %p194 = scmp.ne.s32.totalorder %s189, %s191
    %p195 = scmp.eq.s32.totalorder %s17, 0
    %p196 = por %p194, %p195
    %p197 = scmp.ne.s32.totalorder %s189, %s191
    %p198 = scmp.eq.s32.totalorder %s22, 15
    %p199 = por %p197, %p198
    %p200 = scmp.ne.s32.totalorder %s191, %s192
    %p201 = scmp.eq.s32.totalorder %s22, 0
    %p202 = por %p200, %p201
    %p203 = scmp.ne.s32.totalorder %s191, %s192
    %p204 = scmp.eq.s32.totalorder %s23, 15
    %p205 = por %p203, %p204
    %p207 = scmp.ne.s32.totalorder %s192, %s206
    %p208 = scmp.eq.s32.totalorder %s23, 0
    %p209 = por %p207, %p208
    %s211 = sadd.s32 %s210, 1
    %p214 = scmp.eq.s32.totalorder %s17, 15
    %p215 = scmp.ne.s32.totalorder %s210, %s212
    %p216 = scmp.eq.s32.totalorder %s17, 0
    %p217 = por %p215, %p216
    %p218 = scmp.ne.s32.totalorder %s210, %s212
    %p219 = scmp.eq.s32.totalorder %s22, 15
    %p220 = por %p218, %p219
    %p221 = scmp.ne.s32.totalorder %s212, %s213
    %p222 = scmp.eq.s32.totalorder %s22, 0
    %p223 = por %p221, %p222
    %p224 = scmp.ne.s32.totalorder %s212, %s213
    %p225 = scmp.eq.s32.totalorder %s23, 15
    %p226 = por %p224, %p225
    %p228 = scmp.ne.s32.totalorder %s213, %s227
    %p229 = scmp.eq.s32.totalorder %s23, 0
    %p230 = por %p228, %p229
    %s232 = sadd.s32 %s231, 1
    %p235 = scmp.eq.s32.totalorder %s17, 15
    %p236 = scmp.ne.s32.totalorder %s231, %s233
    %p237 = scmp.eq.s32.totalorder %s17, 0
    %p238 = por %p236, %p237
    %p239 = scmp.ne.s32.totalorder %s231, %s233
    %p240 = scmp.eq.s32.totalorder %s22, 15
    %p241 = por %p239, %p240
    %p242 = scmp.ne.s32.totalorder %s233, %s234
    %p243 = scmp.eq.s32.totalorder %s22, 0
    %p244 = por %p242, %p243
    %p245 = scmp.ne.s32.totalorder %s233, %s234
    %p246 = scmp.eq.s32.totalorder %s23, 15
    %p247 = por %p245, %p246
    %p249 = scmp.ne.s32.totalorder %s234, %s248
    %p250 = scmp.eq.s32.totalorder %s23, 0
    %p251 = por %p249, %p250
    %s253 = sadd.s32 %s252, 1
    %p256 = scmp.eq.s32.totalorder %s17, 15
    %p257 = scmp.ne.s32.totalorder %s252, %s254
    %p258 = scmp.eq.s32.totalorder %s17, 0
    %p259 = por %p257, %p258
    %p260 = scmp.ne.s32.totalorder %s252, %s254
    %p261 = scmp.eq.s32.totalorder %s22, 15
    %p262 = por %p260, %p261
    %p263 = scmp.ne.s32.totalorder %s254, %s255
    %p264 = scmp.eq.s32.totalorder %s22, 0
    %p265 = por %p263, %p264
    %p266 = scmp.ne.s32.totalorder %s254, %s255
    %p267 = scmp.eq.s32.totalorder %s23, 15
    %p268 = por %p266, %p267
    %p270 = scmp.ne.s32.totalorder %s255, %s269
    %p271 = scmp.eq.s32.totalorder %s23, 0
    %p272 = por %p270, %p271
    %s273 = ssub.s32 %s24, %s36
    %p274 = scmp.eq.s32.totalorder %s273, 0
    %s276 = sadd.s32 %s275, 1
    %s277 = scalar_select %p274, %s275, %s276
    %p280 = pneg %p274
    %p281 = scmp.eq.s32.totalorder %s17, 15
    %p282 = por %p280, %p281
    %p283 = scmp.ne.s32.totalorder %s275, %s278
    %p284 = scmp.eq.s32.totalorder %s17, 0
    %p285 = por %p283, %p284
    %p286 = scmp.ne.s32.totalorder %s275, %s278
    %p287 = scmp.eq.s32.totalorder %s22, 15
    %p288 = por %p286, %p287
    %p289 = scmp.ne.s32.totalorder %s278, %s279
    %p290 = scmp.eq.s32.totalorder %s22, 0
    %p291 = por %p289, %p290
    %p292 = scmp.ne.s32.totalorder %s278, %s279
    %p293 = scmp.eq.s32.totalorder %s23, 15
    %p294 = por %p292, %p293
    %p296 = scmp.ne.s32.totalorder %s279, %s295
    %p297 = scmp.eq.s32.totalorder %s23, 0
    %p298 = por %p296, %p297
    %p299 = scmp.le.s32.totalorder 1, %s17
    %p300 = scmp.lt.s32.totalorder %s17, 17
    %p301 = pnand %p299, %p300
    %p302 = pneg %p301
    // Predicated region
    $region9: #{agcrn_forward.1} parent=5 // pred_check
      _
    $region10: #{agcrn_forward.1} parent=5 // pred_check_branch
      %304 = sbr.rel (%p301) target = $region12
    $region11: #{agcrn_forward.1} parent=5 // pred_region
      %s305 = ssub.s32 %s17, 1
      // Predicated region
      $region13: #{agcrn_forward.1} parent=11 // pred_check
        %p306 = pneg %p76
      $region14: #{agcrn_forward.1} parent=11 // pred_check_branch
        %308 = sbr.rel (%p306) target = $region16
      $region15: #{agcrn_forward.1} parent=11 // pred_region
        _
      $region16: #{agcrn_forward.1} parent=11 // pred_fallthru
        _
      // Predicated region
      $region17: #{agcrn_forward.1} parent=11 // pred_check
        %p309 = pneg %p97
      $region18: #{agcrn_forward.1} parent=11 // pred_check_branch
        %311 = sbr.rel (%p309) target = $region20
      $region19: #{agcrn_forward.1} parent=11 // pred_region
        _
      $region20: #{agcrn_forward.1} parent=11 // pred_fallthru
        _
      // Predicated region
      $region21: #{agcrn_forward.1} parent=11 // pred_check
        %p312 = pneg %p118
      $region22: #{agcrn_forward.1} parent=11 // pred_check_branch
        %314 = sbr.rel (%p312) target = $region24
      $region23: #{agcrn_forward.1} parent=11 // pred_region
        _
      $region24: #{agcrn_forward.1} parent=11 // pred_fallthru
        _
      // Predicated region
      $region25: #{agcrn_forward.1} parent=11 // pred_check
        %p315 = pneg %p139
      $region26: #{agcrn_forward.1} parent=11 // pred_check_branch
        %317 = sbr.rel (%p315) target = $region28
      $region27: #{agcrn_forward.1} parent=11 // pred_region
        _
      $region28: #{agcrn_forward.1} parent=11 // pred_fallthru
        _
      // Predicated region
      $region29: #{agcrn_forward.1} parent=11 // pred_check
        %p318 = pneg %p160
      $region30: #{agcrn_forward.1} parent=11 // pred_check_branch
        %320 = sbr.rel (%p318) target = $region32
      $region31: #{agcrn_forward.1} parent=11 // pred_region
        _
      $region32: #{agcrn_forward.1} parent=11 // pred_fallthru
        _
      // Predicated region
      $region33: #{agcrn_forward.1} parent=11 // pred_check
        %p321 = pneg %p181
      $region34: #{agcrn_forward.1} parent=11 // pred_check_branch
        %323 = sbr.rel (%p321) target = $region36
      $region35: #{agcrn_forward.1} parent=11 // pred_region
        _
      $region36: #{agcrn_forward.1} parent=11 // pred_fallthru
        _
      // Predicated region
      $region37: #{agcrn_forward.1} parent=11 // pred_check
        %p324 = pneg %p202
      $region38: #{agcrn_forward.1} parent=11 // pred_check_branch
        %326 = sbr.rel (%p324) target = $region40
      $region39: #{agcrn_forward.1} parent=11 // pred_region
        _
      $region40: #{agcrn_forward.1} parent=11 // pred_fallthru
        _
      // Predicated region
      $region41: #{agcrn_forward.1} parent=11 // pred_check
        %p327 = pneg %p223
      $region42: #{agcrn_forward.1} parent=11 // pred_check_branch
        %329 = sbr.rel (%p327) target = $region44
      $region43: #{agcrn_forward.1} parent=11 // pred_region
        _
      $region44: #{agcrn_forward.1} parent=11 // pred_fallthru
        _
      // Predicated region
      $region45: #{agcrn_forward.1} parent=11 // pred_check
        %p330 = pneg %p244
      $region46: #{agcrn_forward.1} parent=11 // pred_check_branch
        %332 = sbr.rel (%p330) target = $region48
      $region47: #{agcrn_forward.1} parent=11 // pred_region
        _
      $region48: #{agcrn_forward.1} parent=11 // pred_fallthru
        _
      // Predicated region
      $region49: #{agcrn_forward.1} parent=11 // pred_check
        %p333 = pneg %p265
      $region50: #{agcrn_forward.1} parent=11 // pred_check_branch
        %335 = sbr.rel (%p333) target = $region52
      $region51: #{agcrn_forward.1} parent=11 // pred_region
        _
      $region52: #{agcrn_forward.1} parent=11 // pred_fallthru
        _
    $region12: #{agcrn_forward.1} parent=5 // pred_fallthru
      _
    %p336 = scmp.lt.s32.totalorder %s17, 16
    // Predicated region
    $region53: #{agcrn_forward.1} parent=5 // pred_check
      %p337 = pneg %p336
    $region54: #{agcrn_forward.1} parent=5 // pred_check_branch
      %339 = sbr.rel (%p337) target = $region56
    $region55: #{agcrn_forward.1} parent=5 // pred_region
      // Predicated region
      $region57: #{agcrn_forward.1} parent=55 // pred_check
        %p340 = pneg %p49
      $region58: #{agcrn_forward.1} parent=55 // pred_check_branch
        %342 = sbr.rel (%p340) target = $region60
      $region59: #{agcrn_forward.1} parent=55 // pred_region
        %p343 = scmp.lt.s32.totalorder %s24, 1
        %s344 = scalar_select %p343, %s24, 1
        %s345 = smul.addr %s344, 16
        %s346 = smul.addr %s345, 4
        %s347 = scalar_lea.vmem %s0, %s346
      $region60: #{agcrn_forward.1} parent=55 // pred_fallthru
        _
    $region56: #{agcrn_forward.1} parent=5 // pred_fallthru
      _
    %p348 = scmp.le.s32.totalorder 1, %s17
    %p349 = scmp.lt.s32.totalorder %s17, 17
    %p350 = pnand %p348, %p349
    %p351 = pneg %p350
    // Predicated region
    $region61: #{agcrn_forward.1} parent=5 // pred_check
      _
    $region62: #{agcrn_forward.1} parent=5 // pred_check_branch
      %353 = sbr.rel (%p350) target = $region64
    $region63: #{agcrn_forward.1} parent=5 // pred_region
      %s354 = ssub.s32 %s17, 1
      %p355 = scmp.lt.s32.totalorder %s26, 1
      %s356 = scalar_select %p355, %s26, 1
      %s357 = smul.addr %s356, 16
      %s358 = smul.addr %s357, 4
      %s359 = scalar_lea.vmem %s0, %s358
      %p360 = pneg %p55
      %p361 = pneg %p52
      %p362 = pneg %p76
      %p363 = pneg %p73
      %p364 = pneg %p97
      %p365 = pneg %p94
      %p366 = pneg %p118
      %p367 = pneg %p115
      %p368 = pneg %p139
      %p369 = pneg %p136
      %p370 = pneg %p160
      %p371 = pneg %p157
      %p372 = pneg %p181
      %p373 = pneg %p178
      %p374 = pneg %p202
      %p375 = pneg %p199
      %p376 = pneg %p223
      %p377 = pneg %p220
      %p378 = pneg %p244
      %p379 = pneg %p241
      %p380 = pneg %p265
      %p381 = pneg %p262
      %p382 = pneg %p291
      %p383 = pneg %p288
      %p384 = scmp.lt.s32.totalorder %s26, 1
      %s385 = scalar_select %p384, %s26, 1
      %s386 = smul.addr %s385, 4
      %s387 = scalar_lea.vmem %s11, %s386
      %p388 = scmp.lt.s32.totalorder %s26, 1
      %s389 = scalar_select %p388, %s26, 1
      %s390 = smul.addr %s389, 16
      %s391 = smul.addr %s390, 4
      %s392 = scalar_lea.vmem %s0, %s391
      %p393 = scmp.lt.s32.totalorder %s26, 1
      %s394 = scalar_select %p393, %s26, 1
      %s395 = smul.addr %s394, 4
      %s396 = scalar_lea.vmem %s11, %s395
      %p398 = scmp.eq.s32.totalorder %s27, 0
      // Predicated region
      $region65: #{agcrn_forward.1} parent=63 // pred_check
        %p399 = pneg %p398
      $region66: #{agcrn_forward.1} parent=63 // pred_check_branch
        %401 = sbr.rel (%p399) target = $region68
      $region67: #{agcrn_forward.1} parent=63 // pred_region
        %v402 = vld [vmem:[%s1] sm:$0xff]
        %v403 = vld [vmem:[%s1 + $0x8] sm:$0xff]
        %vm404 = vcmask 64512
        %v406 = vsel %vm404, %v402, 0
        %v409 = vsel %vm404, %v403, 0
        %411 = vmatprep.subr.mxu0 0.0
        %412 = vmatpush1.xpose.msra.mxu0 %v406
        %413 = vmatprep.subr.mxu0 0.0
        %414 = vmatpush1.xpose.msra.mxu0 %v409
        %415 = vmatprep.subr.mxu0 0.0
        %416 = vmatpush1.xpose.msra.mxu0 0.0
        %417 = vmatprep.subr.mxu0 0.0
        %418 = vmatpush1.xpose.msra.mxu0 0.0
        %419 = vmatprep.subr.mxu0 0.0
        %420 = vmatpush1.xpose.msra.mxu0 0.0
        %421 = vmatprep.subr.mxu0 0.0
        %422 = vmatpush1.xpose.msra.mxu0 0.0
        %423 = vmatprep.subr.mxu0 0.0
        %424 = vmatpush1.xpose.msra.mxu0 0.0
        %425 = vmatprep.subr.mxu0 0.0
        %426 = vmatpush1.xpose.msra.mxu0 0.0
        %427 = vmatprep.subr.mxu0 0.0
        %428 = vmatpush1.xpose.msra.mxu0 0.0
        %429 = vmatprep.subr.mxu0 0.0
        %430 = vmatpush1.xpose.msra.mxu0 0.0
        %431 = vmatprep.subr.mxu0 0.0
        %432 = vmatpush1.xpose.msra.mxu0 0.0
        %433 = vmatprep.subr.mxu0 0.0
        %434 = vmatpush1.xpose.msra.mxu0 0.0
        %435 = vmatprep.subr.mxu0 0.0
        %436 = vmatpush1.xpose.msra.mxu0 0.0
        %437 = vmatprep.subr.mxu0 0.0
        %438 = vmatpush1.xpose.msra.mxu0 0.0
        %439 = vmatprep.subr.mxu0 0.0
        %440 = vmatpush1.xpose.msra.mxu0 0.0
        %441 = vmatprep.subr.mxu0 0.0
        %442 = vmatpush1.xpose.msra.mxu0 0.0
        %443 = vmatprep.subr.mxu0 0.0
        %444 = vmatpush1.xpose.msra.mxu0 0.0
        %445 = vmatprep.subr.mxu0 0.0
        %446 = vmatpush1.xpose.msra.mxu0 0.0
        %447 = vmatprep.subr.mxu0 0.0
        %448 = vmatpush1.xpose.msra.mxu0 0.0
        %449 = vmatprep.subr.mxu0 0.0
        %450 = vmatpush1.xpose.msra.mxu0 0.0
        %451 = vmatprep.subr.mxu0 0.0
        %452 = vmatpush1.xpose.msra.mxu0 0.0
        %453 = vmatprep.subr.mxu0 0.0
        %454 = vmatpush1.xpose.msra.mxu0 0.0
        %455 = vmatprep.subr.mxu0 0.0
        %456 = vmatpush1.xpose.msra.mxu0 0.0
        %457 = vmatprep.subr.mxu0 0.0
        %458 = vmatpush1.xpose.msra.mxu0 0.0
        %459 = vmatprep.subr.mxu0 0.0
        %460 = vmatpush1.xpose.msra.mxu0 0.0
        %461 = vmatprep.subr.mxu0 0.0
        %462 = vmatpush1.xpose.msra.mxu0 0.0
        %463 = vmatprep.subr.mxu0 0.0
        %464 = vmatpush1.xpose.msra.mxu0 0.0
        %465 = vmatprep.subr.mxu0 0.0
        %466 = vmatpush1.xpose.msra.mxu0 0.0
        %467 = vmatprep.subr.mxu0 0.0
        %468 = vmatpush1.xpose.msra.mxu0 0.0
        %469 = vmatprep.subr.mxu0 0.0
        %470 = vmatpush1.xpose.msra.mxu0 0.0
        %471 = vmatprep.subr.mxu0 0.0
        %472 = vmatpush1.xpose.msra.mxu0 0.0
        %473 = vmatprep.subr.mxu0 0.0
        %474 = vmatpush1.xpose.msra.mxu0 0.0
        %475 = vmatprep.mubr.f32.mxu0 0.0
        %476 = vmatmul.mubr.f32.gmra.mrb[0].mxu0 %v406
        %v477 = vpop.f32.mrb[0].mxu0
        %v478 = vadd.f32 0.0, %v477
        %v479 = vpop.f32.mrb[0].mxu0
        %480 = vmatprep.mubr.f32.mxu0 0.0
        %481 = vmatmul.mubr.f32.gmra.mrb[0].mxu0 %v409
        %v482 = vpop.f32.mrb[0].mxu0
        %v483 = vadd.f32 0.0, %v482
        %v484 = vpop.f32.mrb[0].mxu0
        %485 = vdwg.mxu0
        %v486 = vmax.f32 %v478, 0.0
        %v487 = vmax.f32 %v483, 0.0
        %vm488 = vcmask 130048
        %v489 = vsel %vm488, %v486, -inf
        %490 = vmax.xlane.f32.xlu0 %v489
        %v491 = vpop.xlane.xlu0 %490
        %v492 = vsel %vm488, %v487, -inf
        %493 = vmax.xlane.f32.xlu0 %v492
        %v494 = vpop.xlane.xlu0 %493
        %v495 = vsub.f32 %v486, %v491
        %v496 = vsub.f32 %v487, %v494
        %v497 = vmul.f32 %v495, 1.442695
        %v498 = vpow.pop %v497
        %v499 = vmul.f32 %v496, 1.442695
        %v500 = vpow.pop %v499
        %v501 = vsel %vm488, %v498, 0.0
        %502 = vadd.xlane.f32.xlu0 %v501
        %v503 = vpop.xlane.xlu0 %502
        %v504 = vsel %vm488, %v500, 0.0
        %505 = vadd.xlane.f32.xlu0 %v504
        %v506 = vpop.xlane.xlu0 %505
        %v507 = vrcp.pop %v503
        %v508 = vmul.f32 %v498, %v507
        %v509 = vrcp.pop %v506
        %v510 = vmul.f32 %v500, %v509
        %v511 = vlaneseq
        %v512 = vshrl.u32 %v511, 7
        %v513 = vadd.s32 %v512, 8
        %v514 = vlaneseq
        %v515 = vand.u32 %v514, 127
        %vm516 = vcmp.eq.s32.totalorder %v512, %v515
        %vm517 = vcmp.eq.s32.totalorder %v513, %v515
        %v518 = vsel %vm516, 1, 0
        %v519 = vsel %vm517, 1, 0
        %v520 = vcvt.s32.f32 %v518
        %v521 = vcvt.s32.f32 %v519
        %v522 = vpack.c.bf16 %v521, %v520
        %523 = vst.msk [vmem:[#allocation2] sm:$0xff] %vm488, %v522
        %v524 = vpack.c.bf16 %v510, %v508
        %525 = vst.msk [vmem:[#allocation2 + $0x8] sm:$0xff] %vm488, %v524
        %526 = vst.msk [vmem:[#allocation3] sm:$0xff] %vm404, %v402
        %527 = vst.msk [vmem:[#allocation3 + $0x8] sm:$0xff] %vm404, %v403
        %v528 = vld [vmem:[%s2] sm:$0xff]
        %v529 = vld [vmem:[%s2 + $0x8] sm:$0xff]
        %530 = vmatprep.subr.mxu0 %v529
        %531 = vmatpush1.msra.mxu0 %v528
        %532 = vmatprep.subr.mxu0 0.0
        %533 = vmatpush1.msra.mxu0 0.0
        %534 = vmatprep.subr.mxu0 0.0
        %535 = vmatpush1.msra.mxu0 0.0
        %536 = vmatprep.subr.mxu0 0.0
        %537 = vmatpush1.msra.mxu0 0.0
        %538 = vmatprep.subr.mxu0 0.0
        %539 = vmatpush1.msra.mxu0 0.0
        %540 = vmatprep.subr.mxu0 0.0
        %541 = vmatpush1.msra.mxu0 0.0
        %542 = vmatprep.subr.mxu0 0.0
        %543 = vmatpush1.msra.mxu0 0.0
        %544 = vmatprep.subr.mxu0 0.0
        %545 = vmatpush1.msra.mxu0 0.0
        %546 = vmatprep.subr.mxu0 0.0
        %547 = vmatpush1.msra.mxu0 0.0
        %548 = vmatprep.subr.mxu0 0.0
        %549 = vmatpush1.msra.mxu0 0.0
        %550 = vmatprep.subr.mxu0 0.0
        %551 = vmatpush1.msra.mxu0 0.0
        %552 = vmatprep.subr.mxu0 0.0
        %553 = vmatpush1.msra.mxu0 0.0
        %554 = vmatprep.subr.mxu0 0.0
        %555 = vmatpush1.msra.mxu0 0.0
        %556 = vmatprep.subr.mxu0 0.0
        %557 = vmatpush1.msra.mxu0 0.0
        %558 = vmatprep.subr.mxu0 0.0
        %559 = vmatpush1.msra.mxu0 0.0
        %560 = vmatprep.subr.mxu0 0.0
        %561 = vmatpush1.msra.mxu0 0.0
        %562 = vmatprep.subr.mxu0 0.0
        %563 = vmatpush1.msra.mxu0 0.0
        %564 = vmatprep.subr.mxu0 0.0
        %565 = vmatpush1.msra.mxu0 0.0
        %566 = vmatprep.subr.mxu0 0.0
        %567 = vmatpush1.msra.mxu0 0.0
        %568 = vmatprep.subr.mxu0 0.0
        %569 = vmatpush1.msra.mxu0 0.0
        %570 = vmatprep.subr.mxu0 0.0
        %571 = vmatpush1.msra.mxu0 0.0
        %572 = vmatprep.subr.mxu0 0.0
        %573 = vmatpush1.msra.mxu0 0.0
        %574 = vmatprep.subr.mxu0 0.0
        %575 = vmatpush1.msra.mxu0 0.0
        %576 = vmatprep.subr.mxu0 0.0
        %577 = vmatpush1.msra.mxu0 0.0
        %578 = vmatprep.subr.mxu0 0.0
        %579 = vmatpush1.msra.mxu0 0.0
        %580 = vmatprep.subr.mxu0 0.0
        %581 = vmatpush1.msra.mxu0 0.0
        %582 = vmatprep.subr.mxu0 0.0
        %583 = vmatpush1.msra.mxu0 0.0
        %584 = vmatprep.subr.mxu0 0.0
        %585 = vmatpush1.msra.mxu0 0.0
        %586 = vmatprep.subr.mxu0 0.0
        %587 = vmatpush1.msra.mxu0 0.0
        %588 = vmatprep.subr.mxu0 0.0
        %589 = vmatpush1.msra.mxu0 0.0
        %590 = vmatprep.subr.mxu0 0.0
        %591 = vmatpush1.msra.mxu0 0.0
        %592 = vmatprep.subr.mxu0 0.0
        %593 = vmatpush1.msra.mxu0 0.0
        %594 = vmatprep.mubr.f32.mxu0 0.0
        %595 = vmatmul.mubr.f32.gmra.mrb[0].mxu0 %v406
        %v596 = vpop.f32.mrb[0].mxu0
        %v597 = vadd.f32 0.0, %v596
        %v598 = vpop.f32.mrb[0].mxu0
        %v599 = vadd.f32 0.0, %v598
        %600 = vmatprep.mubr.f32.mxu0 0.0
        %601 = vmatmul.mubr.f32.gmra.mrb[0].mxu0 %v409
        %v602 = vpop.f32.mrb[0].mxu0
        %v603 = vadd.f32 0.0, %v602
        %v604 = vpop.f32.mrb[0].mxu0
        %v605 = vadd.f32 0.0, %v604
        %606 = vdwg.mxu0
        %607 = vst [vmem:[#allocation4] sm:$0xff] %v597
        %vm608 = vcmask 523264
        %609 = vst.msk [vmem:[#allocation4 + $0x8] sm:$0xff] %vm608, %v599
        %610 = vst [vmem:[#allocation4 + $0x10] sm:$0xff] %v603
        %611 = vst.msk [vmem:[#allocation4 + $0x18] sm:$0xff] %vm608, %v605
        %vm612 = vcmask 261120
        %613 = vst.msk [vmem:[#allocation5] sm:$0xff] %vm612, 0.0
        %614 = vst.msk [vmem:[#allocation5 + $0x8] sm:$0xff] %vm612, 0.0
        %615 = vst.msk [vmem:[#allocation6] sm:$0xff] %vm612, 0.0
        %616 = vst.msk [vmem:[#allocation6 + $0x8] sm:$0xff] %vm612, 0.0
        %vm617 = vcmask 124928
        %618 = vst.msk [vmem:[%s396] sm:$0x7] %vm617, 0.0
      $region68: #{agcrn_forward.1} parent=63 // pred_fallthru
        _
      %v619 = vld [vmem:[#allocation2] sm:$0xff]
      %v620 = vld [vmem:[#allocation2 + $0x8] sm:$0xff]
      %v621 = vld [vmem:[#allocation3] sm:$0xff]
      %v622 = vld [vmem:[#allocation3 + $0x8] sm:$0xff]
      %v623 = vld [vmem:[#allocation4] sm:$0xff]
      %v624 = vld [vmem:[#allocation4 + $0x8] sm:$0xff]
      %v625 = vld [vmem:[#allocation4 + $0x10] sm:$0xff]
      %v626 = vld [vmem:[#allocation4 + $0x18] sm:$0xff]
      %s627 = smul.u32 %s27, 2
      %s628 = smul.addr %s627, 4
      %s629 = scalar_lea.vmem %s392, %s628
      %v630 = vld [vmem:[%s629] sm:$0xf]
      %v631 = vld [vmem:[%s629 + $0x4] sm:$0xf]
      %v632 = vld [vmem:[#allocation5] sm:$0xff]
      %v633 = vld [vmem:[#allocation5 + $0x8] sm:$0xff]
      %v636 = vunpack.c.l.b16 %v630
      %v637 = vunpack.c.l.b16 %v631
      %v638 = vpack.c.b16 %v637, %v636
      %vm640 = vcmask 130048
      %v642 = vsel %vm640, %v619, 0
      %v645 = vsel %vm640, %v620, 0
      %647 = vmatprep.subr.bf16.mxu0 0
      %648 = vmatpush1.bf16.msra.mxu0 %v638
      %649 = vmatprep.subr.bf16.mxu0 0
      %650 = vmatpush1.bf16.msra.mxu0 0
      %651 = vmatprep.subr.bf16.mxu0 0
      %652 = vmatpush1.bf16.msra.mxu0 0
      %653 = vmatprep.subr.bf16.mxu0 0
      %654 = vmatpush1.bf16.msra.mxu0 0
      %655 = vmatprep.subr.bf16.mxu0 0
      %656 = vmatpush1.bf16.msra.mxu0 0
      %657 = vmatprep.subr.bf16.mxu0 0
      %658 = vmatpush1.bf16.msra.mxu0 0
      %659 = vmatprep.subr.bf16.mxu0 0
      %660 = vmatpush1.bf16.msra.mxu0 0
      %661 = vmatprep.subr.bf16.mxu0 0
      %662 = vmatpush1.bf16.msra.mxu0 0
      %663 = vmatprep.subr.bf16.mxu0 0
      %664 = vmatpush1.bf16.msra.mxu0 0
      %665 = vmatprep.subr.bf16.mxu0 0
      %666 = vmatpush1.bf16.msra.mxu0 0
      %667 = vmatprep.subr.bf16.mxu0 0
      %668 = vmatpush1.bf16.msra.mxu0 0
      %669 = vmatprep.subr.bf16.mxu0 0
      %670 = vmatpush1.bf16.msra.mxu0 0
      %671 = vmatprep.subr.bf16.mxu0 0
      %672 = vmatpush1.bf16.msra.mxu0 0
      %673 = vmatprep.subr.bf16.mxu0 0
      %674 = vmatpush1.bf16.msra.mxu0 0
      %675 = vmatprep.subr.bf16.mxu0 0
      %676 = vmatpush1.bf16.msra.mxu0 0
      %677 = vmatprep.subr.bf16.mxu0 0
      %678 = vmatpush1.bf16.msra.mxu0 0
      %679 = vmatprep.mubr.bf16.mxu0 0
      %680 = vmatmul.mubr.bf16.gmra.mrb[0].mxu0 %v642
      %v681 = vpop.f32.mrb[0].mxu0
      %v682 = vadd.f32 0.0, %v681
      %v683 = vpop.f32.mrb[0].mxu0
      %v684 = vpop.f32.mrb[0].mxu0
      %v685 = vadd.f32 0.0, %v684
      %v686 = vpop.f32.mrb[0].mxu0
      %687 = vmatprep.mubr.bf16.mxu0 0
      %688 = vmatmul.mubr.bf16.gmra.mrb[0].mxu0 %v645
      %v689 = vpop.f32.mrb[0].mxu0
      %v690 = vadd.f32 0.0, %v689
      %v691 = vpop.f32.mrb[0].mxu0
      %v692 = vpop.f32.mrb[0].mxu0
      %v693 = vadd.f32 0.0, %v692
      %v694 = vpop.f32.mrb[0].mxu0
      %695 = vdwg.mxu0
      %v696 = vpack.c.bf16 %v685, %v682
      %v697 = vpack.c.bf16 %v693, %v690
      %v698 = vpack.c.bf16 %v633, %v632
      %699 = vmatprep.subr.bf16.mxu0 0
      %700 = vmatpush1.bf16.msra.mxu0 %v698
      %701 = vmatprep.subr.bf16.mxu0 0
      %702 = vmatpush1.bf16.msra.mxu0 0
      %703 = vmatprep.subr.bf16.mxu0 0
      %704 = vmatpush1.bf16.msra.mxu0 0
      %705 = vmatprep.subr.bf16.mxu0 0
      %706 = vmatpush1.bf16.msra.mxu0 0
      %707 = vmatprep.subr.bf16.mxu0 0
      %708 = vmatpush1.bf16.msra.mxu0 0
      %709 = vmatprep.subr.bf16.mxu0 0
      %710 = vmatpush1.bf16.msra.mxu0 0
      %711 = vmatprep.subr.bf16.mxu0 0
      %712 = vmatpush1.bf16.msra.mxu0 0
      %713 = vmatprep.subr.bf16.mxu0 0
      %714 = vmatpush1.bf16.msra.mxu0 0
      %715 = vmatprep.subr.bf16.mxu0 0
      %716 = vmatpush1.bf16.msra.mxu0 0
      %717 = vmatprep.subr.bf16.mxu0 0
      %718 = vmatpush1.bf16.msra.mxu0 0
      %719 = vmatprep.subr.bf16.mxu0 0
      %720 = vmatpush1.bf16.msra.mxu0 0
      %721 = vmatprep.subr.bf16.mxu0 0
      %722 = vmatpush1.bf16.msra.mxu0 0
      %723 = vmatprep.subr.bf16.mxu0 0
      %724 = vmatpush1.bf16.msra.mxu0 0
      %725 = vmatprep.subr.bf16.mxu0 0
      %726 = vmatpush1.bf16.msra.mxu0 0
      %727 = vmatprep.subr.bf16.mxu0 0
      %728 = vmatpush1.bf16.msra.mxu0 0
      %729 = vmatprep.subr.bf16.mxu0 0
      %730 = vmatpush1.bf16.msra.mxu0 0
      %731 = vmatprep.mubr.bf16.mxu0 0
      %732 = vmatmul.mubr.bf16.gmra.mrb[0].mxu0 %v642
      %v733 = vpop.f32.mrb[0].mxu0
      %v734 = vadd.f32 0.0, %v733
      %v735 = vpop.f32.mrb[0].mxu0
      %v736 = vpop.f32.mrb[0].mxu0
      %v737 = vadd.f32 0.0, %v736
      %v738 = vpop.f32.mrb[0].mxu0
      %739 = vmatprep.mubr.bf16.mxu0 0
      %740 = vmatmul.mubr.bf16.gmra.mrb[0].mxu0 %v645
      %v741 = vpop.f32.mrb[0].mxu0
      %v742 = vadd.f32 0.0, %v741
      %v743 = vpop.f32.mrb[0].mxu0
      %v744 = vpop.f32.mrb[0].mxu0
      %v745 = vadd.f32 0.0, %v744
      %v746 = vpop.f32.mrb[0].mxu0
      %747 = vdwg.mxu0
      %v748 = vpack.c.bf16 %v737, %v734
      %v749 = vpack.c.bf16 %v745, %v742
      %751 = vrot.lane.b32.xlu0 %v697, 2
      %v752 = vpop.permute.xlu0 %751
      %vm753 = vcmask 15360
      %v756 = vsel %vm753, %v696, %v752
      %758 = vrot.lane.b32.xlu0 %v749, 32
      %v759 = vpop.permute.xlu0 %758
      %vm760 = vcmask 261120
      %v763 = vsel %vm760, %v748, %v759
      %v764 = vld [vmem:[%s3] sm:$0xff]
      %v765 = vld [vmem:[%s3 + $0x8] sm:$0xf]
      %v768 = vcombine.high %v764, %v764
      %v770 = vunpack.c.l.s4 1983009808
      %v771 = vunpack.c.0.s8 %v770
      %v772 = vlaneseq
      %v773 = vshrl.u32 %v772, 7
      %v774 = vsub.s32 %v771, %v773
      %v775 = vrot.slane %v764, %v774
      %v777 = vunpack.c.l.s4 1983009808
      %v778 = vunpack.c.0.s8 %v777
      %v779 = vlaneseq
      %v780 = vshrl.u32 %v779, 7
      %v781 = vsub.s32 %v778, %v780
      %v782 = vrot.slane %v768, %v781
      %v783 = vcombine.high %v775, %v775
      %v784 = vcombine.high %v782, %v782
      %v786 = vunpack.c.l.s4 1983009808
      %v787 = vunpack.c.0.s8 %v786
      %v788 = vlaneseq
      %v789 = vshrl.u32 %v788, 7
      %v790 = vsub.s32 %v787, %v789
      %v791 = vrot.slane %v765, %v790
      %v792 = vcombine.high %v791, %v791
      %vm793 = vcmask 31744
      %v794 = vsel %vm793, %v756, 0
      %vm796 = vcmask 1041408
      %v798 = vsel %vm796, %v775, 0
      %v801 = vsel %vm796, %v783, 0
      %v804 = vsel %vm796, %v782, 0
      %v807 = vsel %vm796, %v784, 0
      %v810 = vsel %vm796, %v791, 0
      %v813 = vsel %vm796, %v792, 0
      %815 = vmatprep.subr.bf16.mxu0 %v801
      %816 = vmatpush1.bf16.msra.mxu0 %v798
      %817 = vmatprep.subr.bf16.mxu0 0
      %818 = vmatpush1.bf16.msra.mxu0 0
      %819 = vmatprep.subr.bf16.mxu0 0
      %820 = vmatpush1.bf16.msra.mxu0 0
      %821 = vmatprep.subr.bf16.mxu0 0
      %822 = vmatpush1.bf16.msra.mxu0 0
      %823 = vmatprep.subr.bf16.mxu0 0
      %824 = vmatpush1.bf16.msra.mxu0 0
      %825 = vmatprep.subr.bf16.mxu0 0
      %826 = vmatpush1.bf16.msra.mxu0 0
      %827 = vmatprep.subr.bf16.mxu0 0
      %828 = vmatpush1.bf16.msra.mxu0 0
      %829 = vmatprep.subr.bf16.mxu0 0
      %830 = vmatpush1.bf16.msra.mxu0 0
      %831 = vmatprep.subr.bf16.mxu0 0
      %832 = vmatpush1.bf16.msra.mxu0 0
      %833 = vmatprep.subr.bf16.mxu0 0
      %834 = vmatpush1.bf16.msra.mxu0 0
      %835 = vmatprep.subr.bf16.mxu0 0
      %836 = vmatpush1.bf16.msra.mxu0 0
      %837 = vmatprep.subr.bf16.mxu0 0
      %838 = vmatpush1.bf16.msra.mxu0 0
      %839 = vmatprep.subr.bf16.mxu0 0
      %840 = vmatpush1.bf16.msra.mxu0 0
      %841 = vmatprep.subr.bf16.mxu0 0
      %842 = vmatpush1.bf16.msra.mxu0 0
      %843 = vmatprep.subr.bf16.mxu0 0
      %844 = vmatpush1.bf16.msra.mxu0 0
      %845 = vmatprep.subr.bf16.mxu0 0
      %846 = vmatpush1.bf16.msra.mxu0 0
      %847 = vmatprep.mubr.bf16.mxu0 0
      %848 = vmatmul.mubr.bf16.gmra.mrb[0].mxu0 %v794
      %v849 = vpop.f32.mrb[0].mxu0
      %v850 = vadd.f32 0.0, %v849
      %v851 = vpop.f32.mrb[0].mxu0
      %v852 = vadd.f32 0.0, %v851
      %v853 = vpop.f32.mrb[0].mxu0
      %v854 = vadd.f32 0.0, %v853
      %v855 = vpop.f32.mrb[0].mxu0
      %v856 = vadd.f32 0.0, %v855
      %857 = vdwg.mxu0
      %858 = vmatprep.subr.bf16.mxu0 %v807
      %859 = vmatpush1.bf16.msra.mxu0 %v804
      %860 = vmatprep.subr.bf16.mxu0 0
      %861 = vmatpush1.bf16.msra.mxu0 0
      %862 = vmatprep.subr.bf16.mxu0 0
      %863 = vmatpush1.bf16.msra.mxu0 0
      %864 = vmatprep.subr.bf16.mxu0 0
      %865 = vmatpush1.bf16.msra.mxu0 0
      %866 = vmatprep.subr.bf16.mxu0 0
      %867 = vmatpush1.bf16.msra.mxu0 0
      %868 = vmatprep.subr.bf16.mxu0 0
      %869 = vmatpush1.bf16.msra.mxu0 0
      %870 = vmatprep.subr.bf16.mxu0 0
      %871 = vmatpush1.bf16.msra.mxu0 0
      %872 = vmatprep.subr.bf16.mxu0 0
      %873 = vmatpush1.bf16.msra.mxu0 0
      %874 = vmatprep.subr.bf16.mxu0 0
      %875 = vmatpush1.bf16.msra.mxu0 0
      %876 = vmatprep.subr.bf16.mxu0 0
      %877 = vmatpush1.bf16.msra.mxu0 0
      %878 = vmatprep.subr.bf16.mxu0 0
      %879 = vmatpush1.bf16.msra.mxu0 0
      %880 = vmatprep.subr.bf16.mxu0 0
      %881 = vmatpush1.bf16.msra.mxu0 0
      %882 = vmatprep.subr.bf16.mxu0 0
      %883 = vmatpush1.bf16.msra.mxu0 0
      %884 = vmatprep.subr.bf16.mxu0 0
      %885 = vmatpush1.bf16.msra.mxu0 0
      %886 = vmatprep.subr.bf16.mxu0 0
      %887 = vmatpush1.bf16.msra.mxu0 0
      %888 = vmatprep.subr.bf16.mxu0 0
      %889 = vmatpush1.bf16.msra.mxu0 0
      %890 = vmatprep.mubr.bf16.mxu0 0
      %891 = vmatmul.mubr.bf16.gmra.mrb[0].mxu0 %v794
      %v892 = vpop.f32.mrb[0].mxu0
      %v893 = vadd.f32 0.0, %v892
      %v894 = vpop.f32.mrb[0].mxu0
      %v895 = vadd.f32 0.0, %v894
      %v896 = vpop.f32.mrb[0].mxu0
      %v897 = vadd.f32 0.0, %v896
      %v898 = vpop.f32.mrb[0].mxu0
      %v899 = vadd.f32 0.0, %v898
      %900 = vdwg.mxu0
      %901 = vmatprep.subr.bf16.mxu0 %v813
      %902 = vmatpush1.bf16.msra.mxu0 %v810
      %903 = vmatprep.subr.bf16.mxu0 0
      %904 = vmatpush1.bf16.msra.mxu0 0
      %905 = vmatprep.subr.bf16.mxu0 0
      %906 = vmatpush1.bf16.msra.mxu0 0
      %907 = vmatprep.subr.bf16.mxu0 0
      %908 = vmatpush1.bf16.msra.mxu0 0
      %909 = vmatprep.subr.bf16.mxu0 0
      %910 = vmatpush1.bf16.msra.mxu0 0
      %911 = vmatprep.subr.bf16.mxu0 0
      %912 = vmatpush1.bf16.msra.mxu0 0
      %913 = vmatprep.subr.bf16.mxu0 0
      %914 = vmatpush1.bf16.msra.mxu0 0
      %915 = vmatprep.subr.bf16.mxu0 0
      %916 = vmatpush1.bf16.msra.mxu0 0
      %917 = vmatprep.subr.bf16.mxu0 0
      %918 = vmatpush1.bf16.msra.mxu0 0
      %919 = vmatprep.subr.bf16.mxu0 0
      %920 = vmatpush1.bf16.msra.mxu0 0
      %921 = vmatprep.subr.bf16.mxu0 0
      %922 = vmatpush1.bf16.msra.mxu0 0
      %923 = vmatprep.subr.bf16.mxu0 0
      %924 = vmatpush1.bf16.msra.mxu0 0
      %925 = vmatprep.subr.bf16.mxu0 0
      %926 = vmatpush1.bf16.msra.mxu0 0
      %927 = vmatprep.subr.bf16.mxu0 0
      %928 = vmatpush1.bf16.msra.mxu0 0
      %929 = vmatprep.subr.bf16.mxu0 0
      %930 = vmatpush1.bf16.msra.mxu0 0
      %931 = vmatprep.subr.bf16.mxu0 0
      %932 = vmatpush1.bf16.msra.mxu0 0
      %933 = vmatprep.mubr.bf16.mxu0 0
      %934 = vmatmul.mubr.bf16.gmra.mrb[0].mxu0 %v794
      %v935 = vpop.f32.mrb[0].mxu0
      %v936 = vadd.f32 0.0, %v935
      %v937 = vpop.f32.mrb[0].mxu0
      %v938 = vadd.f32 0.0, %v937
      %v939 = vpop.f32.mrb[0].mxu0
      %v940 = vadd.f32 0.0, %v939
      %v941 = vpop.f32.mrb[0].mxu0
      %v942 = vadd.f32 0.0, %v941
      %943 = vdwg.mxu0
      %v944 = vld [vmem:[%s4] sm:$0xff]
      %v945 = vld [vmem:[%s4 + $0x8] sm:$0xff]
      %v946 = vld [vmem:[%s4 + $0x10] sm:$0xff]
      %v947 = vld [vmem:[%s4 + $0x18] sm:$0xff]
      %v948 = vld [vmem:[%s4 + $0x20] sm:$0xff]
      %v949 = vld [vmem:[%s4 + $0x28] sm:$0xff]
      %v950 = vld [vmem:[%s4 + $0x30] sm:$0xff]
      %v951 = vld [vmem:[%s4 + $0x38] sm:$0xff]
      %v952 = vld [vmem:[%s4 + $0x40] sm:$0xff]
      %v953 = vld [vmem:[%s4 + $0x48] sm:$0xff]
      %v954 = vld [vmem:[%s4 + $0x50] sm:$0xff]
      %v955 = vld [vmem:[%s4 + $0x58] sm:$0xff]
      %v956 = vld [vmem:[%s4 + $0x60] sm:$0xff]
      %v957 = vld [vmem:[%s4 + $0x68] sm:$0xff]
      %v958 = vld [vmem:[%s4 + $0x70] sm:$0xff]
      %v959 = vld [vmem:[%s4 + $0x78] sm:$0xff]
      %v976 = vunpack.c.l.b16 %v944
      %v977 = vunpack.c.h.b16 %v944
      %v978 = vunpack.c.l.b16 %v945
      %v979 = vunpack.c.h.b16 %v945
      %v980 = vunpack.c.l.b16 %v946
      %v981 = vunpack.c.h.b16 %v946
      %v982 = vunpack.c.l.b16 %v947
      %v983 = vunpack.c.h.b16 %v947
      %v984 = vunpack.c.l.b16 %v948
      %v985 = vunpack.c.h.b16 %v948
      %v986 = vunpack.c.l.b16 %v949
      %v987 = vunpack.c.h.b16 %v949
      %v988 = vunpack.c.l.b16 %v950
      %v989 = vunpack.c.h.b16 %v950
      %v990 = vunpack.c.l.b16 %v951
      %v991 = vunpack.c.h.b16 %v951
      %v992 = vunpack.c.l.b16 %v952
      %v993 = vunpack.c.h.b16 %v952
      %v994 = vunpack.c.l.b16 %v953
      %v995 = vunpack.c.h.b16 %v953
      %v996 = vunpack.c.l.b16 %v954
      %v997 = vunpack.c.h.b16 %v954
      %v998 = vunpack.c.l.b16 %v955
      %v999 = vunpack.c.h.b16 %v955
      %v1000 = vunpack.c.l.b16 %v956
      %v1001 = vunpack.c.h.b16 %v956
      %v1002 = vunpack.c.l.b16 %v957
      %v1003 = vunpack.c.h.b16 %v957
      %v1004 = vunpack.c.l.b16 %v958
      %v1005 = vunpack.c.h.b16 %v958
      %v1006 = vunpack.c.l.b16 %v959
      %v1007 = vunpack.c.h.b16 %v959
      %v1008 = vpack.c.b16 %v980, %v976
      %v1009 = vpack.c.b16 %v981, %v977
      %v1010 = vpack.c.b16 %v982, %v978
      %v1011 = vpack.c.b16 %v983, %v979
      %v1012 = vpack.c.b16 %v988, %v984
      %v1013 = vpack.c.b16 %v989, %v985
      %v1014 = vpack.c.b16 %v990, %v986
      %v1015 = vpack.c.b16 %v991, %v987
      %v1016 = vpack.c.b16 %v996, %v992
      %v1017 = vpack.c.b16 %v997, %v993
      %v1018 = vpack.c.b16 %v998, %v994
      %v1019 = vpack.c.b16 %v999, %v995
      %v1020 = vpack.c.b16 %v1004, %v1000
      %v1021 = vpack.c.b16 %v1005, %v1001
      %v1022 = vpack.c.b16 %v1006, %v1002
      %v1023 = vpack.c.b16 %v1007, %v1003
      %vm1040 = vcmask 523264
      %v1041 = vsel %vm1040, %v763, 0
      %1043 = vmatprep.subr.bf16.mxu0 %v1009
      %1044 = vmatpush1.bf16.msra.mxu0 %v1008
      %1045 = vmatprep.subr.bf16.mxu0 %v1013
      %1046 = vmatpush1.bf16.msra.mxu0 %v1012
      %1047 = vmatprep.subr.bf16.mxu0 %v1017
      %1048 = vmatpush1.bf16.msra.mxu0 %v1016
      %1049 = vmatprep.subr.bf16.mxu0 %v1021
      %1050 = vmatpush1.bf16.msra.mxu0 %v1020
      %1051 = vmatprep.subr.bf16.mxu0 0
      %1052 = vmatpush1.bf16.msra.mxu0 0
      %1053 = vmatprep.subr.bf16.mxu0 0
      %1054 = vmatpush1.bf16.msra.mxu0 0
      %1055 = vmatprep.subr.bf16.mxu0 0
      %1056 = vmatpush1.bf16.msra.mxu0 0
      %1057 = vmatprep.subr.bf16.mxu0 0
      %1058 = vmatpush1.bf16.msra.mxu0 0
      %1059 = vmatprep.subr.bf16.mxu0 0
      %1060 = vmatpush1.bf16.msra.mxu0 0
      %1061 = vmatprep.subr.bf16.mxu0 0
      %1062 = vmatpush1.bf16.msra.mxu0 0
      %1063 = vmatprep.subr.bf16.mxu0 0
      %1064 = vmatpush1.bf16.msra.mxu0 0
      %1065 = vmatprep.subr.bf16.mxu0 0
      %1066 = vmatpush1.bf16.msra.mxu0 0
      %1067 = vmatprep.subr.bf16.mxu0 0
      %1068 = vmatpush1.bf16.msra.mxu0 0
      %1069 = vmatprep.subr.bf16.mxu0 0
      %1070 = vmatpush1.bf16.msra.mxu0 0
      %1071 = vmatprep.subr.bf16.mxu0 0
      %1072 = vmatpush1.bf16.msra.mxu0 0
      %1073 = vmatprep.subr.bf16.mxu0 0
      %1074 = vmatpush1.bf16.msra.mxu0 0
      %1075 = vmatprep.mubr.bf16.mxu0 0
      %1076 = vmatmul.mubr.bf16.gmra.mrb[0].mxu0 %v1041
      %v1077 = vpop.f32.mrb[0].mxu0
      %v1078 = vadd.f32 0.0, %v1077
      %v1079 = vpop.f32.mrb[0].mxu0
      %v1080 = vadd.f32 0.0, %v1079
      %v1081 = vpop.f32.mrb[0].mxu0
      %v1082 = vadd.f32 0.0, %v1081
      %v1083 = vpop.f32.mrb[0].mxu0
      %v1084 = vadd.f32 0.0, %v1083
      %1085 = vdwg.mxu0
      %1086 = vmatprep.subr.bf16.mxu0 %v1011
      %1087 = vmatpush1.bf16.msra.mxu0 %v1010
      %1088 = vmatprep.subr.bf16.mxu0 %v1015
      %1089 = vmatpush1.bf16.msra.mxu0 %v1014
      %1090 = vmatprep.subr.bf16.mxu0 %v1019
      %1091 = vmatpush1.bf16.msra.mxu0 %v1018
      %1092 = vmatprep.subr.bf16.mxu0 %v1023
      %1093 = vmatpush1.bf16.msra.mxu0 %v1022
      %1094 = vmatprep.subr.bf16.mxu0 0
      %1095 = vmatpush1.bf16.msra.mxu0 0
      %1096 = vmatprep.subr.bf16.mxu0 0
      %1097 = vmatpush1.bf16.msra.mxu0 0
      %1098 = vmatprep.subr.bf16.mxu0 0
      %1099 = vmatpush1.bf16.msra.mxu0 0
      %1100 = vmatprep.subr.bf16.mxu0 0
      %1101 = vmatpush1.bf16.msra.mxu0 0
      %1102 = vmatprep.subr.bf16.mxu0 0
      %1103 = vmatpush1.bf16.msra.mxu0 0
      %1104 = vmatprep.subr.bf16.mxu0 0
      %1105 = vmatpush1.bf16.msra.mxu0 0
      %1106 = vmatprep.subr.bf16.mxu0 0
      %1107 = vmatpush1.bf16.msra.mxu0 0
      %1108 = vmatprep.subr.bf16.mxu0 0
      %1109 = vmatpush1.bf16.msra.mxu0 0
      %1110 = vmatprep.subr.bf16.mxu0 0
      %1111 = vmatpush1.bf16.msra.mxu0 0
      %1112 = vmatprep.subr.bf16.mxu0 0
      %1113 = vmatpush1.bf16.msra.mxu0 0
      %1114 = vmatprep.subr.bf16.mxu0 0
      %1115 = vmatpush1.bf16.msra.mxu0 0
      %1116 = vmatprep.subr.bf16.mxu0 0
      %1117 = vmatpush1.bf16.msra.mxu0 0
      %1118 = vmatprep.mubr.bf16.mxu0 0
      %1119 = vmatmul.mubr.bf16.gmra.mrb[0].mxu0 %v1041
      %v1120 = vpop.f32.mrb[0].mxu0
      %v1121 = vadd.f32 0.0, %v1120
      %v1122 = vpop.f32.mrb[0].mxu0
      %v1123 = vadd.f32 0.0, %v1122
      %v1124 = vpop.f32.mrb[0].mxu0
      %v1125 = vadd.f32 0.0, %v1124
      %v1126 = vpop.f32.mrb[0].mxu0
      %v1127 = vadd.f32 0.0, %v1126
      %1128 = vdwg.mxu0
      %v1129 = vadd.f32 %v1078, %v850
      %v1130 = vadd.f32 %v1082, %v854
      %1132 = vset.pattern.permute.xlu0 0
      %1133 = vperm.xlu0 %1132, %v621
      %v1134 = vpop.permute.xlu0 %1133
      %1137 = vset.pattern.permute.xlu0 0
      %1138 = vperm.xlu0 %1137, %v622
      %v1139 = vpop.permute.xlu0 %1138
      %v1141 = vmul.f32 %v1134, %v1129
      %v1142 = vmul.f32 %v1139, %v1130
      %v1143 = vadd.f32 %v623, %v1141
      %v1144 = vadd.f32 %v625, %v1142
      %1149 = vrot.lane.b32.xlu0 %v850, 96
      %v1150 = vpop.permute.xlu0 %1149
      %1151 = vrot.lane.b32.xlu0 %v852, 96
      %v1152 = vpop.permute.xlu0 %1151
      %1153 = vrot.lane.b32.xlu0 %v854, 96
      %v1154 = vpop.permute.xlu0 %1153
      %1155 = vrot.lane.b32.xlu0 %v856, 96
      %v1156 = vpop.permute.xlu0 %1155
      %vm1157 = vcmask 785408
      %v1158 = vsel %vm1157, %v1150, %v1152
      %v1159 = vsel %vm1157, %v1154, %v1156
      %v1162 = vadd.f32 %v1078, %v1158
      %v1163 = vadd.f32 %v1082, %v1159
      %1164 = vset.pattern.permute.xlu0 1
      %1165 = vperm.xlu0 %1164, %v621
      %v1166 = vpop.permute.xlu0 %1165
      %1168 = vset.pattern.permute.xlu0 1
      %1169 = vperm.xlu0 %1168, %v622
      %v1170 = vpop.permute.xlu0 %1169
      %v1172 = vmul.f32 %v1166, %v1162
      %v1173 = vmul.f32 %v1170, %v1163
      %1176 = vrot.lane.b32.xlu0 %v1172, 64
      %v1177 = vpop.permute.xlu0 %1176
      %1178 = vrot.lane.b32.xlu0 %v1173, 64
      %v1179 = vpop.permute.xlu0 %1178
      %v1182 = vadd.f32 %v1143, %v1177
      %v1183 = vadd.f32 %v1144, %v1179
      %1184 = vrot.lane.b32.xlu0 %v852, 64
      %v1185 = vpop.permute.xlu0 %1184
      %1186 = vrot.lane.b32.xlu0 %v856, 64
      %v1187 = vpop.permute.xlu0 %1186
      %v1190 = vadd.f32 %v1080, %v1185
      %v1191 = vadd.f32 %v1084, %v1187
      %1192 = vset.pattern.permute.xlu0 2
      %1193 = vperm.xlu0 %1192, %v621
      %v1194 = vpop.permute.xlu0 %1193
      %1196 = vset.pattern.permute.xlu0 2
      %1197 = vperm.xlu0 %1196, %v622
      %v1198 = vpop.permute.xlu0 %1197
      %v1200 = vmul.f32 %v1194, %v1190
      %v1201 = vmul.f32 %v1198, %v1191
      %v1202 = vadd.f32 %v1182, %v1200
      %v1203 = vadd.f32 %v1183, %v1201
      %1206 = vrot.lane.b32.xlu0 %v893, 32
      %v1207 = vpop.permute.xlu0 %1206
      %1208 = vrot.lane.b32.xlu0 %v897, 32
      %v1209 = vpop.permute.xlu0 %1208
      %v1212 = vadd.f32 %v1080, %v1207
      %v1213 = vadd.f32 %v1084, %v1209
      %1214 = vset.pattern.permute.xlu0 3
      %1215 = vperm.xlu0 %1214, %v621
      %v1216 = vpop.permute.xlu0 %1215
      %1218 = vset.pattern.permute.xlu0 3
      %1219 = vperm.xlu0 %1218, %v622
      %v1220 = vpop.permute.xlu0 %1219
      %v1222 = vmul.f32 %v1216, %v1212
      %v1223 = vmul.f32 %v1220, %v1213
      %1226 = vrot.lane.b32.xlu0 %v1222, 64
      %v1227 = vpop.permute.xlu0 %1226
      %1228 = vrot.lane.b32.xlu0 %v1223, 64
      %v1229 = vpop.permute.xlu0 %1228
      %v1232 = vadd.f32 %v1202, %v1227
      %v1233 = vadd.f32 %v1203, %v1229
      %v1234 = vadd.f32 %v1121, %v895
      %v1235 = vadd.f32 %v1125, %v899
      %1236 = vset.pattern.permute.xlu0 4
      %1237 = vperm.xlu0 %1236, %v621
      %v1238 = vpop.permute.xlu0 %1237
      %1240 = vset.pattern.permute.xlu0 4
      %1241 = vperm.xlu0 %1240, %v622
      %v1242 = vpop.permute.xlu0 %1241
      %v1244 = vmul.f32 %v1238, %v1234
      %v1245 = vmul.f32 %v1242, %v1235
      %v1246 = vadd.f32 %v1232, %v1244
      %v1247 = vadd.f32 %v1233, %v1245
      %1252 = vrot.lane.b32.xlu0 %v895, 96
      %v1253 = vpop.permute.xlu0 %1252
      %1254 = vrot.lane.b32.xlu0 %v936, 96
      %v1255 = vpop.permute.xlu0 %1254
      %1256 = vrot.lane.b32.xlu0 %v899, 96
      %v1257 = vpop.permute.xlu0 %1256
      %1258 = vrot.lane.b32.xlu0 %v940, 96
      %v1259 = vpop.permute.xlu0 %1258
      %v1260 = vsel %vm1157, %v1253, %v1255
      %v1261 = vsel %vm1157, %v1257, %v1259
      %v1264 = vadd.f32 %v1121, %v1260
      %v1265 = vadd.f32 %v1125, %v1261
      %1266 = vset.pattern.permute.xlu0 5
      %1267 = vperm.xlu0 %1266, %v621
      %v1268 = vpop.permute.xlu0 %1267
      %1270 = vset.pattern.permute.xlu0 5
      %1271 = vperm.xlu0 %1270, %v622
      %v1272 = vpop.permute.xlu0 %1271
      %v1274 = vmul.f32 %v1268, %v1264
      %v1275 = vmul.f32 %v1272, %v1265
      %1278 = vrot.lane.b32.xlu0 %v1274, 64
      %v1279 = vpop.permute.xlu0 %1278
      %1280 = vrot.lane.b32.xlu0 %v1275, 64
      %v1281 = vpop.permute.xlu0 %1280
      %v1284 = vadd.f32 %v1246, %v1279
      %v1285 = vadd.f32 %v1247, %v1281
      %1286 = vrot.lane.b32.xlu0 %v936, 64
      %v1287 = vpop.permute.xlu0 %1286
      %1288 = vrot.lane.b32.xlu0 %v940, 64
      %v1289 = vpop.permute.xlu0 %1288
      %v1292 = vadd.f32 %v1123, %v1287
      %v1293 = vadd.f32 %v1127, %v1289
      %1294 = vset.pattern.permute.xlu0 6
      %1295 = vperm.xlu0 %1294, %v621
      %v1296 = vpop.permute.xlu0 %1295
      %1298 = vset.pattern.permute.xlu0 6
      %1299 = vperm.xlu0 %1298, %v622
      %v1300 = vpop.permute.xlu0 %1299
      %v1302 = vmul.f32 %v1296, %v1292
      %v1303 = vmul.f32 %v1300, %v1293
      %v1304 = vadd.f32 %v1284, %v1302
      %v1305 = vadd.f32 %v1285, %v1303
      %1308 = vrot.lane.b32.xlu0 %v938, 32
      %v1309 = vpop.permute.xlu0 %1308
      %1310 = vrot.lane.b32.xlu0 %v942, 32
      %v1311 = vpop.permute.xlu0 %1310
      %v1314 = vadd.f32 %v1123, %v1309
      %v1315 = vadd.f32 %v1127, %v1311
      %1316 = vset.pattern.permute.xlu0 7
      %1317 = vperm.xlu0 %1316, %v621
      %v1318 = vpop.permute.xlu0 %1317
      %1320 = vset.pattern.permute.xlu0 7
      %1321 = vperm.xlu0 %1320, %v622
      %v1322 = vpop.permute.xlu0 %1321
      %v1324 = vmul.f32 %v1318, %v1314
      %v1325 = vmul.f32 %v1322, %v1315
      %1328 = vrot.lane.b32.xlu0 %v1324, 64
      %v1329 = vpop.permute.xlu0 %1328
      %1330 = vrot.lane.b32.xlu0 %v1325, 64
      %v1331 = vpop.permute.xlu0 %1330
      %v1334 = vadd.f32 %v1304, %v1329
      %v1335 = vadd.f32 %v1305, %v1331
      %v1336 = vxor.u32 %v1334, 2147483648
      %v1337 = vxor.u32 %v1335, 2147483648
      %v1338 = vmul.f32 %v1336, 1.442695
      %v1339 = vpow.pop %v1338
      %v1340 = vmul.f32 %v1337, 1.442695
      %v1341 = vpow.pop %v1340
      %v1342 = vadd.f32 %v1339, 1.0
      %v1343 = vadd.f32 %v1341, 1.0
      %v1344 = vrcp.pop %v1342
      %v1345 = vmul.f32 1.0, %v1344
      %v1346 = vrcp.pop %v1343
      %v1347 = vmul.f32 1.0, %v1346
      %v1348 = vmul.f32 %v1345, %v632
      %v1349 = vmul.f32 %v1347, %v633
      %v1350 = vpack.c.bf16 %v1349, %v1348
      %1351 = vmatprep.subr.bf16.mxu0 0
      %1352 = vmatpush1.bf16.msra.mxu0 %v1350
      %1353 = vmatprep.subr.bf16.mxu0 0
      %1354 = vmatpush1.bf16.msra.mxu0 0
      %1355 = vmatprep.subr.bf16.mxu0 0
      %1356 = vmatpush1.bf16.msra.mxu0 0
      %1357 = vmatprep.subr.bf16.mxu0 0
      %1358 = vmatpush1.bf16.msra.mxu0 0
      %1359 = vmatprep.subr.bf16.mxu0 0
      %1360 = vmatpush1.bf16.msra.mxu0 0
      %1361 = vmatprep.subr.bf16.mxu0 0
      %1362 = vmatpush1.bf16.msra.mxu0 0
      %1363 = vmatprep.subr.bf16.mxu0 0
      %1364 = vmatpush1.bf16.msra.mxu0 0
      %1365 = vmatprep.subr.bf16.mxu0 0
      %1366 = vmatpush1.bf16.msra.mxu0 0
      %1367 = vmatprep.subr.bf16.mxu0 0
      %1368 = vmatpush1.bf16.msra.mxu0 0
      %1369 = vmatprep.subr.bf16.mxu0 0
      %1370 = vmatpush1.bf16.msra.mxu0 0
      %1371 = vmatprep.subr.bf16.mxu0 0
      %1372 = vmatpush1.bf16.msra.mxu0 0
      %1373 = vmatprep.subr.bf16.mxu0 0
      %1374 = vmatpush1.bf16.msra.mxu0 0
      %1375 = vmatprep.subr.bf16.mxu0 0
      %1376 = vmatpush1.bf16.msra.mxu0 0
      %1377 = vmatprep.subr.bf16.mxu0 0
      %1378 = vmatpush1.bf16.msra.mxu0 0
      %1379 = vmatprep.subr.bf16.mxu0 0
      %1380 = vmatpush1.bf16.msra.mxu0 0
      %1381 = vmatprep.subr.bf16.mxu0 0
      %1382 = vmatpush1.bf16.msra.mxu0 0
      %1383 = vmatprep.mubr.bf16.mxu0 0
      %1384 = vmatmul.mubr.bf16.gmra.mrb[0].mxu0 %v642
      %v1385 = vpop.f32.mrb[0].mxu0
      %v1386 = vadd.f32 0.0, %v1385
      %v1387 = vpop.f32.mrb[0].mxu0
      %v1388 = vpop.f32.mrb[0].mxu0
      %v1389 = vadd.f32 0.0, %v1388
      %v1390 = vpop.f32.mrb[0].mxu0
      %1391 = vmatprep.mubr.bf16.mxu0 0
      %1392 = vmatmul.mubr.bf16.gmra.mrb[0].mxu0 %v645
      %v1393 = vpop.f32.mrb[0].mxu0
      %v1394 = vadd.f32 0.0, %v1393
      %v1395 = vpop.f32.mrb[0].mxu0
      %v1396 = vpop.f32.mrb[0].mxu0
      %v1397 = vadd.f32 0.0, %v1396
      %v1398 = vpop.f32.mrb[0].mxu0
      %1399 = vdwg.mxu0
      %v1400 = vpack.c.bf16 %v1389, %v1386
      %v1401 = vpack.c.bf16 %v1397, %v1394
      %1403 = vrot.lane.b32.xlu0 %v1401, 32
      %v1404 = vpop.permute.xlu0 %1403
      %v1407 = vsel %vm760, %v1400, %v1404
      %v1408 = vld [vmem:[%s5] sm:$0xff]
      %v1409 = vld [vmem:[%s5 + $0x8] sm:$0xff]
      %v1410 = vld [vmem:[%s5 + $0x10] sm:$0xff]
      %v1411 = vld [vmem:[%s5 + $0x18] sm:$0xff]
      %v1412 = vld [vmem:[%s5 + $0x20] sm:$0xff]
      %v1413 = vld [vmem:[%s5 + $0x28] sm:$0xff]
      %v1414 = vld [vmem:[%s5 + $0x30] sm:$0xff]
      %v1415 = vld [vmem:[%s5 + $0x38] sm:$0xff]
      %v1424 = vunpack.c.l.b16 %v1408
      %v1425 = vunpack.c.h.b16 %v1408
      %v1426 = vunpack.c.l.b16 %v1409
      %v1427 = vunpack.c.h.b16 %v1409
      %v1428 = vunpack.c.l.b16 %v1410
      %v1429 = vunpack.c.h.b16 %v1410
      %v1430 = vunpack.c.l.b16 %v1411
      %v1431 = vunpack.c.h.b16 %v1411
      %v1432 = vunpack.c.l.b16 %v1412
      %v1433 = vunpack.c.h.b16 %v1412
      %v1434 = vunpack.c.l.b16 %v1413
      %v1435 = vunpack.c.h.b16 %v1413
      %v1436 = vunpack.c.l.b16 %v1414
      %v1437 = vunpack.c.h.b16 %v1414
      %v1438 = vunpack.c.l.b16 %v1415
      %v1439 = vunpack.c.h.b16 %v1415
      %v1440 = vpack.c.b16 %v1426, %v1424
      %v1441 = vpack.c.b16 %v1427, %v1425
      %v1442 = vpack.c.b16 %v1430, %v1428
      %v1443 = vpack.c.b16 %v1431, %v1429
      %v1444 = vpack.c.b16 %v1434, %v1432
      %v1445 = vpack.c.b16 %v1435, %v1433
      %v1446 = vpack.c.b16 %v1438, %v1436
      %v1447 = vpack.c.b16 %v1439, %v1437
      %v1456 = vsel %vm1040, %v1407, 0
      %1458 = vmatprep.subr.bf16.mxu0 %v1441
      %1459 = vmatpush1.bf16.msra.mxu0 %v1440
      %1460 = vmatprep.subr.bf16.mxu0 %v1443
      %1461 = vmatpush1.bf16.msra.mxu0 %v1442
      %1462 = vmatprep.subr.bf16.mxu0 %v1445
      %1463 = vmatpush1.bf16.msra.mxu0 %v1444
      %1464 = vmatprep.subr.bf16.mxu0 %v1447
      %1465 = vmatpush1.bf16.msra.mxu0 %v1446
      %1466 = vmatprep.subr.bf16.mxu0 0
      %1467 = vmatpush1.bf16.msra.mxu0 0
      %1468 = vmatprep.subr.bf16.mxu0 0
      %1469 = vmatpush1.bf16.msra.mxu0 0
      %1470 = vmatprep.subr.bf16.mxu0 0
      %1471 = vmatpush1.bf16.msra.mxu0 0
      %1472 = vmatprep.subr.bf16.mxu0 0
      %1473 = vmatpush1.bf16.msra.mxu0 0
      %1474 = vmatprep.subr.bf16.mxu0 0
      %1475 = vmatpush1.bf16.msra.mxu0 0
      %1476 = vmatprep.subr.bf16.mxu0 0
      %1477 = vmatpush1.bf16.msra.mxu0 0
      %1478 = vmatprep.subr.bf16.mxu0 0
      %1479 = vmatpush1.bf16.msra.mxu0 0
      %1480 = vmatprep.subr.bf16.mxu0 0
      %1481 = vmatpush1.bf16.msra.mxu0 0
      %1482 = vmatprep.subr.bf16.mxu0 0
      %1483 = vmatpush1.bf16.msra.mxu0 0
      %1484 = vmatprep.subr.bf16.mxu0 0
      %1485 = vmatpush1.bf16.msra.mxu0 0
      %1486 = vmatprep.subr.bf16.mxu0 0
      %1487 = vmatpush1.bf16.msra.mxu0 0
      %1488 = vmatprep.subr.bf16.mxu0 0
      %1489 = vmatpush1.bf16.msra.mxu0 0
      %1490 = vmatprep.mubr.bf16.mxu0 0
      %1491 = vmatmul.mubr.bf16.gmra.mrb[0].mxu0 %v1456
      %v1492 = vpop.f32.mrb[0].mxu0
      %v1493 = vadd.f32 0.0, %v1492
      %v1494 = vpop.f32.mrb[0].mxu0
      %v1495 = vadd.f32 0.0, %v1494
      %v1496 = vpop.f32.mrb[0].mxu0
      %v1497 = vadd.f32 0.0, %v1496
      %v1498 = vpop.f32.mrb[0].mxu0
      %v1499 = vadd.f32 0.0, %v1498
      %1500 = vdwg.mxu0
      %1501 = vrot.lane.b32.xlu0 %v850, 64
      %v1502 = vpop.permute.xlu0 %1501
      %1503 = vrot.lane.b32.xlu0 %v854, 64
      %v1504 = vpop.permute.xlu0 %1503
      %v1507 = vadd.f32 %v1493, %v1502
      %v1508 = vadd.f32 %v1497, %v1504
      %v1509 = vmul.f32 %v1134, %v1507
      %v1510 = vmul.f32 %v1139, %v1508
      %1513 = vrot.lane.b32.xlu0 %v1509, 64
      %v1514 = vpop.permute.xlu0 %1513
      %1515 = vrot.lane.b32.xlu0 %v1510, 64
      %v1516 = vpop.permute.xlu0 %1515
      %v1519 = vadd.f32 %v623, %v1514
      %v1520 = vadd.f32 %v625, %v1516
      %v1521 = vadd.f32 %v1493, %v852
      %v1522 = vadd.f32 %v1497, %v856
      %v1523 = vmul.f32 %v1166, %v1521
      %v1524 = vmul.f32 %v1170, %v1522
      %1527 = vrot.lane.b32.xlu0 %v1523, 32
      %v1528 = vpop.permute.xlu0 %1527
      %1529 = vrot.lane.b32.xlu0 %v1524, 32
      %v1530 = vpop.permute.xlu0 %1529
      %v1533 = vadd.f32 %v1519, %v1528
      %v1534 = vadd.f32 %v1520, %v1530
      %1535 = vrot.lane.b32.xlu0 %v893, 64
      %v1536 = vpop.permute.xlu0 %1535
      %1537 = vrot.lane.b32.xlu0 %v897, 64
      %v1538 = vpop.permute.xlu0 %1537
      %v1541 = vadd.f32 %v1493, %v1536
      %v1542 = vadd.f32 %v1497, %v1538
      %v1543 = vmul.f32 %v1194, %v1541
      %v1544 = vmul.f32 %v1198, %v1542
      %v1545 = vadd.f32 %v1533, %v1543
      %v1546 = vadd.f32 %v1534, %v1544
      %v1547 = vadd.f32 %v1493, %v893
      %v1548 = vadd.f32 %v1497, %v897
      %v1549 = vmul.f32 %v1216, %v1547
      %v1550 = vmul.f32 %v1220, %v1548
      %1553 = vrot.lane.b32.xlu0 %v1549, 96
      %v1554 = vpop.permute.xlu0 %1553
      %1555 = vrot.lane.b32.xlu0 %v1550, 96
      %v1556 = vpop.permute.xlu0 %1555
      %v1559 = vadd.f32 %v1545, %v1554
      %v1560 = vadd.f32 %v1546, %v1556
      %1561 = vrot.lane.b32.xlu0 %v895, 64
      %v1562 = vpop.permute.xlu0 %1561
      %1563 = vrot.lane.b32.xlu0 %v899, 64
      %v1564 = vpop.permute.xlu0 %1563
      %v1567 = vadd.f32 %v1495, %v1562
      %v1568 = vadd.f32 %v1499, %v1564
      %v1569 = vmul.f32 %v1238, %v1567
      %v1570 = vmul.f32 %v1242, %v1568
      %1573 = vrot.lane.b32.xlu0 %v1569, 64
      %v1574 = vpop.permute.xlu0 %1573
      %1575 = vrot.lane.b32.xlu0 %v1570, 64
      %v1576 = vpop.permute.xlu0 %1575
      %v1579 = vadd.f32 %v1559, %v1574
      %v1580 = vadd.f32 %v1560, %v1576
      %v1581 = vadd.f32 %v1495, %v936
      %v1582 = vadd.f32 %v1499, %v940
      %v1583 = vmul.f32 %v1268, %v1581
      %v1584 = vmul.f32 %v1272, %v1582
      %1587 = vrot.lane.b32.xlu0 %v1583, 32
      %v1588 = vpop.permute.xlu0 %1587
      %1589 = vrot.lane.b32.xlu0 %v1584, 32
      %v1590 = vpop.permute.xlu0 %1589
      %v1593 = vadd.f32 %v1579, %v1588
      %v1594 = vadd.f32 %v1580, %v1590
      %1595 = vrot.lane.b32.xlu0 %v938, 64
      %v1596 = vpop.permute.xlu0 %1595
      %1597 = vrot.lane.b32.xlu0 %v942, 64
      %v1598 = vpop.permute.xlu0 %1597
      %v1601 = vadd.f32 %v1495, %v1596
      %v1602 = vadd.f32 %v1499, %v1598
      %v1603 = vmul.f32 %v1296, %v1601
      %v1604 = vmul.f32 %v1300, %v1602
      %v1605 = vadd.f32 %v1593, %v1603
      %v1606 = vadd.f32 %v1594, %v1604
      %v1607 = vadd.f32 %v1495, %v938
      %v1608 = vadd.f32 %v1499, %v942
      %v1609 = vmul.f32 %v1318, %v1607
      %v1610 = vmul.f32 %v1322, %v1608
      %1613 = vrot.lane.b32.xlu0 %v1609, 96
      %v1614 = vpop.permute.xlu0 %1613
      %1615 = vrot.lane.b32.xlu0 %v1610, 96
      %v1616 = vpop.permute.xlu0 %1615
      %v1619 = vadd.f32 %v1605, %v1614
      %v1620 = vadd.f32 %v1606, %v1616
      %v1621 = vtanh.pop %v1619
      %v1622 = vtanh.pop %v1620
      %1625 = vrot.lane.b32.xlu0 %v632, 32
      %v1626 = vpop.permute.xlu0 %1625
      %1627 = vrot.lane.b32.xlu0 %v633, 32
      %v1628 = vpop.permute.xlu0 %1627
      %v1631 = vmul.f32 %v1345, %v1626
      %v1632 = vmul.f32 %v1347, %v1628
      %v1633 = vsub.f32 1.0, %v1345
      %v1634 = vsub.f32 1.0, %v1347
      %1637 = vrot.lane.b32.xlu0 %v1621, 96
      %v1638 = vpop.permute.xlu0 %1637
      %1639 = vrot.lane.b32.xlu0 %v1622, 96
      %v1640 = vpop.permute.xlu0 %1639
      %v1643 = vmul.f32 %v1633, %v1638
      %v1644 = vmul.f32 %v1634, %v1640
      %v1645 = vadd.f32 %v1631, %v1643
      %v1646 = vadd.f32 %v1632, %v1644
      %1649 = vrot.lane.b32.xlu0 %v1645, 96
      %v1650 = vpop.permute.xlu0 %1649
      %1651 = vrot.lane.b32.xlu0 %v1646, 96
      %v1652 = vpop.permute.xlu0 %1651
      %1655 = vst.msk [vmem:[#allocation5] sm:$0xff] %vm760, %v1650
      %1656 = vst.msk [vmem:[#allocation5 + $0x8] sm:$0xff] %vm760, %v1652
      %v1657 = vpack.c.bf16 %v1646, %v1645
      %v1658 = vld [vmem:[#allocation6] sm:$0xff]
      %v1659 = vld [vmem:[#allocation6 + $0x8] sm:$0xff]
      %1661 = vrot.lane.b32.xlu0 %v1657, 96
      %v1662 = vpop.permute.xlu0 %1661
      %1664 = vmatprep.subr.bf16.mxu0 0
      %1665 = vmatpush1.bf16.msra.mxu0 %v1662
      %1666 = vmatprep.subr.bf16.mxu0 0
      %1667 = vmatpush1.bf16.msra.mxu0 0
      %1668 = vmatprep.subr.bf16.mxu0 0
      %1669 = vmatpush1.bf16.msra.mxu0 0
      %1670 = vmatprep.subr.bf16.mxu0 0
      %1671 = vmatpush1.bf16.msra.mxu0 0
      %1672 = vmatprep.subr.bf16.mxu0 0
      %1673 = vmatpush1.bf16.msra.mxu0 0
      %1674 = vmatprep.subr.bf16.mxu0 0
      %1675 = vmatpush1.bf16.msra.mxu0 0
      %1676 = vmatprep.subr.bf16.mxu0 0
      %1677 = vmatpush1.bf16.msra.mxu0 0
      %1678 = vmatprep.subr.bf16.mxu0 0
      %1679 = vmatpush1.bf16.msra.mxu0 0
      %1680 = vmatprep.subr.bf16.mxu0 0
      %1681 = vmatpush1.bf16.msra.mxu0 0
      %1682 = vmatprep.subr.bf16.mxu0 0
      %1683 = vmatpush1.bf16.msra.mxu0 0
      %1684 = vmatprep.subr.bf16.mxu0 0
      %1685 = vmatpush1.bf16.msra.mxu0 0
      %1686 = vmatprep.subr.bf16.mxu0 0
      %1687 = vmatpush1.bf16.msra.mxu0 0
      %1688 = vmatprep.subr.bf16.mxu0 0
      %1689 = vmatpush1.bf16.msra.mxu0 0
      %1690 = vmatprep.subr.bf16.mxu0 0
      %1691 = vmatpush1.bf16.msra.mxu0 0
      %1692 = vmatprep.subr.bf16.mxu0 0
      %1693 = vmatpush1.bf16.msra.mxu0 0
      %1694 = vmatprep.subr.bf16.mxu0 0
      %1695 = vmatpush1.bf16.msra.mxu0 0
      %1696 = vmatprep.mubr.bf16.mxu0 0
      %1697 = vmatmul.mubr.bf16.gmra.mrb[0].mxu0 %v642
      %v1698 = vpop.f32.mrb[0].mxu0
      %v1699 = vadd.f32 0.0, %v1698
      %v1700 = vpop.f32.mrb[0].mxu0
      %v1701 = vpop.f32.mrb[0].mxu0
      %v1702 = vadd.f32 0.0, %v1701
      %v1703 = vpop.f32.mrb[0].mxu0
      %1704 = vmatprep.mubr.bf16.mxu0 0
      %1705 = vmatmul.mubr.bf16.gmra.mrb[0].mxu0 %v645
      %v1706 = vpop.f32.mrb[0].mxu0
      %v1707 = vadd.f32 0.0, %v1706
      %v1708 = vpop.f32.mrb[0].mxu0
      %v1709 = vpop.f32.mrb[0].mxu0
      %v1710 = vadd.f32 0.0, %v1709
      %v1711 = vpop.f32.mrb[0].mxu0
      %1712 = vdwg.mxu0
      %v1713 = vpack.c.bf16 %v1702, %v1699
      %v1714 = vpack.c.bf16 %v1710, %v1707
      %v1715 = vpack.c.bf16 %v1659, %v1658
      %1716 = vmatprep.subr.bf16.mxu0 0
      %1717 = vmatpush1.bf16.msra.mxu0 %v1715
      %1718 = vmatprep.subr.bf16.mxu0 0
      %1719 = vmatpush1.bf16.msra.mxu0 0
      %1720 = vmatprep.subr.bf16.mxu0 0
      %1721 = vmatpush1.bf16.msra.mxu0 0
      %1722 = vmatprep.subr.bf16.mxu0 0
      %1723 = vmatpush1.bf16.msra.mxu0 0
      %1724 = vmatprep.subr.bf16.mxu0 0
      %1725 = vmatpush1.bf16.msra.mxu0 0
      %1726 = vmatprep.subr.bf16.mxu0 0
      %1727 = vmatpush1.bf16.msra.mxu0 0
      %1728 = vmatprep.subr.bf16.mxu0 0
      %1729 = vmatpush1.bf16.msra.mxu0 0
      %1730 = vmatprep.subr.bf16.mxu0 0
      %1731 = vmatpush1.bf16.msra.mxu0 0
      %1732 = vmatprep.subr.bf16.mxu0 0
      %1733 = vmatpush1.bf16.msra.mxu0 0
      %1734 = vmatprep.subr.bf16.mxu0 0
      %1735 = vmatpush1.bf16.msra.mxu0 0
      %1736 = vmatprep.subr.bf16.mxu0 0
      %1737 = vmatpush1.bf16.msra.mxu0 0
      %1738 = vmatprep.subr.bf16.mxu0 0
      %1739 = vmatpush1.bf16.msra.mxu0 0
      %1740 = vmatprep.subr.bf16.mxu0 0
      %1741 = vmatpush1.bf16.msra.mxu0 0
      %1742 = vmatprep.subr.bf16.mxu0 0
      %1743 = vmatpush1.bf16.msra.mxu0 0
      %1744 = vmatprep.subr.bf16.mxu0 0
      %1745 = vmatpush1.bf16.msra.mxu0 0
      %1746 = vmatprep.subr.bf16.mxu0 0
      %1747 = vmatpush1.bf16.msra.mxu0 0
      %1748 = vmatprep.mubr.bf16.mxu0 0
      %1749 = vmatmul.mubr.bf16.gmra.mrb[0].mxu0 %v642
      %v1750 = vpop.f32.mrb[0].mxu0
      %v1751 = vadd.f32 0.0, %v1750
      %v1752 = vpop.f32.mrb[0].mxu0
      %v1753 = vpop.f32.mrb[0].mxu0
      %v1754 = vadd.f32 0.0, %v1753
      %v1755 = vpop.f32.mrb[0].mxu0
      %1756 = vmatprep.mubr.bf16.mxu0 0
      %1757 = vmatmul.mubr.bf16.gmra.mrb[0].mxu0 %v645
      %v1758 = vpop.f32.mrb[0].mxu0
      %v1759 = vadd.f32 0.0, %v1758
      %v1760 = vpop.f32.mrb[0].mxu0
      %v1761 = vpop.f32.mrb[0].mxu0
      %v1762 = vadd.f32 0.0, %v1761
      %v1763 = vpop.f32.mrb[0].mxu0
      %1764 = vdwg.mxu0
      %v1765 = vpack.c.bf16 %v1754, %v1751
      %v1766 = vpack.c.bf16 %v1762, %v1759
      %1768 = vrot.lane.b32.xlu0 %v1714, 32
      %v1769 = vpop.permute.xlu0 %1768
      %v1772 = vsel %vm760, %v1713, %v1769
      %1774 = vrot.lane.b32.xlu0 %v1766, 32
      %v1775 = vpop.permute.xlu0 %1774
      %v1778 = vsel %vm760, %v1765, %v1775
      %v1779 = vld [vmem:[%s6] sm:$0xff]
      %v1780 = vld [vmem:[%s6 + $0x8] sm:$0xff]
      %v1781 = vld [vmem:[%s6 + $0x10] sm:$0xff]
      %v1782 = vld [vmem:[%s6 + $0x18] sm:$0xff]
      %v1783 = vld [vmem:[%s6 + $0x20] sm:$0xff]
      %v1784 = vld [vmem:[%s6 + $0x28] sm:$0xff]
      %v1785 = vld [vmem:[%s6 + $0x30] sm:$0xff]
      %v1786 = vld [vmem:[%s6 + $0x38] sm:$0xff]
      %v1787 = vld [vmem:[%s6 + $0x40] sm:$0xff]
      %v1788 = vld [vmem:[%s6 + $0x48] sm:$0xff]
      %v1789 = vld [vmem:[%s6 + $0x50] sm:$0xff]
      %v1790 = vld [vmem:[%s6 + $0x58] sm:$0xff]
      %v1791 = vld [vmem:[%s6 + $0x60] sm:$0xff]
      %v1792 = vld [vmem:[%s6 + $0x68] sm:$0xff]
      %v1793 = vld [vmem:[%s6 + $0x70] sm:$0xff]
      %v1794 = vld [vmem:[%s6 + $0x78] sm:$0xff]
      %v1795 = vld [vmem:[%s6 + $0x80] sm:$0xff]
      %v1796 = vld [vmem:[%s6 + $0x88] sm:$0xff]
      %v1797 = vld [vmem:[%s6 + $0x90] sm:$0xff]
      %v1798 = vld [vmem:[%s6 + $0x98] sm:$0xff]
      %v1799 = vld [vmem:[%s6 + $0xa0] sm:$0xff]
      %v1800 = vld [vmem:[%s6 + $0xa8] sm:$0xff]
      %v1801 = vld [vmem:[%s6 + $0xb0] sm:$0xff]
      %v1802 = vld [vmem:[%s6 + $0xb8] sm:$0xff]
      %v1827 = vunpack.c.l.b16 %v1779
      %v1828 = vunpack.c.h.b16 %v1779
      %v1829 = vunpack.c.l.b16 %v1780
      %v1830 = vunpack.c.h.b16 %v1780
      %v1831 = vunpack.c.l.b16 %v1781
      %v1832 = vunpack.c.h.b16 %v1781
      %v1833 = vunpack.c.l.b16 %v1782
      %v1834 = vunpack.c.h.b16 %v1782
      %v1835 = vunpack.c.l.b16 %v1783
      %v1836 = vunpack.c.h.b16 %v1783
      %v1837 = vunpack.c.l.b16 %v1784
      %v1838 = vunpack.c.h.b16 %v1784
      %v1839 = vunpack.c.l.b16 %v1785
      %v1840 = vunpack.c.h.b16 %v1785
      %v1841 = vunpack.c.l.b16 %v1786
      %v1842 = vunpack.c.h.b16 %v1786
      %v1843 = vunpack.c.l.b16 %v1787
      %v1844 = vunpack.c.h.b16 %v1787
      %v1845 = vunpack.c.l.b16 %v1788
      %v1846 = vunpack.c.h.b16 %v1788
      %v1847 = vunpack.c.l.b16 %v1789
      %v1848 = vunpack.c.h.b16 %v1789
      %v1849 = vunpack.c.l.b16 %v1790
      %v1850 = vunpack.c.h.b16 %v1790
      %v1851 = vunpack.c.l.b16 %v1791
      %v1852 = vunpack.c.h.b16 %v1791
      %v1853 = vunpack.c.l.b16 %v1792
      %v1854 = vunpack.c.h.b16 %v1792
      %v1855 = vunpack.c.l.b16 %v1793
      %v1856 = vunpack.c.h.b16 %v1793
      %v1857 = vunpack.c.l.b16 %v1794
      %v1858 = vunpack.c.h.b16 %v1794
      %v1859 = vunpack.c.l.b16 %v1795
      %v1860 = vunpack.c.h.b16 %v1795
      %v1861 = vunpack.c.l.b16 %v1796
      %v1862 = vunpack.c.h.b16 %v1796
      %v1863 = vunpack.c.l.b16 %v1797
      %v1864 = vunpack.c.h.b16 %v1797
      %v1865 = vunpack.c.l.b16 %v1798
      %v1866 = vunpack.c.h.b16 %v1798
      %v1867 = vunpack.c.l.b16 %v1799
      %v1868 = vunpack.c.h.b16 %v1799
      %v1869 = vunpack.c.l.b16 %v1800
      %v1870 = vunpack.c.h.b16 %v1800
      %v1871 = vunpack.c.l.b16 %v1801
      %v1872 = vunpack.c.h.b16 %v1801
      %v1873 = vunpack.c.l.b16 %v1802
      %v1874 = vunpack.c.h.b16 %v1802
      %v1875 = vpack.c.b16 %v1833, %v1827
      %v1876 = vpack.c.b16 %v1834, %v1828
      %v1877 = vpack.c.b16 %v1835, %v1829
      %v1878 = vpack.c.b16 %v1836, %v1830
      %v1879 = vpack.c.b16 %v1837, %v1831
      %v1880 = vpack.c.b16 %v1838, %v1832
      %v1881 = vpack.c.b16 %v1845, %v1839
      %v1882 = vpack.c.b16 %v1846, %v1840
      %v1883 = vpack.c.b16 %v1847, %v1841
      %v1884 = vpack.c.b16 %v1848, %v1842
      %v1885 = vpack.c.b16 %v1849, %v1843
      %v1886 = vpack.c.b16 %v1850, %v1844
      %v1887 = vpack.c.b16 %v1857, %v1851
      %v1888 = vpack.c.b16 %v1858, %v1852
      %v1889 = vpack.c.b16 %v1859, %v1853
      %v1890 = vpack.c.b16 %v1860, %v1854
      %v1891 = vpack.c.b16 %v1861, %v1855
      %v1892 = vpack.c.b16 %v1862, %v1856
      %v1893 = vpack.c.b16 %v1869, %v1863
      %v1894 = vpack.c.b16 %v1870, %v1864
      %v1895 = vpack.c.b16 %v1871, %v1865
      %v1896 = vpack.c.b16 %v1872, %v1866
      %v1897 = vpack.c.b16 %v1873, %v1867
      %v1898 = vpack.c.b16 %v1874, %v1868
      %v1923 = vsel %vm1040, %v1772, 0
      %1925 = vmatprep.subr.bf16.mxu0 %v1876
      %1926 = vmatpush1.bf16.msra.mxu0 %v1875
      %1927 = vmatprep.subr.bf16.mxu0 %v1882
      %1928 = vmatpush1.bf16.msra.mxu0 %v1881
      %1929 = vmatprep.subr.bf16.mxu0 %v1888
      %1930 = vmatpush1.bf16.msra.mxu0 %v1887
      %1931 = vmatprep.subr.bf16.mxu0 %v1894
      %1932 = vmatpush1.bf16.msra.mxu0 %v1893
      %1933 = vmatprep.subr.bf16.mxu0 0
      %1934 = vmatpush1.bf16.msra.mxu0 0
      %1935 = vmatprep.subr.bf16.mxu0 0
      %1936 = vmatpush1.bf16.msra.mxu0 0
      %1937 = vmatprep.subr.bf16.mxu0 0
      %1938 = vmatpush1.bf16.msra.mxu0 0
      %1939 = vmatprep.subr.bf16.mxu0 0
      %1940 = vmatpush1.bf16.msra.mxu0 0
      %1941 = vmatprep.subr.bf16.mxu0 0
      %1942 = vmatpush1.bf16.msra.mxu0 0
      %1943 = vmatprep.subr.bf16.mxu0 0
      %1944 = vmatpush1.bf16.msra.mxu0 0
      %1945 = vmatprep.subr.bf16.mxu0 0
      %1946 = vmatpush1.bf16.msra.mxu0 0
      %1947 = vmatprep.subr.bf16.mxu0 0
      %1948 = vmatpush1.bf16.msra.mxu0 0
      %1949 = vmatprep.subr.bf16.mxu0 0
      %1950 = vmatpush1.bf16.msra.mxu0 0
      %1951 = vmatprep.subr.bf16.mxu0 0
      %1952 = vmatpush1.bf16.msra.mxu0 0
      %1953 = vmatprep.subr.bf16.mxu0 0
      %1954 = vmatpush1.bf16.msra.mxu0 0
      %1955 = vmatprep.subr.bf16.mxu0 0
      %1956 = vmatpush1.bf16.msra.mxu0 0
      %1957 = vmatprep.mubr.bf16.mxu0 0
      %1958 = vmatmul.mubr.bf16.gmra.mrb[0].mxu0 %v1923
      %v1959 = vpop.f32.mrb[0].mxu0
      %v1960 = vadd.f32 0.0, %v1959
      %v1961 = vpop.f32.mrb[0].mxu0
      %v1962 = vadd.f32 0.0, %v1961
      %v1963 = vpop.f32.mrb[0].mxu0
      %v1964 = vadd.f32 0.0, %v1963
      %v1965 = vpop.f32.mrb[0].mxu0
      %v1966 = vadd.f32 0.0, %v1965
      %1967 = vdwg.mxu0
      %1968 = vmatprep.subr.bf16.mxu0 %v1878
      %1969 = vmatpush1.bf16.msra.mxu0 %v1877
      %1970 = vmatprep.subr.bf16.mxu0 %v1884
      %1971 = vmatpush1.bf16.msra.mxu0 %v1883
      %1972 = vmatprep.subr.bf16.mxu0 %v1890
      %1973 = vmatpush1.bf16.msra.mxu0 %v1889
      %1974 = vmatprep.subr.bf16.mxu0 %v1896
      %1975 = vmatpush1.bf16.msra.mxu0 %v1895
      %1976 = vmatprep.subr.bf16.mxu0 0
      %1977 = vmatpush1.bf16.msra.mxu0 0
      %1978 = vmatprep.subr.bf16.mxu0 0
      %1979 = vmatpush1.bf16.msra.mxu0 0
      %1980 = vmatprep.subr.bf16.mxu0 0
      %1981 = vmatpush1.bf16.msra.mxu0 0
      %1982 = vmatprep.subr.bf16.mxu0 0
      %1983 = vmatpush1.bf16.msra.mxu0 0
      %1984 = vmatprep.subr.bf16.mxu0 0
      %1985 = vmatpush1.bf16.msra.mxu0 0
      %1986 = vmatprep.subr.bf16.mxu0 0
      %1987 = vmatpush1.bf16.msra.mxu0 0
      %1988 = vmatprep.subr.bf16.mxu0 0
      %1989 = vmatpush1.bf16.msra.mxu0 0
      %1990 = vmatprep.subr.bf16.mxu0 0
      %1991 = vmatpush1.bf16.msra.mxu0 0
      %1992 = vmatprep.subr.bf16.mxu0 0
      %1993 = vmatpush1.bf16.msra.mxu0 0
      %1994 = vmatprep.subr.bf16.mxu0 0
      %1995 = vmatpush1.bf16.msra.mxu0 0
      %1996 = vmatprep.subr.bf16.mxu0 0
      %1997 = vmatpush1.bf16.msra.mxu0 0
      %1998 = vmatprep.subr.bf16.mxu0 0
      %1999 = vmatpush1.bf16.msra.mxu0 0
      %2000 = vmatprep.mubr.bf16.mxu0 0
      %2001 = vmatmul.mubr.bf16.gmra.mrb[0].mxu0 %v1923
      %v2002 = vpop.f32.mrb[0].mxu0
      %v2003 = vadd.f32 0.0, %v2002
      %v2004 = vpop.f32.mrb[0].mxu0
      %v2005 = vadd.f32 0.0, %v2004
      %v2006 = vpop.f32.mrb[0].mxu0
      %v2007 = vadd.f32 0.0, %v2006
      %v2008 = vpop.f32.mrb[0].mxu0
      %v2009 = vadd.f32 0.0, %v2008
      %2010 = vdwg.mxu0
      %2011 = vmatprep.subr.bf16.mxu0 %v1880
      %2012 = vmatpush1.bf16.msra.mxu0 %v1879
      %2013 = vmatprep.subr.bf16.mxu0 %v1886
      %2014 = vmatpush1.bf16.msra.mxu0 %v1885
      %2015 = vmatprep.subr.bf16.mxu0 %v1892
      %2016 = vmatpush1.bf16.msra.mxu0 %v1891
      %2017 = vmatprep.subr.bf16.mxu0 %v1898
      %2018 = vmatpush1.bf16.msra.mxu0 %v1897
      %2019 = vmatprep.subr.bf16.mxu0 0
      %2020 = vmatpush1.bf16.msra.mxu0 0
      %2021 = vmatprep.subr.bf16.mxu0 0
      %2022 = vmatpush1.bf16.msra.mxu0 0
      %2023 = vmatprep.subr.bf16.mxu0 0
      %2024 = vmatpush1.bf16.msra.mxu0 0
      %2025 = vmatprep.subr.bf16.mxu0 0
      %2026 = vmatpush1.bf16.msra.mxu0 0
      %2027 = vmatprep.subr.bf16.mxu0 0
      %2028 = vmatpush1.bf16.msra.mxu0 0
      %2029 = vmatprep.subr.bf16.mxu0 0
      %2030 = vmatpush1.bf16.msra.mxu0 0
      %2031 = vmatprep.subr.bf16.mxu0 0
      %2032 = vmatpush1.bf16.msra.mxu0 0
      %2033 = vmatprep.subr.bf16.mxu0 0
      %2034 = vmatpush1.bf16.msra.mxu0 0
      %2035 = vmatprep.subr.bf16.mxu0 0
      %2036 = vmatpush1.bf16.msra.mxu0 0
      %2037 = vmatprep.subr.bf16.mxu0 0
      %2038 = vmatpush1.bf16.msra.mxu0 0
      %2039 = vmatprep.subr.bf16.mxu0 0
      %2040 = vmatpush1.bf16.msra.mxu0 0
      %2041 = vmatprep.subr.bf16.mxu0 0
      %2042 = vmatpush1.bf16.msra.mxu0 0
      %2043 = vmatprep.mubr.bf16.mxu0 0
      %2044 = vmatmul.mubr.bf16.gmra.mrb[0].mxu0 %v1923
      %v2045 = vpop.f32.mrb[0].mxu0
      %v2046 = vadd.f32 0.0, %v2045
      %v2047 = vpop.f32.mrb[0].mxu0
      %v2048 = vadd.f32 0.0, %v2047
      %v2049 = vpop.f32.mrb[0].mxu0
      %v2050 = vadd.f32 0.0, %v2049
      %v2051 = vpop.f32.mrb[0].mxu0
      %v2052 = vadd.f32 0.0, %v2051
      %2053 = vdwg.mxu0
      %v2054 = vld [vmem:[%s7] sm:$0xff]
      %v2055 = vld [vmem:[%s7 + $0x8] sm:$0xff]
      %v2056 = vld [vmem:[%s7 + $0x10] sm:$0xff]
      %v2057 = vld [vmem:[%s7 + $0x18] sm:$0xff]
      %v2058 = vld [vmem:[%s7 + $0x20] sm:$0xff]
      %v2059 = vld [vmem:[%s7 + $0x28] sm:$0xff]
      %v2060 = vld [vmem:[%s7 + $0x30] sm:$0xff]
      %v2061 = vld [vmem:[%s7 + $0x38] sm:$0xff]
      %v2062 = vld [vmem:[%s7 + $0x40] sm:$0xff]
      %v2063 = vld [vmem:[%s7 + $0x48] sm:$0xff]
      %v2064 = vld [vmem:[%s7 + $0x50] sm:$0xff]
      %v2065 = vld [vmem:[%s7 + $0x58] sm:$0xff]
      %v2066 = vld [vmem:[%s7 + $0x60] sm:$0xff]
      %v2067 = vld [vmem:[%s7 + $0x68] sm:$0xff]
      %v2068 = vld [vmem:[%s7 + $0x70] sm:$0xff]
      %v2069 = vld [vmem:[%s7 + $0x78] sm:$0xff]
      %v2086 = vunpack.c.l.b16 %v2054
      %v2087 = vunpack.c.h.b16 %v2054
      %v2088 = vunpack.c.l.b16 %v2055
      %v2089 = vunpack.c.h.b16 %v2055
      %v2090 = vunpack.c.l.b16 %v2056
      %v2091 = vunpack.c.h.b16 %v2056
      %v2092 = vunpack.c.l.b16 %v2057
      %v2093 = vunpack.c.h.b16 %v2057
      %v2094 = vunpack.c.l.b16 %v2058
      %v2095 = vunpack.c.h.b16 %v2058
      %v2096 = vunpack.c.l.b16 %v2059
      %v2097 = vunpack.c.h.b16 %v2059
      %v2098 = vunpack.c.l.b16 %v2060
      %v2099 = vunpack.c.h.b16 %v2060
      %v2100 = vunpack.c.l.b16 %v2061
      %v2101 = vunpack.c.h.b16 %v2061
      %v2102 = vunpack.c.l.b16 %v2062
      %v2103 = vunpack.c.h.b16 %v2062
      %v2104 = vunpack.c.l.b16 %v2063
      %v2105 = vunpack.c.h.b16 %v2063
      %v2106 = vunpack.c.l.b16 %v2064
      %v2107 = vunpack.c.h.b16 %v2064
      %v2108 = vunpack.c.l.b16 %v2065
      %v2109 = vunpack.c.h.b16 %v2065
      %v2110 = vunpack.c.l.b16 %v2066
      %v2111 = vunpack.c.h.b16 %v2066
      %v2112 = vunpack.c.l.b16 %v2067
      %v2113 = vunpack.c.h.b16 %v2067
      %v2114 = vunpack.c.l.b16 %v2068
      %v2115 = vunpack.c.h.b16 %v2068
      %v2116 = vunpack.c.l.b16 %v2069
      %v2117 = vunpack.c.h.b16 %v2069
      %v2118 = vpack.c.b16 %v2090, %v2086
      %v2119 = vpack.c.b16 %v2091, %v2087
      %v2120 = vpack.c.b16 %v2092, %v2088
      %v2121 = vpack.c.b16 %v2093, %v2089
      %v2122 = vpack.c.b16 %v2098, %v2094
      %v2123 = vpack.c.b16 %v2099, %v2095
      %v2124 = vpack.c.b16 %v2100, %v2096
      %v2125 = vpack.c.b16 %v2101, %v2097
      %v2126 = vpack.c.b16 %v2106, %v2102
      %v2127 = vpack.c.b16 %v2107, %v2103
      %v2128 = vpack.c.b16 %v2108, %v2104
      %v2129 = vpack.c.b16 %v2109, %v2105
      %v2130 = vpack.c.b16 %v2114, %v2110
      %v2131 = vpack.c.b16 %v2115, %v2111
      %v2132 = vpack.c.b16 %v2116, %v2112
      %v2133 = vpack.c.b16 %v2117, %v2113
      %v2150 = vsel %vm1040, %v1778, 0
      %2152 = vmatprep.subr.bf16.mxu0 %v2119
      %2153 = vmatpush1.bf16.msra.mxu0 %v2118
      %2154 = vmatprep.subr.bf16.mxu0 %v2123
      %2155 = vmatpush1.bf16.msra.mxu0 %v2122
      %2156 = vmatprep.subr.bf16.mxu0 %v2127
      %2157 = vmatpush1.bf16.msra.mxu0 %v2126
      %2158 = vmatprep.subr.bf16.mxu0 %v2131
      %2159 = vmatpush1.bf16.msra.mxu0 %v2130
      %2160 = vmatprep.subr.bf16.mxu0 0
      %2161 = vmatpush1.bf16.msra.mxu0 0
      %2162 = vmatprep.subr.bf16.mxu0 0
      %2163 = vmatpush1.bf16.msra.mxu0 0
      %2164 = vmatprep.subr.bf16.mxu0 0
      %2165 = vmatpush1.bf16.msra.mxu0 0
      %2166 = vmatprep.subr.bf16.mxu0 0
      %2167 = vmatpush1.bf16.msra.mxu0 0
      %2168 = vmatprep.subr.bf16.mxu0 0
      %2169 = vmatpush1.bf16.msra.mxu0 0
      %2170 = vmatprep.subr.bf16.mxu0 0
      %2171 = vmatpush1.bf16.msra.mxu0 0
      %2172 = vmatprep.subr.bf16.mxu0 0
      %2173 = vmatpush1.bf16.msra.mxu0 0
      %2174 = vmatprep.subr.bf16.mxu0 0
      %2175 = vmatpush1.bf16.msra.mxu0 0
      %2176 = vmatprep.subr.bf16.mxu0 0
      %2177 = vmatpush1.bf16.msra.mxu0 0
      %2178 = vmatprep.subr.bf16.mxu0 0
      %2179 = vmatpush1.bf16.msra.mxu0 0
      %2180 = vmatprep.subr.bf16.mxu0 0
      %2181 = vmatpush1.bf16.msra.mxu0 0
      %2182 = vmatprep.subr.bf16.mxu0 0
      %2183 = vmatpush1.bf16.msra.mxu0 0
      %2184 = vmatprep.mubr.bf16.mxu0 0
      %2185 = vmatmul.mubr.bf16.gmra.mrb[0].mxu0 %v2150
      %v2186 = vpop.f32.mrb[0].mxu0
      %v2187 = vadd.f32 0.0, %v2186
      %v2188 = vpop.f32.mrb[0].mxu0
      %v2189 = vadd.f32 0.0, %v2188
      %v2190 = vpop.f32.mrb[0].mxu0
      %v2191 = vadd.f32 0.0, %v2190
      %v2192 = vpop.f32.mrb[0].mxu0
      %v2193 = vadd.f32 0.0, %v2192
      %2194 = vdwg.mxu0
      %2195 = vmatprep.subr.bf16.mxu0 %v2121
      %2196 = vmatpush1.bf16.msra.mxu0 %v2120
      %2197 = vmatprep.subr.bf16.mxu0 %v2125
      %2198 = vmatpush1.bf16.msra.mxu0 %v2124
      %2199 = vmatprep.subr.bf16.mxu0 %v2129
      %2200 = vmatpush1.bf16.msra.mxu0 %v2128
      %2201 = vmatprep.subr.bf16.mxu0 %v2133
      %2202 = vmatpush1.bf16.msra.mxu0 %v2132
      %2203 = vmatprep.subr.bf16.mxu0 0
      %2204 = vmatpush1.bf16.msra.mxu0 0
      %2205 = vmatprep.subr.bf16.mxu0 0
      %2206 = vmatpush1.bf16.msra.mxu0 0
      %2207 = vmatprep.subr.bf16.mxu0 0
      %2208 = vmatpush1.bf16.msra.mxu0 0
      %2209 = vmatprep.subr.bf16.mxu0 0
      %2210 = vmatpush1.bf16.msra.mxu0 0
      %2211 = vmatprep.subr.bf16.mxu0 0
      %2212 = vmatpush1.bf16.msra.mxu0 0
      %2213 = vmatprep.subr.bf16.mxu0 0
      %2214 = vmatpush1.bf16.msra.mxu0 0
      %2215 = vmatprep.subr.bf16.mxu0 0
      %2216 = vmatpush1.bf16.msra.mxu0 0
      %2217 = vmatprep.subr.bf16.mxu0 0
      %2218 = vmatpush1.bf16.msra.mxu0 0
      %2219 = vmatprep.subr.bf16.mxu0 0
      %2220 = vmatpush1.bf16.msra.mxu0 0
      %2221 = vmatprep.subr.bf16.mxu0 0
      %2222 = vmatpush1.bf16.msra.mxu0 0
      %2223 = vmatprep.subr.bf16.mxu0 0
      %2224 = vmatpush1.bf16.msra.mxu0 0
      %2225 = vmatprep.subr.bf16.mxu0 0
      %2226 = vmatpush1.bf16.msra.mxu0 0
      %2227 = vmatprep.mubr.bf16.mxu0 0
      %2228 = vmatmul.mubr.bf16.gmra.mrb[0].mxu0 %v2150
      %v2229 = vpop.f32.mrb[0].mxu0
      %v2230 = vadd.f32 0.0, %v2229
      %v2231 = vpop.f32.mrb[0].mxu0
      %v2232 = vadd.f32 0.0, %v2231
      %v2233 = vpop.f32.mrb[0].mxu0
      %v2234 = vadd.f32 0.0, %v2233
      %v2235 = vpop.f32.mrb[0].mxu0
      %v2236 = vadd.f32 0.0, %v2235
      %2237 = vdwg.mxu0
      %v2238 = vadd.f32 %v2187, %v1960
      %v2239 = vadd.f32 %v2191, %v1964
      %v2240 = vmul.f32 %v1134, %v2238
      %v2241 = vmul.f32 %v1139, %v2239
      %2244 = vrot.lane.b32.xlu0 %v2240, 96
      %v2245 = vpop.permute.xlu0 %2244
      %2246 = vrot.lane.b32.xlu0 %v2241, 96
      %v2247 = vpop.permute.xlu0 %2246
      %v2250 = vadd.f32 %v623, %v2245
      %v2251 = vadd.f32 %v624, %v2245
      %v2252 = vadd.f32 %v625, %v2247
      %v2253 = vadd.f32 %v626, %v2247
      %2258 = vrot.lane.b32.xlu0 %v1960, 96
      %v2259 = vpop.permute.xlu0 %2258
      %2260 = vrot.lane.b32.xlu0 %v1962, 96
      %v2261 = vpop.permute.xlu0 %2260
      %2262 = vrot.lane.b32.xlu0 %v1964, 96
      %v2263 = vpop.permute.xlu0 %2262
      %2264 = vrot.lane.b32.xlu0 %v1966, 96
      %v2265 = vpop.permute.xlu0 %2264
      %v2266 = vsel %vm1157, %v2259, %v2261
      %v2267 = vsel %vm1157, %v2263, %v2265
      %v2270 = vadd.f32 %v2187, %v2266
      %v2271 = vadd.f32 %v2191, %v2267
      %v2272 = vmul.f32 %v1166, %v2270
      %v2273 = vmul.f32 %v1170, %v2271
      %2276 = vrot.lane.b32.xlu0 %v2272, 32
      %v2277 = vpop.permute.xlu0 %2276
      %2278 = vrot.lane.b32.xlu0 %v2273, 32
      %v2279 = vpop.permute.xlu0 %2278
      %v2282 = vadd.f32 %v2250, %v2277
      %v2283 = vadd.f32 %v2251, %v2277
      %v2284 = vadd.f32 %v2252, %v2279
      %v2285 = vadd.f32 %v2253, %v2279
      %2286 = vrot.lane.b32.xlu0 %v1962, 64
      %v2287 = vpop.permute.xlu0 %2286
      %2288 = vrot.lane.b32.xlu0 %v1966, 64
      %v2289 = vpop.permute.xlu0 %2288
      %v2292 = vadd.f32 %v2189, %v2287
      %v2293 = vadd.f32 %v2193, %v2289
      %v2294 = vmul.f32 %v1194, %v2292
      %v2295 = vmul.f32 %v1198, %v2293
      %2298 = vrot.lane.b32.xlu0 %v2294, 96
      %v2299 = vpop.permute.xlu0 %2298
      %2300 = vrot.lane.b32.xlu0 %v2295, 96
      %v2301 = vpop.permute.xlu0 %2300
      %v2304 = vadd.f32 %v2282, %v2299
      %v2305 = vadd.f32 %v2283, %v2299
      %v2306 = vadd.f32 %v2284, %v2301
      %v2307 = vadd.f32 %v2285, %v2301
      %2310 = vrot.lane.b32.xlu0 %v2003, 32
      %v2311 = vpop.permute.xlu0 %2310
      %2312 = vrot.lane.b32.xlu0 %v2007, 32
      %v2313 = vpop.permute.xlu0 %2312
      %v2316 = vadd.f32 %v2189, %v2311
      %v2317 = vadd.f32 %v2193, %v2313
      %v2318 = vmul.f32 %v1216, %v2316
      %v2319 = vmul.f32 %v1220, %v2317
      %2322 = vrot.lane.b32.xlu0 %v2318, 32
      %v2323 = vpop.permute.xlu0 %2322
      %2324 = vrot.lane.b32.xlu0 %v2319, 32
      %v2325 = vpop.permute.xlu0 %2324
      %v2328 = vadd.f32 %v2304, %v2323
      %v2329 = vadd.f32 %v2305, %v2323
      %v2330 = vadd.f32 %v2306, %v2325
      %v2331 = vadd.f32 %v2307, %v2325
      %v2332 = vadd.f32 %v2230, %v2005
      %v2333 = vadd.f32 %v2234, %v2009
      %v2334 = vmul.f32 %v1238, %v2332
      %v2335 = vmul.f32 %v1242, %v2333
      %2338 = vrot.lane.b32.xlu0 %v2334, 96
      %v2339 = vpop.permute.xlu0 %2338
      %2340 = vrot.lane.b32.xlu0 %v2335, 96
      %v2341 = vpop.permute.xlu0 %2340
      %v2344 = vadd.f32 %v2328, %v2339
      %v2345 = vadd.f32 %v2329, %v2339
      %v2346 = vadd.f32 %v2330, %v2341
      %v2347 = vadd.f32 %v2331, %v2341
      %2352 = vrot.lane.b32.xlu0 %v2005, 96
      %v2353 = vpop.permute.xlu0 %2352
      %2354 = vrot.lane.b32.xlu0 %v2046, 96
      %v2355 = vpop.permute.xlu0 %2354
      %2356 = vrot.lane.b32.xlu0 %v2009, 96
      %v2357 = vpop.permute.xlu0 %2356
      %2358 = vrot.lane.b32.xlu0 %v2050, 96
      %v2359 = vpop.permute.xlu0 %2358
      %v2360 = vsel %vm1157, %v2353, %v2355
      %v2361 = vsel %vm1157, %v2357, %v2359
      %v2364 = vadd.f32 %v2230, %v2360
      %v2365 = vadd.f32 %v2234, %v2361
      %v2366 = vmul.f32 %v1268, %v2364
      %v2367 = vmul.f32 %v1272, %v2365
      %2370 = vrot.lane.b32.xlu0 %v2366, 32
      %v2371 = vpop.permute.xlu0 %2370
      %2372 = vrot.lane.b32.xlu0 %v2367, 32
      %v2373 = vpop.permute.xlu0 %2372
      %v2376 = vadd.f32 %v2344, %v2371
      %v2377 = vadd.f32 %v2345, %v2371
      %v2378 = vadd.f32 %v2346, %v2373
      %v2379 = vadd.f32 %v2347, %v2373
      %2380 = vrot.lane.b32.xlu0 %v2046, 64
      %v2381 = vpop.permute.xlu0 %2380
      %2382 = vrot.lane.b32.xlu0 %v2050, 64
      %v2383 = vpop.permute.xlu0 %2382
      %v2386 = vadd.f32 %v2232, %v2381
      %v2387 = vadd.f32 %v2236, %v2383
      %v2388 = vmul.f32 %v1296, %v2386
      %v2389 = vmul.f32 %v1300, %v2387
      %2392 = vrot.lane.b32.xlu0 %v2388, 96
      %v2393 = vpop.permute.xlu0 %2392
      %2394 = vrot.lane.b32.xlu0 %v2389, 96
      %v2395 = vpop.permute.xlu0 %2394
      %v2398 = vadd.f32 %v2376, %v2393
      %v2399 = vadd.f32 %v2377, %v2393
      %v2400 = vadd.f32 %v2378, %v2395
      %v2401 = vadd.f32 %v2379, %v2395
      %2404 = vrot.lane.b32.xlu0 %v2048, 32
      %v2405 = vpop.permute.xlu0 %2404
      %2406 = vrot.lane.b32.xlu0 %v2052, 32
      %v2407 = vpop.permute.xlu0 %2406
      %v2410 = vadd.f32 %v2232, %v2405
      %v2411 = vadd.f32 %v2236, %v2407
      %v2412 = vmul.f32 %v1318, %v2410
      %v2413 = vmul.f32 %v1322, %v2411
      %2416 = vrot.lane.b32.xlu0 %v2412, 32
      %v2417 = vpop.permute.xlu0 %2416
      %2418 = vrot.lane.b32.xlu0 %v2413, 32
      %v2419 = vpop.permute.xlu0 %2418
      %v2422 = vadd.f32 %v2398, %v2417
      %v2423 = vadd.f32 %v2399, %v2417
      %v2424 = vadd.f32 %v2400, %v2419
      %v2425 = vadd.f32 %v2401, %v2419
      %v2426 = vxor.u32 %v2422, 2147483648
      %v2427 = vxor.u32 %v2423, 2147483648
      %v2428 = vxor.u32 %v2424, 2147483648
      %v2429 = vxor.u32 %v2425, 2147483648
      %v2430 = vmul.f32 %v2426, 1.442695
      %v2431 = vpow.pop %v2430
      %v2432 = vmul.f32 %v2427, 1.442695
      %v2433 = vpow.pop %v2432
      %v2434 = vmul.f32 %v2428, 1.442695
      %v2435 = vpow.pop %v2434
      %v2436 = vmul.f32 %v2429, 1.442695
      %v2437 = vpow.pop %v2436
      %v2438 = vadd.f32 %v2431, 1.0
      %v2439 = vadd.f32 %v2433, 1.0
      %v2440 = vadd.f32 %v2435, 1.0
      %v2441 = vadd.f32 %v2437, 1.0
      %v2442 = vrcp.pop %v2438
      %v2443 = vmul.f32 1.0, %v2442
      %v2444 = vrcp.pop %v2439
      %v2445 = vmul.f32 1.0, %v2444
      %v2446 = vrcp.pop %v2440
      %v2447 = vmul.f32 1.0, %v2446
      %v2448 = vrcp.pop %v2441
      %v2449 = vmul.f32 1.0, %v2448
      %2452 = vrot.lane.b32.xlu0 %v1658, 96
      %v2453 = vpop.permute.xlu0 %2452
      %2454 = vrot.lane.b32.xlu0 %v1659, 96
      %v2455 = vpop.permute.xlu0 %2454
      %v2458 = vmul.f32 %v2443, %v2453
      %v2459 = vmul.f32 %v2447, %v2455
      %v2460 = vpack.c.bf16 %v2459, %v2458
      %2462 = vrot.lane.b32.xlu0 %v2460, 32
      %v2463 = vpop.permute.xlu0 %2462
      %2465 = vmatprep.subr.bf16.mxu0 0
      %2466 = vmatpush1.bf16.msra.mxu0 %v2463
      %2467 = vmatprep.subr.bf16.mxu0 0
      %2468 = vmatpush1.bf16.msra.mxu0 0
      %2469 = vmatprep.subr.bf16.mxu0 0
      %2470 = vmatpush1.bf16.msra.mxu0 0
      %2471 = vmatprep.subr.bf16.mxu0 0
      %2472 = vmatpush1.bf16.msra.mxu0 0
      %2473 = vmatprep.subr.bf16.mxu0 0
      %2474 = vmatpush1.bf16.msra.mxu0 0
      %2475 = vmatprep.subr.bf16.mxu0 0
      %2476 = vmatpush1.bf16.msra.mxu0 0
      %2477 = vmatprep.subr.bf16.mxu0 0
      %2478 = vmatpush1.bf16.msra.mxu0 0
      %2479 = vmatprep.subr.bf16.mxu0 0
      %2480 = vmatpush1.bf16.msra.mxu0 0
      %2481 = vmatprep.subr.bf16.mxu0 0
      %2482 = vmatpush1.bf16.msra.mxu0 0
      %2483 = vmatprep.subr.bf16.mxu0 0
      %2484 = vmatpush1.bf16.msra.mxu0 0
      %2485 = vmatprep.subr.bf16.mxu0 0
      %2486 = vmatpush1.bf16.msra.mxu0 0
      %2487 = vmatprep.subr.bf16.mxu0 0
      %2488 = vmatpush1.bf16.msra.mxu0 0
      %2489 = vmatprep.subr.bf16.mxu0 0
      %2490 = vmatpush1.bf16.msra.mxu0 0
      %2491 = vmatprep.subr.bf16.mxu0 0
      %2492 = vmatpush1.bf16.msra.mxu0 0
      %2493 = vmatprep.subr.bf16.mxu0 0
      %2494 = vmatpush1.bf16.msra.mxu0 0
      %2495 = vmatprep.subr.bf16.mxu0 0
      %2496 = vmatpush1.bf16.msra.mxu0 0
      %2497 = vmatprep.mubr.bf16.mxu0 0
      %2498 = vmatmul.mubr.bf16.gmra.mrb[0].mxu0 %v642
      %v2499 = vpop.f32.mrb[0].mxu0
      %v2500 = vadd.f32 0.0, %v2499
      %v2501 = vpop.f32.mrb[0].mxu0
      %v2502 = vpop.f32.mrb[0].mxu0
      %v2503 = vadd.f32 0.0, %v2502
      %v2504 = vpop.f32.mrb[0].mxu0
      %2505 = vmatprep.mubr.bf16.mxu0 0
      %2506 = vmatmul.mubr.bf16.gmra.mrb[0].mxu0 %v645
      %v2507 = vpop.f32.mrb[0].mxu0
      %v2508 = vadd.f32 0.0, %v2507
      %v2509 = vpop.f32.mrb[0].mxu0
      %v2510 = vpop.f32.mrb[0].mxu0
      %v2511 = vadd.f32 0.0, %v2510
      %v2512 = vpop.f32.mrb[0].mxu0
      %2513 = vdwg.mxu0
      %v2514 = vpack.c.bf16 %v2503, %v2500
      %v2515 = vpack.c.bf16 %v2511, %v2508
      %2517 = vrot.lane.b32.xlu0 %v2515, 32
      %v2518 = vpop.permute.xlu0 %2517
      %v2521 = vsel %vm760, %v2514, %v2518
      %v2522 = vld [vmem:[%s8] sm:$0xff]
      %v2523 = vld [vmem:[%s8 + $0x8] sm:$0xff]
      %v2524 = vld [vmem:[%s8 + $0x10] sm:$0xff]
      %v2525 = vld [vmem:[%s8 + $0x18] sm:$0xff]
      %v2526 = vld [vmem:[%s8 + $0x20] sm:$0xff]
      %v2527 = vld [vmem:[%s8 + $0x28] sm:$0xff]
      %v2528 = vld [vmem:[%s8 + $0x30] sm:$0xff]
      %v2529 = vld [vmem:[%s8 + $0x38] sm:$0xff]
      %v2538 = vunpack.c.l.b16 %v2522
      %v2539 = vunpack.c.h.b16 %v2522
      %v2540 = vunpack.c.l.b16 %v2523
      %v2541 = vunpack.c.h.b16 %v2523
      %v2542 = vunpack.c.l.b16 %v2524
      %v2543 = vunpack.c.h.b16 %v2524
      %v2544 = vunpack.c.l.b16 %v2525
      %v2545 = vunpack.c.h.b16 %v2525
      %v2546 = vunpack.c.l.b16 %v2526
      %v2547 = vunpack.c.h.b16 %v2526
      %v2548 = vunpack.c.l.b16 %v2527
      %v2549 = vunpack.c.h.b16 %v2527
      %v2550 = vunpack.c.l.b16 %v2528
      %v2551 = vunpack.c.h.b16 %v2528
      %v2552 = vunpack.c.l.b16 %v2529
      %v2553 = vunpack.c.h.b16 %v2529
      %v2554 = vpack.c.b16 %v2540, %v2538
      %v2555 = vpack.c.b16 %v2541, %v2539
      %v2556 = vpack.c.b16 %v2544, %v2542
      %v2557 = vpack.c.b16 %v2545, %v2543
      %v2558 = vpack.c.b16 %v2548, %v2546
      %v2559 = vpack.c.b16 %v2549, %v2547
      %v2560 = vpack.c.b16 %v2552, %v2550
      %v2561 = vpack.c.b16 %v2553, %v2551
      %v2570 = vsel %vm1040, %v2521, 0
      %2572 = vmatprep.subr.bf16.mxu0 %v2555
      %2573 = vmatpush1.bf16.msra.mxu0 %v2554
      %2574 = vmatprep.subr.bf16.mxu0 %v2557
      %2575 = vmatpush1.bf16.msra.mxu0 %v2556
      %2576 = vmatprep.subr.bf16.mxu0 %v2559
      %2577 = vmatpush1.bf16.msra.mxu0 %v2558
      %2578 = vmatprep.subr.bf16.mxu0 %v2561
      %2579 = vmatpush1.bf16.msra.mxu0 %v2560
      %2580 = vmatprep.subr.bf16.mxu0 0
      %2581 = vmatpush1.bf16.msra.mxu0 0
      %2582 = vmatprep.subr.bf16.mxu0 0
      %2583 = vmatpush1.bf16.msra.mxu0 0
      %2584 = vmatprep.subr.bf16.mxu0 0
      %2585 = vmatpush1.bf16.msra.mxu0 0
      %2586 = vmatprep.subr.bf16.mxu0 0
      %2587 = vmatpush1.bf16.msra.mxu0 0
      %2588 = vmatprep.subr.bf16.mxu0 0
      %2589 = vmatpush1.bf16.msra.mxu0 0
      %2590 = vmatprep.subr.bf16.mxu0 0
      %2591 = vmatpush1.bf16.msra.mxu0 0
      %2592 = vmatprep.subr.bf16.mxu0 0
      %2593 = vmatpush1.bf16.msra.mxu0 0
      %2594 = vmatprep.subr.bf16.mxu0 0
      %2595 = vmatpush1.bf16.msra.mxu0 0
      %2596 = vmatprep.subr.bf16.mxu0 0
      %2597 = vmatpush1.bf16.msra.mxu0 0
      %2598 = vmatprep.subr.bf16.mxu0 0
      %2599 = vmatpush1.bf16.msra.mxu0 0
      %2600 = vmatprep.subr.bf16.mxu0 0
      %2601 = vmatpush1.bf16.msra.mxu0 0
      %2602 = vmatprep.subr.bf16.mxu0 0
      %2603 = vmatpush1.bf16.msra.mxu0 0
      %2604 = vmatprep.mubr.bf16.mxu0 0
      %2605 = vmatmul.mubr.bf16.gmra.mrb[0].mxu0 %v2570
      %v2606 = vpop.f32.mrb[0].mxu0
      %v2607 = vadd.f32 0.0, %v2606
      %v2608 = vpop.f32.mrb[0].mxu0
      %v2609 = vadd.f32 0.0, %v2608
      %v2610 = vpop.f32.mrb[0].mxu0
      %v2611 = vadd.f32 0.0, %v2610
      %v2612 = vpop.f32.mrb[0].mxu0
      %v2613 = vadd.f32 0.0, %v2612
      %2614 = vdwg.mxu0
      %2615 = vrot.lane.b32.xlu0 %v1960, 64
      %v2616 = vpop.permute.xlu0 %2615
      %2617 = vrot.lane.b32.xlu0 %v1964, 64
      %v2618 = vpop.permute.xlu0 %2617
      %v2621 = vadd.f32 %v2607, %v2616
      %v2622 = vadd.f32 %v2611, %v2618
      %v2623 = vmul.f32 %v1134, %v2621
      %v2624 = vmul.f32 %v1139, %v2622
      %2627 = vrot.lane.b32.xlu0 %v2623, 32
      %v2628 = vpop.permute.xlu0 %2627
      %2629 = vrot.lane.b32.xlu0 %v2624, 32
      %v2630 = vpop.permute.xlu0 %2629
      %v2633 = vadd.f32 %v624, %v2628
      %v2634 = vadd.f32 %v626, %v2630
      %v2635 = vadd.f32 %v2607, %v1962
      %v2636 = vadd.f32 %v2611, %v1966
      %v2637 = vmul.f32 %v1166, %v2635
      %v2638 = vmul.f32 %v1170, %v2636
      %v2639 = vadd.f32 %v2633, %v2637
      %v2640 = vadd.f32 %v2634, %v2638
      %2641 = vrot.lane.b32.xlu0 %v2003, 64
      %v2642 = vpop.permute.xlu0 %2641
      %2643 = vrot.lane.b32.xlu0 %v2007, 64
      %v2644 = vpop.permute.xlu0 %2643
      %v2647 = vadd.f32 %v2607, %v2642
      %v2648 = vadd.f32 %v2611, %v2644
      %v2649 = vmul.f32 %v1194, %v2647
      %v2650 = vmul.f32 %v1198, %v2648
      %2653 = vrot.lane.b32.xlu0 %v2649, 96
      %v2654 = vpop.permute.xlu0 %2653
      %2655 = vrot.lane.b32.xlu0 %v2650, 96
      %v2656 = vpop.permute.xlu0 %2655
      %v2659 = vadd.f32 %v2639, %v2654
      %v2660 = vadd.f32 %v2640, %v2656
      %v2661 = vadd.f32 %v2607, %v2003
      %v2662 = vadd.f32 %v2611, %v2007
      %v2663 = vmul.f32 %v1216, %v2661
      %v2664 = vmul.f32 %v1220, %v2662
      %2667 = vrot.lane.b32.xlu0 %v2663, 64
      %v2668 = vpop.permute.xlu0 %2667
      %2669 = vrot.lane.b32.xlu0 %v2664, 64
      %v2670 = vpop.permute.xlu0 %2669
      %v2673 = vadd.f32 %v2659, %v2668
      %v2674 = vadd.f32 %v2660, %v2670
      %2675 = vrot.lane.b32.xlu0 %v2005, 64
      %v2676 = vpop.permute.xlu0 %2675
      %2677 = vrot.lane.b32.xlu0 %v2009, 64
      %v2678 = vpop.permute.xlu0 %2677
      %v2681 = vadd.f32 %v2609, %v2676
      %v2682 = vadd.f32 %v2613, %v2678
      %v2683 = vmul.f32 %v1238, %v2681
      %v2684 = vmul.f32 %v1242, %v2682
      %2687 = vrot.lane.b32.xlu0 %v2683, 32
      %v2688 = vpop.permute.xlu0 %2687
      %2689 = vrot.lane.b32.xlu0 %v2684, 32
      %v2690 = vpop.permute.xlu0 %2689
      %v2693 = vadd.f32 %v2673, %v2688
      %v2694 = vadd.f32 %v2674, %v2690
      %v2695 = vadd.f32 %v2609, %v2046
      %v2696 = vadd.f32 %v2613, %v2050
      %v2697 = vmul.f32 %v1268, %v2695
      %v2698 = vmul.f32 %v1272, %v2696
      %v2699 = vadd.f32 %v2693, %v2697
      %v2700 = vadd.f32 %v2694, %v2698
      %2701 = vrot.lane.b32.xlu0 %v2048, 64
      %v2702 = vpop.permute.xlu0 %2701
      %2703 = vrot.lane.b32.xlu0 %v2052, 64
      %v2704 = vpop.permute.xlu0 %2703
      %v2707 = vadd.f32 %v2609, %v2702
      %v2708 = vadd.f32 %v2613, %v2704
      %v2709 = vmul.f32 %v1296, %v2707
      %v2710 = vmul.f32 %v1300, %v2708
      %2713 = vrot.lane.b32.xlu0 %v2709, 96
      %v2714 = vpop.permute.xlu0 %2713
      %2715 = vrot.lane.b32.xlu0 %v2710, 96
      %v2716 = vpop.permute.xlu0 %2715
      %v2719 = vadd.f32 %v2699, %v2714
      %v2720 = vadd.f32 %v2700, %v2716
      %v2721 = vadd.f32 %v2609, %v2048
      %v2722 = vadd.f32 %v2613, %v2052
      %v2723 = vmul.f32 %v1318, %v2721
      %v2724 = vmul.f32 %v1322, %v2722
      %2727 = vrot.lane.b32.xlu0 %v2723, 64
      %v2728 = vpop.permute.xlu0 %2727
      %2729 = vrot.lane.b32.xlu0 %v2724, 64
      %v2730 = vpop.permute.xlu0 %2729
      %v2733 = vadd.f32 %v2719, %v2728
      %v2734 = vadd.f32 %v2720, %v2730
      %v2735 = vtanh.pop %v2733
      %v2736 = vtanh.pop %v2734
      %v2737 = vmul.f32 %v2445, %v1658
      %v2738 = vmul.f32 %v2449, %v1659
      %v2739 = vsub.f32 1.0, %v2445
      %v2740 = vsub.f32 1.0, %v2449
      %2743 = vrot.lane.b32.xlu0 %v2735, 96
      %v2744 = vpop.permute.xlu0 %2743
      %2745 = vrot.lane.b32.xlu0 %v2736, 96
      %v2746 = vpop.permute.xlu0 %2745
      %v2749 = vmul.f32 %v2739, %v2744
      %v2750 = vmul.f32 %v2740, %v2746
      %v2751 = vadd.f32 %v2737, %v2749
      %v2752 = vadd.f32 %v2738, %v2750
      %2753 = vst.msk [vmem:[#allocation6] sm:$0xff] %vm760, %v2751
      %2754 = vst.msk [vmem:[#allocation6 + $0x8] sm:$0xff] %vm760, %v2752
      %p2755 = scmp.eq.s32.totalorder %s27, 7
      // Predicated region
      $region69: #{agcrn_forward.1} parent=63 // pred_check
        %p2756 = pneg %p2755
      $region70: #{agcrn_forward.1} parent=63 // pred_check_branch
        %2758 = sbr.rel (%p2756) target = $region72
      $region71: #{agcrn_forward.1} parent=63 // pred_region
        %v2759 = vld [vmem:[%s9] sm:$0x7]
        %v2760 = vld [vmem:[%s10] sm:$0x7]
        %2762 = vset.pattern.permute.xlu0 0
        %2763 = vperm.xlu0 %2762, %v2760
        %v2764 = vpop.permute.xlu0 %2763
        %v2767 = vsel %vm760, %v2759, 0
        %v2770 = vsel %vm760, %v2751, 0
        %v2773 = vsel %vm760, %v2752, 0
        %2775 = vmatprep.subr.mxu0 0.0
        %2776 = vmatpush1.xpose.msra.mxu0 %v2770
        %2777 = vmatprep.subr.mxu0 0.0
        %2778 = vmatpush1.xpose.msra.mxu0 %v2773
        %2779 = vmatprep.subr.mxu0 0.0
        %2780 = vmatpush1.xpose.msra.mxu0 0.0
        %2781 = vmatprep.subr.mxu0 0.0
        %2782 = vmatpush1.xpose.msra.mxu0 0.0
        %2783 = vmatprep.subr.mxu0 0.0
        %2784 = vmatpush1.xpose.msra.mxu0 0.0
        %2785 = vmatprep.subr.mxu0 0.0
        %2786 = vmatpush1.xpose.msra.mxu0 0.0
        %2787 = vmatprep.subr.mxu0 0.0
        %2788 = vmatpush1.xpose.msra.mxu0 0.0
        %2789 = vmatprep.subr.mxu0 0.0
        %2790 = vmatpush1.xpose.msra.mxu0 0.0
        %2791 = vmatprep.subr.mxu0 0.0
        %2792 = vmatpush1.xpose.msra.mxu0 0.0
        %2793 = vmatprep.subr.mxu0 0.0
        %2794 = vmatpush1.xpose.msra.mxu0 0.0
        %2795 = vmatprep.subr.mxu0 0.0
        %2796 = vmatpush1.xpose.msra.mxu0 0.0
        %2797 = vmatprep.subr.mxu0 0.0
        %2798 = vmatpush1.xpose.msra.mxu0 0.0
        %2799 = vmatprep.subr.mxu0 0.0
        %2800 = vmatpush1.xpose.msra.mxu0 0.0
        %2801 = vmatprep.subr.mxu0 0.0
        %2802 = vmatpush1.xpose.msra.mxu0 0.0
        %2803 = vmatprep.subr.mxu0 0.0
        %2804 = vmatpush1.xpose.msra.mxu0 0.0
        %2805 = vmatprep.subr.mxu0 0.0
        %2806 = vmatpush1.xpose.msra.mxu0 0.0
        %2807 = vmatprep.subr.mxu0 0.0
        %2808 = vmatpush1.xpose.msra.mxu0 0.0
        %2809 = vmatprep.subr.mxu0 0.0
        %2810 = vmatpush1.xpose.msra.mxu0 0.0
        %2811 = vmatprep.subr.mxu0 0.0
        %2812 = vmatpush1.xpose.msra.mxu0 0.0
        %2813 = vmatprep.subr.mxu0 0.0
        %2814 = vmatpush1.xpose.msra.mxu0 0.0
        %2815 = vmatprep.subr.mxu0 0.0
        %2816 = vmatpush1.xpose.msra.mxu0 0.0
        %2817 = vmatprep.subr.mxu0 0.0
        %2818 = vmatpush1.xpose.msra.mxu0 0.0
        %2819 = vmatprep.subr.mxu0 0.0
        %2820 = vmatpush1.xpose.msra.mxu0 0.0
        %2821 = vmatprep.subr.mxu0 0.0
        %2822 = vmatpush1.xpose.msra.mxu0 0.0
        %2823 = vmatprep.subr.mxu0 0.0
        %2824 = vmatpush1.xpose.msra.mxu0 0.0
        %2825 = vmatprep.subr.mxu0 0.0
        %2826 = vmatpush1.xpose.msra.mxu0 0.0
        %2827 = vmatprep.subr.mxu0 0.0
        %2828 = vmatpush1.xpose.msra.mxu0 0.0
        %2829 = vmatprep.subr.mxu0 0.0
        %2830 = vmatpush1.xpose.msra.mxu0 0.0
        %2831 = vmatprep.subr.mxu0 0.0
        %2832 = vmatpush1.xpose.msra.mxu0 0.0
        %2833 = vmatprep.subr.mxu0 0.0
        %2834 = vmatpush1.xpose.msra.mxu0 0.0
        %2835 = vmatprep.subr.mxu0 0.0
        %2836 = vmatpush1.xpose.msra.mxu0 0.0
        %2837 = vmatprep.subr.mxu0 0.0
        %2838 = vmatpush1.xpose.msra.mxu0 0.0
        %2839 = vmatprep.mubr.f32.mxu0 0.0
        %2840 = vmatmul.mubr.f32.gmra.mrb[0].mxu0 %v2767
        %v2841 = vpop.f32.mrb[0].mxu0
        %v2842 = vadd.f32 %v2764, %v2841
        %v2843 = vpop.f32.mrb[0].mxu0
        %2844 = vdwg.mxu0
        %vm2845 = vcmask 124928
        %2846 = vst.msk [vmem:[%s396] sm:$0x7] %vm2845, %v2842
      $region72: #{agcrn_forward.1} parent=63 // pred_fallthru
        _
      %p2847 = scmp.lt.s32.totalorder %s26, 1
      %s2848 = scalar_select %p2847, %s26, 1
      %s2849 = smul.addr %s2848, 4
      %s2850 = scalar_lea.vmem %s11, %s2849
      // Predicated region
      $region73: #{agcrn_forward.1} parent=63 // pred_check
        %p2851 = pneg %p288
      $region74: #{agcrn_forward.1} parent=63 // pred_check_branch
        %2853 = sbr.rel (%p2851) target = $region76
      $region75: #{agcrn_forward.1} parent=63 // pred_region
        _
      $region76: #{agcrn_forward.1} parent=63 // pred_fallthru
        _
    $region64: #{agcrn_forward.1} parent=5 // pred_fallthru
      _
    %p2854 = scmp.le.s32.totalorder 2, %s17
    // Predicated region
    $region77: #{agcrn_forward.1} parent=5 // pred_check
      %p2855 = pneg %p2854
    $region78: #{agcrn_forward.1} parent=5 // pred_check_branch
      %2857 = sbr.rel (%p2855) target = $region80
    $region79: #{agcrn_forward.1} parent=5 // pred_region
      %s2858 = ssub.s32 %s17, 2
      // Predicated region
      $region81: #{agcrn_forward.1} parent=79 // pred_check
        %p2859 = pneg %p294
      $region82: #{agcrn_forward.1} parent=79 // pred_check_branch
        %2861 = sbr.rel (%p2859) target = $region84
      $region83: #{agcrn_forward.1} parent=79 // pred_region
        %p2862 = scmp.lt.s32.totalorder %s28, 1
        %s2863 = scalar_select %p2862, %s28, 1
        %s2864 = smul.addr %s2863, 4
        %s2865 = scalar_lea.vmem %s11, %s2864
      $region84: #{agcrn_forward.1} parent=79 // pred_fallthru
        _
    $region80: #{agcrn_forward.1} parent=5 // pred_fallthru
      _
  $region6: #{agcrn_forward.1} parent=0 // loop_footer
    %s21 = sadd.s32 1, %s17
  $region7: #{agcrn_forward.1} parent=0 // loop_footer_branch
    %16 = sbr.rel target = $region3
  $region8: #{agcrn_forward.1} parent=0 // loop_exit
    _

</llo_original>
